<compile_context>
chip_gen: v7x
topology: tpu7x:2x2x1
jax: 0.10.0
libtpu: 0.0.40
codegen_flags: <defaults>
</compile_context>

<pallas_src>
import functools

import numpy as np
import jax
import jax.numpy as jnp
from jax.experimental import pallas as pl
from jax.experimental.pallas import tpu as pltpu


# ----------------------------------------------------------------------------
# helpers
# ----------------------------------------------------------------------------
def _round_up(v, m):
    return ((v + m - 1) // m) * m


def _mosaic_params(dim_sem, raw_block_bytes):
    """Mosaic compiler params with a generation-aware VMEM budget."""
    cap = 64 * 2 ** 20                    # conservative default (v7x: 64 MiB/TC)
    try:
        cap = int(getattr(pltpu.get_tpu_info(), "vmem_capacity_bytes", cap))
    except Exception:
        pass
    want = max(16 * 2 ** 20, 2 * int(raw_block_bytes) + (4 << 20))
    limit = int(min(want, (3 * cap) // 4))
    return pltpu.CompilerParams(dimension_semantics=tuple(dim_sem),
                                vmem_limit_bytes=limit)


def _pick_lane_tile(tn):
    if tn <= 32768:
        return tn                          # whole row: amortize per-step overhead
    for cand in (32768, 16384, 8192, 4096, 2048, 1024, 512, 256, 128):
        if tn % cand == 0:
            return cand
    return tn


def _pick_batch_block(b, per_row_bytes, budget=4 << 20):
    for cand in (8, 4, 2, 1):
        if b % cand == 0 and cand * per_row_bytes <= budget:
            return cand
    return 1


# ----------------------------------------------------------------------------
# Pallas kernel 1: fused Inception(avg) -> GELU -> Inception(avg)
#
# Layout trick: the (H, W, C) image is zero padded to (H + 2p + 2, Wp, C) with
# Wp >= W + 2p a multiple of 8 and flattened to (Mpad, C).  For tap (dy, dx)
# the contribution to all output positions is the contiguous row slice
# [dy*Wp + dx, ... + Mout), so the whole conv becomes one implicit-GEMM:
# taps are packed (in VMEM) along the contraction dim into (Mout, K*K*C) and
# multiplied against weights reshaped to (K*K*C, Cout) in a single deep MXU
# matmul.  Columns j in [W, Wp) of the flattened output are junk and masked
# to zero before the intermediate is re-padded (in VMEM) for the second conv.
# ----------------------------------------------------------------------------
def _fused_inception_kernel(x_ref, w1_ref, b1_ref, w2_ref, b2_ref, mask_ref,
                            o_ref, pk1_ref, h1p_ref, pk2_ref,
                            *, K, Wp, Mout, Mpad, q, delta):
    cin = x_ref.shape[-1]
    cmid = h1p_ref.shape[-1]

    # ---- conv1: in-VMEM im2col (tap packing) -> ONE deep MXU matmul --------
    # bf16 slices are copied straight into the packed tile (no per-tap casts);
    # dy*Wp is sublane aligned because Wp % 8 == 0.
    for t in range(K * K):
        dy, dx = divmod(t, K)
        off = dy * Wp + dx
        pk1_ref[:, t * cin:(t + 1) * cin] = x_ref[off:off + Mout, :]
    h1 = jnp.dot(pk1_ref[...], w1_ref[...],
                 preferred_element_type=jnp.float32) + b1_ref[...]

    # GELU in f32 (tanh approximation).
    # TODO(synk): PyTorch nn.GELU() default is the exact erf form; the tanh
    # approximation is kept for a robust Mosaic lowering.
    h1 = 0.5 * h1 * (1.0 + jnp.tanh(0.7978845608028654 *
                                    (h1 + 0.044715 * h1 * h1 * h1)))

    # Mask the junk columns (row stride Wp > W), cast once to bf16 and write
    # the valid image into the re-padded frame at the 8-aligned offset q.
    # Only the small halo regions are zeroed (the interior is fully
    # overwritten every step).  This is done per step, not once under
    # pl.when(program_id==0), because the "parallel" batch axis may be split
    # across TensorCores that each own a private scratch.
    h1p_ref[q:q + Mout, :] = (h1 * mask_ref[...]).astype(h1p_ref.dtype)
    if q > 0:
        h1p_ref[0:q, :] = jnp.zeros((q, cmid), h1p_ref.dtype)
    tail = Mpad - q - Mout
    if tail > 0:
        h1p_ref[q + Mout:Mpad, :] = jnp.zeros((tail, cmid), h1p_ref.dtype)

    # ---- conv2: same tap packing on the bf16 intermediate ------------------
    for t in range(K * K):
        dy, dx = divmod(t, K)
        off = delta + dy * Wp + dx
        pk2_ref[:, t * cmid:(t + 1) * cmid] = h1p_ref[off:off + Mout, :]
    acc2 = jnp.dot(pk2_ref[...], w2_ref[...],
                   preferred_element_type=jnp.float32) + b2_ref[...]
    o_ref[...] = acc2.astype(o_ref.dtype)


def fused_inception_gelu_inception(img_bhwc, w1, b1, w2, b2, K):
    """Fused Inception_Block_V1 -> GELU -> Inception_Block_V1 on an NHWC image.

    w1: (K*K*Cin, Cmid) bf16, w2: (K*K*Cmid, Cout) bf16, biases f32.
    Returns (B, H, W, Cout) in bf16.
    """
    B, H, W, Cin = img_bhwc.shape
    Cmid = w1.shape[-1]
    Cout = w2.shape[-1]
    p = (K - 1) // 2

    # Row stride: multiple of 8 so the dy*Wp part of every tap offset is
    # sublane aligned; the extra columns are junk and masked after conv1.
    Wp = _round_up(max(W + 2 * p, 8), 8)
    Mout = H * Wp
    Mpad = (H + 2 * p + 2) * Wp              # covers all tap slices (+ slack)
    pad_off = p * Wp + p
    q = _round_up(pad_off, 8)                # 8-aligned interior-store offset
    delta = q - pad_off

    # bf16 once in the wrapper: halves the dominant HBM->VMEM DMA and the
    # double-buffered (Mpad, Cin) VMEM block.
    xp = jnp.pad(img_bhwc.astype(jnp.bfloat16),
                 ((0, 0), (p, Mpad // Wp - H - p), (p, Wp - W - p), (0, 0)))
    xflat = xp.reshape(B, Mpad, Cin)

    col = jnp.arange(Mout, dtype=jnp.int32) % Wp
    mask = (col < W).astype(jnp.float32).reshape(Mout, 1)

    raw_bytes = (2 * (Mpad * Cin + Mout * Cout) * 2 + Mout * 4
                 + (K * K * (Cin * Cmid + Cmid * Cout)) * 2
                 + (Mout * K * K * (Cin + Cmid) + Mpad * Cmid) * 2)

    kernel = functools.partial(_fused_inception_kernel, K=K, Wp=Wp, Mout=Mout,
                               Mpad=Mpad, q=q, delta=delta)
    # TODO(synk): for very small B on v7x, process >1 image per grid step to
    # deepen the per-TensorCore pipeline (grid=(B//Bblk,) + in-kernel loop).
    out = pl.pallas_call(
        kernel,
        out_shape=jax.ShapeDtypeStruct((B, Mout, Cout), jnp.bfloat16),
        grid=(B,),
        in_specs=[
            pl.BlockSpec((None, Mpad, Cin), lambda b: (b, 0, 0)),
            pl.BlockSpec((K * K * Cin, Cmid), lambda b: (0, 0)),
            pl.BlockSpec((1, Cmid), lambda b: (0, 0)),
            pl.BlockSpec((K * K * Cmid, Cout), lambda b: (0, 0)),
            pl.BlockSpec((1, Cout), lambda b: (0, 0)),
            pl.BlockSpec((Mout, 1), lambda b: (0, 0)),
        ],
        out_specs=pl.BlockSpec((None, Mout, Cout), lambda b: (b, 0, 0)),
        scratch_shapes=[
            pltpu.VMEM((Mout, K * K * Cin), jnp.bfloat16),   # packed conv1 taps
            pltpu.VMEM((Mpad, Cmid), jnp.bfloat16),          # re-padded GELU output
            pltpu.VMEM((Mout, K * K * Cmid), jnp.bfloat16),  # packed conv2 taps
        ],
        compiler_params=_mosaic_params(("parallel",), raw_bytes),
    )(xflat, w1, b1, w2, b2, mask)

    # TODO(synk): this de-pad is a wrapper-side bf16 slice-copy; a fully
    # lane-dense / compact in-kernel output needs a channel-major layout end
    # to end (two extra HBM transposes of the activations), intentionally not
    # done here.
    return out.reshape(B, H, Wp, Cout)[:, :, :W, :]


# ----------------------------------------------------------------------------
# Pallas kernel 2: softmax-weighted period mix + residual (lane-dense on T*N)
# k period results arrive as k separate bf16 inputs (no stack); the softmaxed
# (B, k) weights are read as scalars from SMEM via scalar prefetch.
# ----------------------------------------------------------------------------
def _mix_kernel(pw_ref, *refs, k, bblk):
    res_refs = refs[:k]
    x_ref = refs[k]
    o_ref = refs[k + 1]
    b0 = pl.program_id(0) * bblk
    for r in range(bblk):                      # small unrolled batch-row loop
        acc = x_ref[r:r + 1, :].astype(jnp.float32)
        for j in range(k):                     # tiny unrolled VPU FMA loop
            w = pw_ref[b0 + r, j]              # f32 scalar from SMEM
            acc = acc + w * res_refs[j][r:r + 1, :].astype(jnp.float32)
        o_ref[r:r + 1, :] = acc.astype(o_ref.dtype)


def pallas_mix(res_list, period_weight, x):
    """out = sum_j softmax(period_weight)[:, j] * res_j + x."""
    B, T, N = x.shape
    k = len(res_list)
    TN = T * N
    tile = _pick_lane_tile(TN)

    x2 = x.reshape(B, TN)
    res2 = [r.reshape(B, TN) for r in res_list]                       # bf16
    pw = jax.nn.softmax(period_weight.astype(jnp.float32), axis=-1)   # (B, k)

    per_row = tile * (sum(r.dtype.itemsize for r in res2)
                      + 2 * x2.dtype.itemsize)
    bblk = _pick_batch_block(B, per_row)
    raw_bytes = 2 * bblk * per_row

    kernel = functools.partial(_mix_kernel, k=k, bblk=bblk)
    idx = lambda b, t, pw_ref: (b, t)
    out = pl.pallas_call(
        kernel,
        out_shape=jax.ShapeDtypeStruct((B, TN), x.dtype),
        grid_spec=pltpu.PrefetchScalarGridSpec(
            num_scalar_prefetch=1,
            grid=(B // bblk, TN // tile),
            in_specs=[pl.BlockSpec((bblk, tile), idx) for _ in range(k + 1)],
            out_specs=pl.BlockSpec((bblk, tile), idx),
        ),
        compiler_params=_mosaic_params(("parallel", "parallel"), raw_bytes),
    )(pw, *res2, x2)
    return out.reshape(B, T, N)


# ----------------------------------------------------------------------------
# Parameter init (mirrors PyTorch kaiming_normal_ fan_out/relu, bias = 0)
# ----------------------------------------------------------------------------
def init_inception_params(key, in_c, out_c, num_kernels):
    kmax = 2 * (num_kernels - 1) + 1
    w_sum = jnp.zeros((kmax, kmax, in_c, out_c), jnp.float32)
    for i in range(num_kernels):
        ksz = 2 * i + 1
        key, sub = jax.random.split(key)
        fan_out = out_c * ksz * ksz
        std = (2.0 / fan_out) ** 0.5
        w = jax.random.normal(sub, (out_c, in_c, ksz, ksz), jnp.float32) * std  # OIHW
        w = jnp.transpose(w, (2, 3, 1, 0))                                      # (k,k,I,O)
        off = (kmax - ksz) // 2
        w_sum = w_sum.at[off:off + ksz, off:off + ksz, :, :].add(w)
    # conv is linear => averaging center-padded weights == averaging conv outputs
    return key, w_sum / float(num_kernels), jnp.zeros((out_c,), jnp.float32)


def init_timesblock_params(key, d_model, d_ff, num_kernels):
    K = 2 * (num_kernels - 1) + 1
    key, w1, b1 = init_inception_params(key, d_model, d_ff, num_kernels)
    key, w2, b2 = init_inception_params(key, d_ff, d_model, num_kernels)
    params = {
        "K": K,
        # packed (K*K*Cin, Cout) bf16 for the deep MXU matmul; biases stay f32.
        "w1": w1.reshape(K * K * d_model, d_ff).astype(jnp.bfloat16),
        "b1": b1.reshape(1, d_ff).astype(jnp.float32),
        "w2": w2.reshape(K * K * d_ff, d_model).astype(jnp.bfloat16),
        "b2": b2.reshape(1, d_model).astype(jnp.float32),
    }
    return key, params


# ----------------------------------------------------------------------------
# FFT_for_Period + TimesBlock forward
# ----------------------------------------------------------------------------
def fft_for_period(x, k):
    T = x.shape[1]
    xf = jnp.fft.rfft(x, axis=1)
    amp = jnp.abs(xf)                               # (B, F, N)
    freq = amp.mean(axis=0).mean(axis=-1)           # (F,)
    freq = freq.at[0].set(0.0)
    # TODO(synk): host sync (mirrors the reference's .detach().cpu().numpy());
    # the data-dependent periods drive static shapes, so this cannot live
    # under jit.
    top = np.argsort(-np.asarray(freq), kind="stable")[:k].astype(np.int64)
    period = (T // np.maximum(top, 1)).astype(np.int64)   # guard bin 0 (T // 0)
    period_weight = amp.mean(axis=-1)[:, top]       # (B, k)
    return period, period_weight


def times_block_forward(x, params, seq_len, pred_len, top_k):
    B, T, N = x.shape
    assert T == seq_len + pred_len
    K = params["K"]
    period_list, period_weight = fft_for_period(x, top_k)

    res_list = []
    # TODO(synk): each distinct period compiles its own conv kernel (static
    # shapes); bucket/pad (H, W) to a small fixed set to cut recompiles on
    # real data.
    for i in range(top_k):
        p = int(period_list[i])
        if T % p != 0:
            length = (T // p + 1) * p
            out = jnp.concatenate(
                [x, jnp.zeros((B, length - T, N), x.dtype)], axis=1)
        else:
            length = T
            out = x
        img = out.reshape(B, length // p, p, N)      # NHWC image
        y = fused_inception_gelu_inception(
            img, params["w1"], params["b1"], params["w2"], params["b2"], K)
        res_list.append(y.reshape(B, length, N)[:, :T, :])   # bf16, no stack

    return pallas_mix(res_list, period_weight, x)


# ----------------------------------------------------------------------------
if __name__ == "__main__":
    seq_len, pred_len = 12, 4
    d_model, d_ff = 8, 16
    num_kernels, top_k = 3, 2
    B = 2
    T = seq_len + pred_len

    key = jax.random.PRNGKey(0)
    key, kx = jax.random.split(key)
    x = jax.random.normal(kx, (B, T, d_model), jnp.float32)

    key, params = init_timesblock_params(key, d_model, d_ff, num_kernels)

    out = times_block_forward(x, params, seq_len, pred_len, top_k)
    out = jax.block_until_ready(out)
    assert out.shape == (B, T, d_model)
    assert bool(jnp.all(jnp.isfinite(out)))
    print("KERNEL_OK")
</pallas_src>

<mosaic_0001>
module attributes {stable_mosaic.version = 11 : i64} {
  func.func @_fused_inception_kernel(%arg0: i32, %arg1: memref<1x112x8xbf16, #tpu.memory_space<vmem>>, %arg2: memref<200x16xbf16, #tpu.memory_space<vmem>>, %arg3: memref<1x16xf32, #tpu.memory_space<vmem>>, %arg4: memref<400x8xbf16, #tpu.memory_space<vmem>>, %arg5: memref<1x8xf32, #tpu.memory_space<vmem>>, %arg6: memref<64x1xf32, #tpu.memory_space<vmem>>, %arg7: memref<1x64x8xbf16, #tpu.memory_space<vmem>>, %arg8: memref<64x200xbf16, #tpu.memory_space<vmem>>, %arg9: memref<112x16xbf16, #tpu.memory_space<vmem>>, %arg10: memref<64x400xbf16, #tpu.memory_space<vmem>>) attributes {dimension_semantics = [#tpu.dimension_semantics<parallel>], iteration_bounds = array<i64: 2>, scalar_prefetch = 0 : i64, scratch_operands = 3 : i64, tpu.core_type = #tpu.core_type<tc>, window_params = [{transform_indices = @transform_0, window_bounds = array<i64: 1, 112, 8>}, {pipeline_mode = #tpu.pipeline_mode<synchronous>, transform_indices = @transform_1, window_bounds = array<i64: 200, 16>}, {pipeline_mode = #tpu.pipeline_mode<synchronous>, transform_indices = @transform_2, window_bounds = array<i64: 1, 16>}, {pipeline_mode = #tpu.pipeline_mode<synchronous>, transform_indices = @transform_3, window_bounds = array<i64: 400, 8>}, {pipeline_mode = #tpu.pipeline_mode<synchronous>, transform_indices = @transform_4, window_bounds = array<i64: 1, 8>}, {pipeline_mode = #tpu.pipeline_mode<synchronous>, transform_indices = @transform_5, window_bounds = array<i64: 64, 1>}, {transform_indices = @transform_6, window_bounds = array<i64: 1, 64, 8>}]} {
    %c0 = arith.constant 0 : index
    %c0_0 = arith.constant 0 : index
    %c0_1 = arith.constant 0 : index
    %0 = vector.load %arg1[%c0, %c0_0, %c0_1] : memref<1x112x8xbf16, #tpu.memory_space<vmem>>, vector<1x64x8xbf16>
    %1 = vector.shape_cast %0 : vector<1x64x8xbf16> to vector<64x8xbf16>
    %c0_2 = arith.constant 0 : index
    %c0_3 = arith.constant 0 : index
    %2 = vector.load %arg8[%c0_2, %c0_3] : memref<64x200xbf16, #tpu.memory_space<vmem>>, vector<64x8xbf16>
    tpu.vector_store %arg8[%c0_2, %c0_3], %1 {strides = array<i32>} : memref<64x200xbf16, #tpu.memory_space<vmem>>, vector<64x8xbf16>,
    %c0_4 = arith.constant 0 : index
    %c1 = arith.constant 1 : index
    %c0_5 = arith.constant 0 : index
    %3 = vector.load %arg1[%c0_4, %c1, %c0_5] : memref<1x112x8xbf16, #tpu.memory_space<vmem>>, vector<1x64x8xbf16>
    %4 = vector.shape_cast %3 : vector<1x64x8xbf16> to vector<64x8xbf16>
    %c0_6 = arith.constant 0 : index
    %c8 = arith.constant 8 : index
    %5 = vector.load %arg8[%c0_6, %c8] : memref<64x200xbf16, #tpu.memory_space<vmem>>, vector<64x8xbf16>
    tpu.vector_store %arg8[%c0_6, %c8], %4 {strides = array<i32>} : memref<64x200xbf16, #tpu.memory_space<vmem>>, vector<64x8xbf16>,
    %c0_7 = arith.constant 0 : index
    %c2 = arith.constant 2 : index
    %c0_8 = arith.constant 0 : index
    %6 = vector.load %arg1[%c0_7, %c2, %c0_8] : memref<1x112x8xbf16, #tpu.memory_space<vmem>>, vector<1x64x8xbf16>
    %7 = vector.shape_cast %6 : vector<1x64x8xbf16> to vector<64x8xbf16>
    %c0_9 = arith.constant 0 : index
    %c16 = arith.constant 16 : index
    %8 = vector.load %arg8[%c0_9, %c16] : memref<64x200xbf16, #tpu.memory_space<vmem>>, vector<64x8xbf16>
    tpu.vector_store %arg8[%c0_9, %c16], %7 {strides = array<i32>} : memref<64x200xbf16, #tpu.memory_space<vmem>>, vector<64x8xbf16>,
    %c0_10 = arith.constant 0 : index
    %c3 = arith.constant 3 : index
    %c0_11 = arith.constant 0 : index
    %9 = vector.load %arg1[%c0_10, %c3, %c0_11] : memref<1x112x8xbf16, #tpu.memory_space<vmem>>, vector<1x64x8xbf16>
    %10 = vector.shape_cast %9 : vector<1x64x8xbf16> to vector<64x8xbf16>
    %c0_12 = arith.constant 0 : index
    %c24 = arith.constant 24 : index
    %11 = vector.load %arg8[%c0_12, %c24] : memref<64x200xbf16, #tpu.memory_space<vmem>>, vector<64x8xbf16>
    tpu.vector_store %arg8[%c0_12, %c24], %10 {strides = array<i32>} : memref<64x200xbf16, #tpu.memory_space<vmem>>, vector<64x8xbf16>,
    %c0_13 = arith.constant 0 : index
    %c4 = arith.constant 4 : index
    %c0_14 = arith.constant 0 : index
    %12 = vector.load %arg1[%c0_13, %c4, %c0_14] : memref<1x112x8xbf16, #tpu.memory_space<vmem>>, vector<1x64x8xbf16>
    %13 = vector.shape_cast %12 : vector<1x64x8xbf16> to vector<64x8xbf16>
    %c0_15 = arith.constant 0 : index
    %c32 = arith.constant 32 : index
    %14 = vector.load %arg8[%c0_15, %c32] : memref<64x200xbf16, #tpu.memory_space<vmem>>, vector<64x8xbf16>
    tpu.vector_store %arg8[%c0_15, %c32], %13 {strides = array<i32>} : memref<64x200xbf16, #tpu.memory_space<vmem>>, vector<64x8xbf16>,
    %c0_16 = arith.constant 0 : index
    %c8_17 = arith.constant 8 : index
    %c0_18 = arith.constant 0 : index
    %15 = vector.load %arg1[%c0_16, %c8_17, %c0_18] : memref<1x112x8xbf16, #tpu.memory_space<vmem>>, vector<1x64x8xbf16>
    %16 = vector.shape_cast %15 : vector<1x64x8xbf16> to vector<64x8xbf16>
    %c0_19 = arith.constant 0 : index
    %c40 = arith.constant 40 : index
    %17 = vector.load %arg8[%c0_19, %c40] : memref<64x200xbf16, #tpu.memory_space<vmem>>, vector<64x8xbf16>
    tpu.vector_store %arg8[%c0_19, %c40], %16 {strides = array<i32>} : memref<64x200xbf16, #tpu.memory_space<vmem>>, vector<64x8xbf16>,
    %c0_20 = arith.constant 0 : index
    %c9 = arith.constant 9 : index
    %c0_21 = arith.constant 0 : index
    %18 = vector.load %arg1[%c0_20, %c9, %c0_21] : memref<1x112x8xbf16, #tpu.memory_space<vmem>>, vector<1x64x8xbf16>
    %19 = vector.shape_cast %18 : vector<1x64x8xbf16> to vector<64x8xbf16>
    %c0_22 = arith.constant 0 : index
    %c48 = arith.constant 48 : index
    %20 = vector.load %arg8[%c0_22, %c48] : memref<64x200xbf16, #tpu.memory_space<vmem>>, vector<64x8xbf16>
    tpu.vector_store %arg8[%c0_22, %c48], %19 {strides = array<i32>} : memref<64x200xbf16, #tpu.memory_space<vmem>>, vector<64x8xbf16>,
    %c0_23 = arith.constant 0 : index
    %c10 = arith.constant 10 : index
    %c0_24 = arith.constant 0 : index
    %21 = vector.load %arg1[%c0_23, %c10, %c0_24] : memref<1x112x8xbf16, #tpu.memory_space<vmem>>, vector<1x64x8xbf16>
    %22 = vector.shape_cast %21 : vector<1x64x8xbf16> to vector<64x8xbf16>
    %c0_25 = arith.constant 0 : index
    %c56 = arith.constant 56 : index
    %23 = vector.load %arg8[%c0_25, %c56] : memref<64x200xbf16, #tpu.memory_space<vmem>>, vector<64x8xbf16>
    tpu.vector_store %arg8[%c0_25, %c56], %22 {strides = array<i32>} : memref<64x200xbf16, #tpu.memory_space<vmem>>, vector<64x8xbf16>,
    %c0_26 = arith.constant 0 : index
    %c11 = arith.constant 11 : index
    %c0_27 = arith.constant 0 : index
    %24 = vector.load %arg1[%c0_26, %c11, %c0_27] : memref<1x112x8xbf16, #tpu.memory_space<vmem>>, vector<1x64x8xbf16>
    %25 = vector.shape_cast %24 : vector<1x64x8xbf16> to vector<64x8xbf16>
    %c0_28 = arith.constant 0 : index
    %c64 = arith.constant 64 : index
    %26 = vector.load %arg8[%c0_28, %c64] : memref<64x200xbf16, #tpu.memory_space<vmem>>, vector<64x8xbf16>
    tpu.vector_store %arg8[%c0_28, %c64], %25 {strides = array<i32>} : memref<64x200xbf16, #tpu.memory_space<vmem>>, vector<64x8xbf16>,
    %c0_29 = arith.constant 0 : index
    %c12 = arith.constant 12 : index
    %c0_30 = arith.constant 0 : index
    %27 = vector.load %arg1[%c0_29, %c12, %c0_30] : memref<1x112x8xbf16, #tpu.memory_space<vmem>>, vector<1x64x8xbf16>
    %28 = vector.shape_cast %27 : vector<1x64x8xbf16> to vector<64x8xbf16>
    %c0_31 = arith.constant 0 : index
    %c72 = arith.constant 72 : index
    %29 = vector.load %arg8[%c0_31, %c72] : memref<64x200xbf16, #tpu.memory_space<vmem>>, vector<64x8xbf16>
    tpu.vector_store %arg8[%c0_31, %c72], %28 {strides = array<i32>} : memref<64x200xbf16, #tpu.memory_space<vmem>>, vector<64x8xbf16>,
    %c0_32 = arith.constant 0 : index
    %c16_33 = arith.constant 16 : index
    %c0_34 = arith.constant 0 : index
    %30 = vector.load %arg1[%c0_32, %c16_33, %c0_34] : memref<1x112x8xbf16, #tpu.memory_space<vmem>>, vector<1x64x8xbf16>
    %31 = vector.shape_cast %30 : vector<1x64x8xbf16> to vector<64x8xbf16>
    %c0_35 = arith.constant 0 : index
    %c80 = arith.constant 80 : index
    %32 = vector.load %arg8[%c0_35, %c80] : memref<64x200xbf16, #tpu.memory_space<vmem>>, vector<64x8xbf16>
    tpu.vector_store %arg8[%c0_35, %c80], %31 {strides = array<i32>} : memref<64x200xbf16, #tpu.memory_space<vmem>>, vector<64x8xbf16>,
    %c0_36 = arith.constant 0 : index
    %c17 = arith.constant 17 : index
    %c0_37 = arith.constant 0 : index
    %33 = vector.load %arg1[%c0_36, %c17, %c0_37] : memref<1x112x8xbf16, #tpu.memory_space<vmem>>, vector<1x64x8xbf16>
    %34 = vector.shape_cast %33 : vector<1x64x8xbf16> to vector<64x8xbf16>
    %c0_38 = arith.constant 0 : index
    %c88 = arith.constant 88 : index
    %35 = vector.load %arg8[%c0_38, %c88] : memref<64x200xbf16, #tpu.memory_space<vmem>>, vector<64x8xbf16>
    tpu.vector_store %arg8[%c0_38, %c88], %34 {strides = array<i32>} : memref<64x200xbf16, #tpu.memory_space<vmem>>, vector<64x8xbf16>,
    %c0_39 = arith.constant 0 : index
    %c18 = arith.constant 18 : index
    %c0_40 = arith.constant 0 : index
    %36 = vector.load %arg1[%c0_39, %c18, %c0_40] : memref<1x112x8xbf16, #tpu.memory_space<vmem>>, vector<1x64x8xbf16>
    %37 = vector.shape_cast %36 : vector<1x64x8xbf16> to vector<64x8xbf16>
    %c0_41 = arith.constant 0 : index
    %c96 = arith.constant 96 : index
    %38 = vector.load %arg8[%c0_41, %c96] : memref<64x200xbf16, #tpu.memory_space<vmem>>, vector<64x8xbf16>
    tpu.vector_store %arg8[%c0_41, %c96], %37 {strides = array<i32>} : memref<64x200xbf16, #tpu.memory_space<vmem>>, vector<64x8xbf16>,
    %c0_42 = arith.constant 0 : index
    %c19 = arith.constant 19 : index
    %c0_43 = arith.constant 0 : index
    %39 = vector.load %arg1[%c0_42, %c19, %c0_43] : memref<1x112x8xbf16, #tpu.memory_space<vmem>>, vector<1x64x8xbf16>
    %40 = vector.shape_cast %39 : vector<1x64x8xbf16> to vector<64x8xbf16>
    %c0_44 = arith.constant 0 : index
    %c104 = arith.constant 104 : index
    %41 = vector.load %arg8[%c0_44, %c104] : memref<64x200xbf16, #tpu.memory_space<vmem>>, vector<64x8xbf16>
    tpu.vector_store %arg8[%c0_44, %c104], %40 {strides = array<i32>} : memref<64x200xbf16, #tpu.memory_space<vmem>>, vector<64x8xbf16>,
    %c0_45 = arith.constant 0 : index
    %c20 = arith.constant 20 : index
    %c0_46 = arith.constant 0 : index
    %42 = vector.load %arg1[%c0_45, %c20, %c0_46] : memref<1x112x8xbf16, #tpu.memory_space<vmem>>, vector<1x64x8xbf16>
    %43 = vector.shape_cast %42 : vector<1x64x8xbf16> to vector<64x8xbf16>
    %c0_47 = arith.constant 0 : index
    %c112 = arith.constant 112 : index
    %44 = vector.load %arg8[%c0_47, %c112] : memref<64x200xbf16, #tpu.memory_space<vmem>>, vector<64x8xbf16>
    tpu.vector_store %arg8[%c0_47, %c112], %43 {strides = array<i32>} : memref<64x200xbf16, #tpu.memory_space<vmem>>, vector<64x8xbf16>,
    %c0_48 = arith.constant 0 : index
    %c24_49 = arith.constant 24 : index
    %c0_50 = arith.constant 0 : index
    %45 = vector.load %arg1[%c0_48, %c24_49, %c0_50] : memref<1x112x8xbf16, #tpu.memory_space<vmem>>, vector<1x64x8xbf16>
    %46 = vector.shape_cast %45 : vector<1x64x8xbf16> to vector<64x8xbf16>
    %c0_51 = arith.constant 0 : index
    %c120 = arith.constant 120 : index
    %47 = vector.load %arg8[%c0_51, %c120] : memref<64x200xbf16, #tpu.memory_space<vmem>>, vector<64x8xbf16>
    tpu.vector_store %arg8[%c0_51, %c120], %46 {strides = array<i32>} : memref<64x200xbf16, #tpu.memory_space<vmem>>, vector<64x8xbf16>,
    %c0_52 = arith.constant 0 : index
    %c25 = arith.constant 25 : index
    %c0_53 = arith.constant 0 : index
    %48 = vector.load %arg1[%c0_52, %c25, %c0_53] : memref<1x112x8xbf16, #tpu.memory_space<vmem>>, vector<1x64x8xbf16>
    %49 = vector.shape_cast %48 : vector<1x64x8xbf16> to vector<64x8xbf16>
    %c0_54 = arith.constant 0 : index
    %c128 = arith.constant 128 : index
    %50 = vector.load %arg8[%c0_54, %c128] : memref<64x200xbf16, #tpu.memory_space<vmem>>, vector<64x8xbf16>
    tpu.vector_store %arg8[%c0_54, %c128], %49 {strides = array<i32>} : memref<64x200xbf16, #tpu.memory_space<vmem>>, vector<64x8xbf16>,
    %c0_55 = arith.constant 0 : index
    %c26 = arith.constant 26 : index
    %c0_56 = arith.constant 0 : index
    %51 = vector.load %arg1[%c0_55, %c26, %c0_56] : memref<1x112x8xbf16, #tpu.memory_space<vmem>>, vector<1x64x8xbf16>
    %52 = vector.shape_cast %51 : vector<1x64x8xbf16> to vector<64x8xbf16>
    %c0_57 = arith.constant 0 : index
    %c136 = arith.constant 136 : index
    %53 = vector.load %arg8[%c0_57, %c136] : memref<64x200xbf16, #tpu.memory_space<vmem>>, vector<64x8xbf16>
    tpu.vector_store %arg8[%c0_57, %c136], %52 {strides = array<i32>} : memref<64x200xbf16, #tpu.memory_space<vmem>>, vector<64x8xbf16>,
    %c0_58 = arith.constant 0 : index
    %c27 = arith.constant 27 : index
    %c0_59 = arith.constant 0 : index
    %54 = vector.load %arg1[%c0_58, %c27, %c0_59] : memref<1x112x8xbf16, #tpu.memory_space<vmem>>, vector<1x64x8xbf16>
    %55 = vector.shape_cast %54 : vector<1x64x8xbf16> to vector<64x8xbf16>
    %c0_60 = arith.constant 0 : index
    %c144 = arith.constant 144 : index
    %56 = vector.load %arg8[%c0_60, %c144] : memref<64x200xbf16, #tpu.memory_space<vmem>>, vector<64x8xbf16>
    tpu.vector_store %arg8[%c0_60, %c144], %55 {strides = array<i32>} : memref<64x200xbf16, #tpu.memory_space<vmem>>, vector<64x8xbf16>,
    %c0_61 = arith.constant 0 : index
    %c28 = arith.constant 28 : index
    %c0_62 = arith.constant 0 : index
    %57 = vector.load %arg1[%c0_61, %c28, %c0_62] : memref<1x112x8xbf16, #tpu.memory_space<vmem>>, vector<1x64x8xbf16>
    %58 = vector.shape_cast %57 : vector<1x64x8xbf16> to vector<64x8xbf16>
    %c0_63 = arith.constant 0 : index
    %c152 = arith.constant 152 : index
    %59 = vector.load %arg8[%c0_63, %c152] : memref<64x200xbf16, #tpu.memory_space<vmem>>, vector<64x8xbf16>
    tpu.vector_store %arg8[%c0_63, %c152], %58 {strides = array<i32>} : memref<64x200xbf16, #tpu.memory_space<vmem>>, vector<64x8xbf16>,
    %c0_64 = arith.constant 0 : index
    %c32_65 = arith.constant 32 : index
    %c0_66 = arith.constant 0 : index
    %60 = vector.load %arg1[%c0_64, %c32_65, %c0_66] : memref<1x112x8xbf16, #tpu.memory_space<vmem>>, vector<1x64x8xbf16>
    %61 = vector.shape_cast %60 : vector<1x64x8xbf16> to vector<64x8xbf16>
    %c0_67 = arith.constant 0 : index
    %c160 = arith.constant 160 : index
    %62 = vector.load %arg8[%c0_67, %c160] : memref<64x200xbf16, #tpu.memory_space<vmem>>, vector<64x8xbf16>
    tpu.vector_store %arg8[%c0_67, %c160], %61 {strides = array<i32>} : memref<64x200xbf16, #tpu.memory_space<vmem>>, vector<64x8xbf16>,
    %c0_68 = arith.constant 0 : index
    %c33 = arith.constant 33 : index
    %c0_69 = arith.constant 0 : index
    %63 = vector.load %arg1[%c0_68, %c33, %c0_69] : memref<1x112x8xbf16, #tpu.memory_space<vmem>>, vector<1x64x8xbf16>
    %64 = vector.shape_cast %63 : vector<1x64x8xbf16> to vector<64x8xbf16>
    %c0_70 = arith.constant 0 : index
    %c168 = arith.constant 168 : index
    %65 = vector.load %arg8[%c0_70, %c168] : memref<64x200xbf16, #tpu.memory_space<vmem>>, vector<64x8xbf16>
    tpu.vector_store %arg8[%c0_70, %c168], %64 {strides = array<i32>} : memref<64x200xbf16, #tpu.memory_space<vmem>>, vector<64x8xbf16>,
    %c0_71 = arith.constant 0 : index
    %c34 = arith.constant 34 : index
    %c0_72 = arith.constant 0 : index
    %66 = vector.load %arg1[%c0_71, %c34, %c0_72] : memref<1x112x8xbf16, #tpu.memory_space<vmem>>, vector<1x64x8xbf16>
    %67 = vector.shape_cast %66 : vector<1x64x8xbf16> to vector<64x8xbf16>
    %c0_73 = arith.constant 0 : index
    %c176 = arith.constant 176 : index
    %68 = vector.load %arg8[%c0_73, %c176] : memref<64x200xbf16, #tpu.memory_space<vmem>>, vector<64x8xbf16>
    tpu.vector_store %arg8[%c0_73, %c176], %67 {strides = array<i32>} : memref<64x200xbf16, #tpu.memory_space<vmem>>, vector<64x8xbf16>,
    %c0_74 = arith.constant 0 : index
    %c35 = arith.constant 35 : index
    %c0_75 = arith.constant 0 : index
    %69 = vector.load %arg1[%c0_74, %c35, %c0_75] : memref<1x112x8xbf16, #tpu.memory_space<vmem>>, vector<1x64x8xbf16>
    %70 = vector.shape_cast %69 : vector<1x64x8xbf16> to vector<64x8xbf16>
    %c0_76 = arith.constant 0 : index
    %c184 = arith.constant 184 : index
    %71 = vector.load %arg8[%c0_76, %c184] : memref<64x200xbf16, #tpu.memory_space<vmem>>, vector<64x8xbf16>
    tpu.vector_store %arg8[%c0_76, %c184], %70 {strides = array<i32>} : memref<64x200xbf16, #tpu.memory_space<vmem>>, vector<64x8xbf16>,
    %c0_77 = arith.constant 0 : index
    %c36 = arith.constant 36 : index
    %c0_78 = arith.constant 0 : index
    %72 = vector.load %arg1[%c0_77, %c36, %c0_78] : memref<1x112x8xbf16, #tpu.memory_space<vmem>>, vector<1x64x8xbf16>
    %73 = vector.shape_cast %72 : vector<1x64x8xbf16> to vector<64x8xbf16>
    %c0_79 = arith.constant 0 : index
    %c192 = arith.constant 192 : index
    %74 = vector.load %arg8[%c0_79, %c192] : memref<64x200xbf16, #tpu.memory_space<vmem>>, vector<64x8xbf16>
    tpu.vector_store %arg8[%c0_79, %c192], %73 {strides = array<i32>} : memref<64x200xbf16, #tpu.memory_space<vmem>>, vector<64x8xbf16>,
    %c0_80 = arith.constant 0 : index
    %c0_81 = arith.constant 0 : index
    %75 = vector.load %arg8[%c0_80, %c0_81] : memref<64x200xbf16, #tpu.memory_space<vmem>>, vector<64x200xbf16>
    %c0_82 = arith.constant 0 : index
    %c0_83 = arith.constant 0 : index
    %76 = vector.load %arg2[%c0_82, %c0_83] : memref<200x16xbf16, #tpu.memory_space<vmem>>, vector<200x16xbf16>
    %cst = arith.constant dense<0.000000e+00> : vector<64x16xf32>
    %77 = tpu.matmul %75, %76, %cst {dimension_numbers = #tpu.dot_dimension_numbers<[1], [0], [0], [1], [0, 0, 1, 1], [], []>} : vector<64x200xbf16>, vector<200x16xbf16>, vector<64x16xf32> -> vector<64x16xf32>
    %c0_84 = arith.constant 0 : index
    %c0_85 = arith.constant 0 : index
    %78 = vector.load %arg3[%c0_84, %c0_85] : memref<1x16xf32, #tpu.memory_space<vmem>>, vector<1x16xf32>
    %79 = vector.broadcast %78 : vector<1x16xf32> to vector<64x16xf32>
    %80 = arith.addf %77, %79 : vector<64x16xf32>
    %cst_86 = arith.constant 5.000000e-01 : f32
    %81 = vector.broadcast %cst_86 : f32 to vector<64x16xf32>
    %82 = arith.mulf %81, %80 : vector<64x16xf32>
    %cst_87 = arith.constant 4.471500e-02 : f32
    %83 = vector.broadcast %cst_87 : f32 to vector<64x16xf32>
    %84 = arith.mulf %83, %80 : vector<64x16xf32>
    %85 = arith.mulf %84, %80 : vector<64x16xf32>
    %86 = arith.mulf %85, %80 : vector<64x16xf32>
    %87 = arith.addf %80, %86 : vector<64x16xf32>
    %cst_88 = arith.constant 0.797884583 : f32
    %88 = vector.broadcast %cst_88 : f32 to vector<64x16xf32>
    %89 = arith.mulf %88, %87 : vector<64x16xf32>
    %90 = math.tanh %89 : vector<64x16xf32>
    %cst_89 = arith.constant 1.000000e+00 : f32
    %91 = vector.broadcast %cst_89 : f32 to vector<64x16xf32>
    %92 = arith.addf %91, %90 : vector<64x16xf32>
    %93 = arith.mulf %82, %92 : vector<64x16xf32>
    %c0_90 = arith.constant 0 : index
    %c0_91 = arith.constant 0 : index
    %94 = vector.load %arg6[%c0_90, %c0_91] : memref<64x1xf32, #tpu.memory_space<vmem>>, vector<64x1xf32>
    %95 = vector.broadcast %94 : vector<64x1xf32> to vector<64x16xf32>
    %96 = arith.mulf %93, %95 : vector<64x16xf32>
    %97 = arith.truncf %96 : vector<64x16xf32> to vector<64x16xbf16>
    %c24_92 = arith.constant 24 : index
    %c0_93 = arith.constant 0 : index
    %98 = vector.load %arg9[%c24_92, %c0_93] : memref<112x16xbf16, #tpu.memory_space<vmem>>, vector<64x16xbf16>
    tpu.vector_store %arg9[%c24_92, %c0_93], %97 {strides = array<i32>} : memref<112x16xbf16, #tpu.memory_space<vmem>>, vector<64x16xbf16>,
    %cst_94 = arith.constant 0.000000e+00 : bf16
    %99 = vector.broadcast %cst_94 : bf16 to vector<24x16xbf16>
    %c0_95 = arith.constant 0 : index
    %c0_96 = arith.constant 0 : index
    %100 = vector.load %arg9[%c0_95, %c0_96] : memref<112x16xbf16, #tpu.memory_space<vmem>>, vector<24x16xbf16>
    tpu.vector_store %arg9[%c0_95, %c0_96], %99 {strides = array<i32>} : memref<112x16xbf16, #tpu.memory_space<vmem>>, vector<24x16xbf16>,
    %cst_97 = arith.constant 0.000000e+00 : bf16
    %101 = vector.broadcast %cst_97 : bf16 to vector<24x16xbf16>
    %c88_98 = arith.constant 88 : index
    %c0_99 = arith.constant 0 : index
    %102 = vector.load %arg9[%c88_98, %c0_99] : memref<112x16xbf16, #tpu.memory_space<vmem>>, vector<24x16xbf16>
    tpu.vector_store %arg9[%c88_98, %c0_99], %101 {strides = array<i32>} : memref<112x16xbf16, #tpu.memory_space<vmem>>, vector<24x16xbf16>,
    %c6 = arith.constant 6 : index
    %c0_100 = arith.constant 0 : index
    %103 = vector.load %arg9[%c6, %c0_100] : memref<112x16xbf16, #tpu.memory_space<vmem>>, vector<64x16xbf16>
    %c0_101 = arith.constant 0 : index
    %c0_102 = arith.constant 0 : index
    %104 = vector.load %arg10[%c0_101, %c0_102] : memref<64x400xbf16, #tpu.memory_space<vmem>>, vector<64x16xbf16>
    tpu.vector_store %arg10[%c0_101, %c0_102], %103 {strides = array<i32>} : memref<64x400xbf16, #tpu.memory_space<vmem>>, vector<64x16xbf16>,
    %c7 = arith.constant 7 : index
    %c0_103 = arith.constant 0 : index
    %105 = vector.load %arg9[%c7, %c0_103] : memref<112x16xbf16, #tpu.memory_space<vmem>>, vector<64x16xbf16>
    %c0_104 = arith.constant 0 : index
    %c16_105 = arith.constant 16 : index
    %106 = vector.load %arg10[%c0_104, %c16_105] : memref<64x400xbf16, #tpu.memory_space<vmem>>, vector<64x16xbf16>
    tpu.vector_store %arg10[%c0_104, %c16_105], %105 {strides = array<i32>} : memref<64x400xbf16, #tpu.memory_space<vmem>>, vector<64x16xbf16>,
    %c8_106 = arith.constant 8 : index
    %c0_107 = arith.constant 0 : index
    %107 = vector.load %arg9[%c8_106, %c0_107] : memref<112x16xbf16, #tpu.memory_space<vmem>>, vector<64x16xbf16>
    %c0_108 = arith.constant 0 : index
    %c32_109 = arith.constant 32 : index
    %108 = vector.load %arg10[%c0_108, %c32_109] : memref<64x400xbf16, #tpu.memory_space<vmem>>, vector<64x16xbf16>
    tpu.vector_store %arg10[%c0_108, %c32_109], %107 {strides = array<i32>} : memref<64x400xbf16, #tpu.memory_space<vmem>>, vector<64x16xbf16>,
    %c9_110 = arith.constant 9 : index
    %c0_111 = arith.constant 0 : index
    %109 = vector.load %arg9[%c9_110, %c0_111] : memref<112x16xbf16, #tpu.memory_space<vmem>>, vector<64x16xbf16>
    %c0_112 = arith.constant 0 : index
    %c48_113 = arith.constant 48 : index
    %110 = vector.load %arg10[%c0_112, %c48_113] : memref<64x400xbf16, #tpu.memory_space<vmem>>, vector<64x16xbf16>
    tpu.vector_store %arg10[%c0_112, %c48_113], %109 {strides = array<i32>} : memref<64x400xbf16, #tpu.memory_space<vmem>>, vector<64x16xbf16>,
    %c10_114 = arith.constant 10 : index
    %c0_115 = arith.constant 0 : index
    %111 = vector.load %arg9[%c10_114, %c0_115] : memref<112x16xbf16, #tpu.memory_space<vmem>>, vector<64x16xbf16>
    %c0_116 = arith.constant 0 : index
    %c64_117 = arith.constant 64 : index
    %112 = vector.load %arg10[%c0_116, %c64_117] : memref<64x400xbf16, #tpu.memory_space<vmem>>, vector<64x16xbf16>
    tpu.vector_store %arg10[%c0_116, %c64_117], %111 {strides = array<i32>} : memref<64x400xbf16, #tpu.memory_space<vmem>>, vector<64x16xbf16>,
    %c14 = arith.constant 14 : index
    %c0_118 = arith.constant 0 : index
    %113 = vector.load %arg9[%c14, %c0_118] : memref<112x16xbf16, #tpu.memory_space<vmem>>, vector<64x16xbf16>
    %c0_119 = arith.constant 0 : index
    %c80_120 = arith.constant 80 : index
    %114 = vector.load %arg10[%c0_119, %c80_120] : memref<64x400xbf16, #tpu.memory_space<vmem>>, vector<64x16xbf16>
    tpu.vector_store %arg10[%c0_119, %c80_120], %113 {strides = array<i32>} : memref<64x400xbf16, #tpu.memory_space<vmem>>, vector<64x16xbf16>,
    %c15 = arith.constant 15 : index
    %c0_121 = arith.constant 0 : index
    %115 = vector.load %arg9[%c15, %c0_121] : memref<112x16xbf16, #tpu.memory_space<vmem>>, vector<64x16xbf16>
    %c0_122 = arith.constant 0 : index
    %c96_123 = arith.constant 96 : index
    %116 = vector.load %arg10[%c0_122, %c96_123] : memref<64x400xbf16, #tpu.memory_space<vmem>>, vector<64x16xbf16>
    tpu.vector_store %arg10[%c0_122, %c96_123], %115 {strides = array<i32>} : memref<64x400xbf16, #tpu.memory_space<vmem>>, vector<64x16xbf16>,
    %c16_124 = arith.constant 16 : index
    %c0_125 = arith.constant 0 : index
    %117 = vector.load %arg9[%c16_124, %c0_125] : memref<112x16xbf16, #tpu.memory_space<vmem>>, vector<64x16xbf16>
    %c0_126 = arith.constant 0 : index
    %c112_127 = arith.constant 112 : index
    %118 = vector.load %arg10[%c0_126, %c112_127] : memref<64x400xbf16, #tpu.memory_space<vmem>>, vector<64x16xbf16>
    tpu.vector_store %arg10[%c0_126, %c112_127], %117 {strides = array<i32>} : memref<64x400xbf16, #tpu.memory_space<vmem>>, vector<64x16xbf16>,
    %c17_128 = arith.constant 17 : index
    %c0_129 = arith.constant 0 : index
    %119 = vector.load %arg9[%c17_128, %c0_129] : memref<112x16xbf16, #tpu.memory_space<vmem>>, vector<64x16xbf16>
    %c0_130 = arith.constant 0 : index
    %c128_131 = arith.constant 128 : index
    %120 = vector.load %arg10[%c0_130, %c128_131] : memref<64x400xbf16, #tpu.memory_space<vmem>>, vector<64x16xbf16>
    tpu.vector_store %arg10[%c0_130, %c128_131], %119 {strides = array<i32>} : memref<64x400xbf16, #tpu.memory_space<vmem>>, vector<64x16xbf16>,
    %c18_132 = arith.constant 18 : index
    %c0_133 = arith.constant 0 : index
    %121 = vector.load %arg9[%c18_132, %c0_133] : memref<112x16xbf16, #tpu.memory_space<vmem>>, vector<64x16xbf16>
    %c0_134 = arith.constant 0 : index
    %c144_135 = arith.constant 144 : index
    %122 = vector.load %arg10[%c0_134, %c144_135] : memref<64x400xbf16, #tpu.memory_space<vmem>>, vector<64x16xbf16>
    tpu.vector_store %arg10[%c0_134, %c144_135], %121 {strides = array<i32>} : memref<64x400xbf16, #tpu.memory_space<vmem>>, vector<64x16xbf16>,
    %c22 = arith.constant 22 : index
    %c0_136 = arith.constant 0 : index
    %123 = vector.load %arg9[%c22, %c0_136] : memref<112x16xbf16, #tpu.memory_space<vmem>>, vector<64x16xbf16>
    %c0_137 = arith.constant 0 : index
    %c160_138 = arith.constant 160 : index
    %124 = vector.load %arg10[%c0_137, %c160_138] : memref<64x400xbf16, #tpu.memory_space<vmem>>, vector<64x16xbf16>
    tpu.vector_store %arg10[%c0_137, %c160_138], %123 {strides = array<i32>} : memref<64x400xbf16, #tpu.memory_space<vmem>>, vector<64x16xbf16>,
    %c23 = arith.constant 23 : index
    %c0_139 = arith.constant 0 : index
    %125 = vector.load %arg9[%c23, %c0_139] : memref<112x16xbf16, #tpu.memory_space<vmem>>, vector<64x16xbf16>
    %c0_140 = arith.constant 0 : index
    %c176_141 = arith.constant 176 : index
    %126 = vector.load %arg10[%c0_140, %c176_141] : memref<64x400xbf16, #tpu.memory_space<vmem>>, vector<64x16xbf16>
    tpu.vector_store %arg10[%c0_140, %c176_141], %125 {strides = array<i32>} : memref<64x400xbf16, #tpu.memory_space<vmem>>, vector<64x16xbf16>,
    %c24_142 = arith.constant 24 : index
    %c0_143 = arith.constant 0 : index
    %127 = vector.load %arg9[%c24_142, %c0_143] : memref<112x16xbf16, #tpu.memory_space<vmem>>, vector<64x16xbf16>
    %c0_144 = arith.constant 0 : index
    %c192_145 = arith.constant 192 : index
    %128 = vector.load %arg10[%c0_144, %c192_145] : memref<64x400xbf16, #tpu.memory_space<vmem>>, vector<64x16xbf16>
    tpu.vector_store %arg10[%c0_144, %c192_145], %127 {strides = array<i32>} : memref<64x400xbf16, #tpu.memory_space<vmem>>, vector<64x16xbf16>,
    %c25_146 = arith.constant 25 : index
    %c0_147 = arith.constant 0 : index
    %129 = vector.load %arg9[%c25_146, %c0_147] : memref<112x16xbf16, #tpu.memory_space<vmem>>, vector<64x16xbf16>
    %c0_148 = arith.constant 0 : index
    %c208 = arith.constant 208 : index
    %130 = vector.load %arg10[%c0_148, %c208] : memref<64x400xbf16, #tpu.memory_space<vmem>>, vector<64x16xbf16>
    tpu.vector_store %arg10[%c0_148, %c208], %129 {strides = array<i32>} : memref<64x400xbf16, #tpu.memory_space<vmem>>, vector<64x16xbf16>,
    %c26_149 = arith.constant 26 : index
    %c0_150 = arith.constant 0 : index
    %131 = vector.load %arg9[%c26_149, %c0_150] : memref<112x16xbf16, #tpu.memory_space<vmem>>, vector<64x16xbf16>
    %c0_151 = arith.constant 0 : index
    %c224 = arith.constant 224 : index
    %132 = vector.load %arg10[%c0_151, %c224] : memref<64x400xbf16, #tpu.memory_space<vmem>>, vector<64x16xbf16>
    tpu.vector_store %arg10[%c0_151, %c224], %131 {strides = array<i32>} : memref<64x400xbf16, #tpu.memory_space<vmem>>, vector<64x16xbf16>,
    %c30 = arith.constant 30 : index
    %c0_152 = arith.constant 0 : index
    %133 = vector.load %arg9[%c30, %c0_152] : memref<112x16xbf16, #tpu.memory_space<vmem>>, vector<64x16xbf16>
    %c0_153 = arith.constant 0 : index
    %c240 = arith.constant 240 : index
    %134 = vector.load %arg10[%c0_153, %c240] : memref<64x400xbf16, #tpu.memory_space<vmem>>, vector<64x16xbf16>
    tpu.vector_store %arg10[%c0_153, %c240], %133 {strides = array<i32>} : memref<64x400xbf16, #tpu.memory_space<vmem>>, vector<64x16xbf16>,
    %c31 = arith.constant 31 : index
    %c0_154 = arith.constant 0 : index
    %135 = vector.load %arg9[%c31, %c0_154] : memref<112x16xbf16, #tpu.memory_space<vmem>>, vector<64x16xbf16>
    %c0_155 = arith.constant 0 : index
    %c256 = arith.constant 256 : index
    %136 = vector.load %arg10[%c0_155, %c256] : memref<64x400xbf16, #tpu.memory_space<vmem>>, vector<64x16xbf16>
    tpu.vector_store %arg10[%c0_155, %c256], %135 {strides = array<i32>} : memref<64x400xbf16, #tpu.memory_space<vmem>>, vector<64x16xbf16>,
    %c32_156 = arith.constant 32 : index
    %c0_157 = arith.constant 0 : index
    %137 = vector.load %arg9[%c32_156, %c0_157] : memref<112x16xbf16, #tpu.memory_space<vmem>>, vector<64x16xbf16>
    %c0_158 = arith.constant 0 : index
    %c272 = arith.constant 272 : index
    %138 = vector.load %arg10[%c0_158, %c272] : memref<64x400xbf16, #tpu.memory_space<vmem>>, vector<64x16xbf16>
    tpu.vector_store %arg10[%c0_158, %c272], %137 {strides = array<i32>} : memref<64x400xbf16, #tpu.memory_space<vmem>>, vector<64x16xbf16>,
    %c33_159 = arith.constant 33 : index
    %c0_160 = arith.constant 0 : index
    %139 = vector.load %arg9[%c33_159, %c0_160] : memref<112x16xbf16, #tpu.memory_space<vmem>>, vector<64x16xbf16>
    %c0_161 = arith.constant 0 : index
    %c288 = arith.constant 288 : index
    %140 = vector.load %arg10[%c0_161, %c288] : memref<64x400xbf16, #tpu.memory_space<vmem>>, vector<64x16xbf16>
    tpu.vector_store %arg10[%c0_161, %c288], %139 {strides = array<i32>} : memref<64x400xbf16, #tpu.memory_space<vmem>>, vector<64x16xbf16>,
    %c34_162 = arith.constant 34 : index
    %c0_163 = arith.constant 0 : index
    %141 = vector.load %arg9[%c34_162, %c0_163] : memref<112x16xbf16, #tpu.memory_space<vmem>>, vector<64x16xbf16>
    %c0_164 = arith.constant 0 : index
    %c304 = arith.constant 304 : index
    %142 = vector.load %arg10[%c0_164, %c304] : memref<64x400xbf16, #tpu.memory_space<vmem>>, vector<64x16xbf16>
    tpu.vector_store %arg10[%c0_164, %c304], %141 {strides = array<i32>} : memref<64x400xbf16, #tpu.memory_space<vmem>>, vector<64x16xbf16>,
    %c38 = arith.constant 38 : index
    %c0_165 = arith.constant 0 : index
    %143 = vector.load %arg9[%c38, %c0_165] : memref<112x16xbf16, #tpu.memory_space<vmem>>, vector<64x16xbf16>
    %c0_166 = arith.constant 0 : index
    %c320 = arith.constant 320 : index
    %144 = vector.load %arg10[%c0_166, %c320] : memref<64x400xbf16, #tpu.memory_space<vmem>>, vector<64x16xbf16>
    tpu.vector_store %arg10[%c0_166, %c320], %143 {strides = array<i32>} : memref<64x400xbf16, #tpu.memory_space<vmem>>, vector<64x16xbf16>,
    %c39 = arith.constant 39 : index
    %c0_167 = arith.constant 0 : index
    %145 = vector.load %arg9[%c39, %c0_167] : memref<112x16xbf16, #tpu.memory_space<vmem>>, vector<64x16xbf16>
    %c0_168 = arith.constant 0 : index
    %c336 = arith.constant 336 : index
    %146 = vector.load %arg10[%c0_168, %c336] : memref<64x400xbf16, #tpu.memory_space<vmem>>, vector<64x16xbf16>
    tpu.vector_store %arg10[%c0_168, %c336], %145 {strides = array<i32>} : memref<64x400xbf16, #tpu.memory_space<vmem>>, vector<64x16xbf16>,
    %c40_169 = arith.constant 40 : index
    %c0_170 = arith.constant 0 : index
    %147 = vector.load %arg9[%c40_169, %c0_170] : memref<112x16xbf16, #tpu.memory_space<vmem>>, vector<64x16xbf16>
    %c0_171 = arith.constant 0 : index
    %c352 = arith.constant 352 : index
    %148 = vector.load %arg10[%c0_171, %c352] : memref<64x400xbf16, #tpu.memory_space<vmem>>, vector<64x16xbf16>
    tpu.vector_store %arg10[%c0_171, %c352], %147 {strides = array<i32>} : memref<64x400xbf16, #tpu.memory_space<vmem>>, vector<64x16xbf16>,
    %c41 = arith.constant 41 : index
    %c0_172 = arith.constant 0 : index
    %149 = vector.load %arg9[%c41, %c0_172] : memref<112x16xbf16, #tpu.memory_space<vmem>>, vector<64x16xbf16>
    %c0_173 = arith.constant 0 : index
    %c368 = arith.constant 368 : index
    %150 = vector.load %arg10[%c0_173, %c368] : memref<64x400xbf16, #tpu.memory_space<vmem>>, vector<64x16xbf16>
    tpu.vector_store %arg10[%c0_173, %c368], %149 {strides = array<i32>} : memref<64x400xbf16, #tpu.memory_space<vmem>>, vector<64x16xbf16>,
    %c42 = arith.constant 42 : index
    %c0_174 = arith.constant 0 : index
    %151 = vector.load %arg9[%c42, %c0_174] : memref<112x16xbf16, #tpu.memory_space<vmem>>, vector<64x16xbf16>
    %c0_175 = arith.constant 0 : index
    %c384 = arith.constant 384 : index
    %152 = vector.load %arg10[%c0_175, %c384] : memref<64x400xbf16, #tpu.memory_space<vmem>>, vector<64x16xbf16>
    tpu.vector_store %arg10[%c0_175, %c384], %151 {strides = array<i32>} : memref<64x400xbf16, #tpu.memory_space<vmem>>, vector<64x16xbf16>,
    %c0_176 = arith.constant 0 : index
    %c0_177 = arith.constant 0 : index
    %153 = vector.load %arg10[%c0_176, %c0_177] : memref<64x400xbf16, #tpu.memory_space<vmem>>, vector<64x400xbf16>
    %c0_178 = arith.constant 0 : index
    %c0_179 = arith.constant 0 : index
    %154 = vector.load %arg4[%c0_178, %c0_179] : memref<400x8xbf16, #tpu.memory_space<vmem>>, vector<400x8xbf16>
    %cst_180 = arith.constant dense<0.000000e+00> : vector<64x8xf32>
    %155 = tpu.matmul %153, %154, %cst_180 {dimension_numbers = #tpu.dot_dimension_numbers<[1], [0], [0], [1], [0, 0, 1, 1], [], []>} : vector<64x400xbf16>, vector<400x8xbf16>, vector<64x8xf32> -> vector<64x8xf32>
    %c0_181 = arith.constant 0 : index
    %c0_182 = arith.constant 0 : index
    %156 = vector.load %arg5[%c0_181, %c0_182] : memref<1x8xf32, #tpu.memory_space<vmem>>, vector<1x8xf32>
    %157 = vector.broadcast %156 : vector<1x8xf32> to vector<64x8xf32>
    %158 = arith.addf %155, %157 : vector<64x8xf32>
    %159 = arith.truncf %158 : vector<64x8xf32> to vector<64x8xbf16>
    %c0_183 = arith.constant 0 : index
    %c0_184 = arith.constant 0 : index
    %c0_185 = arith.constant 0 : index
    %160 = vector.load %arg7[%c0_183, %c0_184, %c0_185] : memref<1x64x8xbf16, #tpu.memory_space<vmem>>, vector<1x64x8xbf16>
    %161 = vector.shape_cast %160 : vector<1x64x8xbf16> to vector<64x8xbf16>
    %162 = vector.shape_cast %159 : vector<64x8xbf16> to vector<1x64x8xbf16>
    tpu.vector_store %arg7[%c0_183, %c0_184, %c0_185], %162 {strides = array<i32>} : memref<1x64x8xbf16, #tpu.memory_space<vmem>>, vector<1x64x8xbf16>,
    return
  }
  func.func @transform_0(%arg0: i32) -> (i32, i32, i32) {
    %c0_i32 = arith.constant 0 : i32
    %c0_i32_0 = arith.constant 0 : i32
    %c0_i32_1 = arith.constant 0 : i32
    return %arg0, %c0_i32, %c0_i32_0 : i32, i32, i32
  }
  func.func @transform_1(%arg0: i32) -> (i32, i32) {
    %c0_i32 = arith.constant 0 : i32
    %c0_i32_0 = arith.constant 0 : i32
    %c0_i32_1 = arith.constant 0 : i32
    return %c0_i32, %c0_i32_0 : i32, i32
  }
  func.func @transform_2(%arg0: i32) -> (i32, i32) {
    %c0_i32 = arith.constant 0 : i32
    %c0_i32_0 = arith.constant 0 : i32
    %c0_i32_1 = arith.constant 0 : i32
    return %c0_i32, %c0_i32_0 : i32, i32
  }
  func.func @transform_3(%arg0: i32) -> (i32, i32) {
    %c0_i32 = arith.constant 0 : i32
    %c0_i32_0 = arith.constant 0 : i32
    %c0_i32_1 = arith.constant 0 : i32
    return %c0_i32, %c0_i32_0 : i32, i32
  }
  func.func @transform_4(%arg0: i32) -> (i32, i32) {
    %c0_i32 = arith.constant 0 : i32
    %c0_i32_0 = arith.constant 0 : i32
    %c0_i32_1 = arith.constant 0 : i32
    return %c0_i32, %c0_i32_0 : i32, i32
  }
  func.func @transform_5(%arg0: i32) -> (i32, i32) {
    %c0_i32 = arith.constant 0 : i32
    %c0_i32_0 = arith.constant 0 : i32
    %c0_i32_1 = arith.constant 0 : i32
    return %c0_i32, %c0_i32_0 : i32, i32
  }
  func.func @transform_6(%arg0: i32) -> (i32, i32, i32) {
    %c0_i32 = arith.constant 0 : i32
    %c0_i32_0 = arith.constant 0 : i32
    %c0_i32_1 = arith.constant 0 : i32
    return %arg0, %c0_i32, %c0_i32_0 : i32, i32, i32
  }
}

</mosaic_0001>

<llo_original>
// kernel: tpu_custom_call.1
$region0: #{tpu_custom_call.1}
  #allocation0 [shape = 'u32[]', space=smem, size = 0x4, offset = 0x4, fixed_abs, tag = 'smem constant byte address 0x4 - core index']
  #allocation1 [shape = 'u32[144,128]{1,0:T(1,128)}', space=vmem, size = 0x12000, scoped, tag = 'internal scratch']
  #allocation2 [shape = 'bf16[64,200]{1,0:T(16,128)(2,1)}', space=vmem, size = 0x8000, scoped, tag = 'scratch operand']
  #allocation3 [shape = 'bf16[112,16]{1,0:T(16,128)(2,1)}', space=vmem, size = 0x7000, scoped, tag = 'scratch operand']
  #allocation4 [shape = 'bf16[64,400]{1,0:T(16,128)(2,1)}', space=vmem, size = 0x10000, scoped, tag = 'scratch operand']
  %s0 = inlined_call_operand.vmem [shape: bf16[2,112,8], index: 0, kind: input, shape index: {}]
  %s1 = inlined_call_operand.vmem [shape: bf16[200,16], index: 1, kind: input, shape index: {}]
  %s2 = inlined_call_operand.vmem [shape: f32[1,16], index: 2, kind: input, shape index: {}]
  %s3 = inlined_call_operand.vmem [shape: bf16[400,8], index: 3, kind: input, shape index: {}]
  %s4 = inlined_call_operand.vmem [shape: f32[1,8], index: 4, kind: input, shape index: {}]
  %s5 = inlined_call_operand.vmem [shape: f32[64,1], index: 5, kind: input, shape index: {}]
  %s6 = inlined_call_operand.vmem [shape: bf16[2,64,8], index: 6, kind: output, shape index: {}]
  %s7 = sld [smem:[#allocation0]]
  $region57: #{tpu_custom_call.1} parent=0
    _
  %s9 = ssub.s32 1, %s7
  %s10 = scalar_select 0, %s9, %s7
  loop: start=0, step=1, limit=4
  $region2: #{tpu_custom_call.1} parent=0 // loop_pre_header
    _
  $region3: #{tpu_custom_call.1} parent=0 // loop_header
    %s12 = sphi 0, %s16
    %p13 = scmp.ge.s32.totalorder %s12, 4
    %s22 = sphi 0, %s24
    %s25 = sphi 0, %s22
    %s26 = sphi 0, %s25
    %s42 = sphi 0, %s26
    %s46 = sphi 0, %s46
    %s48 = sphi 0, %s46
    %s49 = sphi 0, %s48
    %s63 = sphi 0, %s49
    %s67 = sphi 0, %s67
    %s69 = sphi 0, %s67
    %s70 = sphi 0, %s69
    %s84 = sphi 0, %s70
    %s88 = sphi 0, %s88
    %s90 = sphi 0, %s88
    %s91 = sphi 0, %s90
    %s105 = sphi 0, %s91
    %s109 = sphi 0, %s109
    %s111 = sphi 0, %s109
    %s112 = sphi 0, %s111
    %s126 = sphi 0, %s112
    %s130 = sphi 0, %s130
    %s132 = sphi 0, %s130
    %s133 = sphi 0, %s132
    %s147 = sphi 0, %s133
    %s153 = sphi 0, %s155
    %s156 = sphi 0, %s153
    %s157 = sphi 0, %s156
    %s173 = sphi 0, %s157
  $region4: #{tpu_custom_call.1} parent=0 // loop_header_branch
    %15 = sbr.rel (%p13) target = $region8
  $region5: #{tpu_custom_call.1} parent=0 // loop_body
    %s17 = ssub.s32 %s12, 1
    %s18 = ssub.s32 %s12, 2
    %s19 = sadd.s32 %s12, 1
    %s20 = ssub.s32 %s12, %s19
    %p21 = scmp.eq.s32.totalorder %s20, 0
    %s23 = sadd.s32 %s22, 1
    %s24 = scalar_select %p21, %s22, %s23
    %p27 = pneg %p21
    %p28 = scmp.eq.s32.totalorder %s12, 1
    %p29 = por %p27, %p28
    %p30 = scmp.ne.s32.totalorder %s22, %s25
    %p31 = scmp.eq.s32.totalorder %s12, 0
    %p32 = por %p30, %p31
    %p33 = scmp.ne.s32.totalorder %s22, %s25
    %p34 = scmp.eq.s32.totalorder %s17, 1
    %p35 = por %p33, %p34
    %p36 = scmp.ne.s32.totalorder %s25, %s26
    %p37 = scmp.eq.s32.totalorder %s17, 0
    %p38 = por %p36, %p37
    %p39 = scmp.ne.s32.totalorder %s25, %s26
    %p40 = scmp.eq.s32.totalorder %s18, 1
    %p41 = por %p39, %p40
    %p43 = scmp.ne.s32.totalorder %s26, %s42
    %p44 = scmp.eq.s32.totalorder %s18, 0
    %p45 = por %p43, %p44
    %s47 = sadd.s32 %s46, 1
    %p50 = scmp.eq.s32.totalorder %s12, 1
    %p51 = scmp.ne.s32.totalorder %s46, %s48
    %p52 = scmp.eq.s32.totalorder %s12, 0
    %p53 = por %p51, %p52
    %p54 = scmp.ne.s32.totalorder %s46, %s48
    %p55 = scmp.eq.s32.totalorder %s17, 1
    %p56 = por %p54, %p55
    %p57 = scmp.ne.s32.totalorder %s48, %s49
    %p58 = scmp.eq.s32.totalorder %s17, 0
    %p59 = por %p57, %p58
    %p60 = scmp.ne.s32.totalorder %s48, %s49
    %p61 = scmp.eq.s32.totalorder %s18, 1
    %p62 = por %p60, %p61
    %p64 = scmp.ne.s32.totalorder %s49, %s63
    %p65 = scmp.eq.s32.totalorder %s18, 0
    %p66 = por %p64, %p65
    %s68 = sadd.s32 %s67, 1
    %p71 = scmp.eq.s32.totalorder %s12, 1
    %p72 = scmp.ne.s32.totalorder %s67, %s69
    %p73 = scmp.eq.s32.totalorder %s12, 0
    %p74 = por %p72, %p73
    %p75 = scmp.ne.s32.totalorder %s67, %s69
    %p76 = scmp.eq.s32.totalorder %s17, 1
    %p77 = por %p75, %p76
    %p78 = scmp.ne.s32.totalorder %s69, %s70
    %p79 = scmp.eq.s32.totalorder %s17, 0
    %p80 = por %p78, %p79
    %p81 = scmp.ne.s32.totalorder %s69, %s70
    %p82 = scmp.eq.s32.totalorder %s18, 1
    %p83 = por %p81, %p82
    %p85 = scmp.ne.s32.totalorder %s70, %s84
    %p86 = scmp.eq.s32.totalorder %s18, 0
    %p87 = por %p85, %p86
    %s89 = sadd.s32 %s88, 1
    %p92 = scmp.eq.s32.totalorder %s12, 1
    %p93 = scmp.ne.s32.totalorder %s88, %s90
    %p94 = scmp.eq.s32.totalorder %s12, 0
    %p95 = por %p93, %p94
    %p96 = scmp.ne.s32.totalorder %s88, %s90
    %p97 = scmp.eq.s32.totalorder %s17, 1
    %p98 = por %p96, %p97
    %p99 = scmp.ne.s32.totalorder %s90, %s91
    %p100 = scmp.eq.s32.totalorder %s17, 0
    %p101 = por %p99, %p100
    %p102 = scmp.ne.s32.totalorder %s90, %s91
    %p103 = scmp.eq.s32.totalorder %s18, 1
    %p104 = por %p102, %p103
    %p106 = scmp.ne.s32.totalorder %s91, %s105
    %p107 = scmp.eq.s32.totalorder %s18, 0
    %p108 = por %p106, %p107
    %s110 = sadd.s32 %s109, 1
    %p113 = scmp.eq.s32.totalorder %s12, 1
    %p114 = scmp.ne.s32.totalorder %s109, %s111
    %p115 = scmp.eq.s32.totalorder %s12, 0
    %p116 = por %p114, %p115
    %p117 = scmp.ne.s32.totalorder %s109, %s111
    %p118 = scmp.eq.s32.totalorder %s17, 1
    %p119 = por %p117, %p118
    %p120 = scmp.ne.s32.totalorder %s111, %s112
    %p121 = scmp.eq.s32.totalorder %s17, 0
    %p122 = por %p120, %p121
    %p123 = scmp.ne.s32.totalorder %s111, %s112
    %p124 = scmp.eq.s32.totalorder %s18, 1
    %p125 = por %p123, %p124
    %p127 = scmp.ne.s32.totalorder %s112, %s126
    %p128 = scmp.eq.s32.totalorder %s18, 0
    %p129 = por %p127, %p128
    %s131 = sadd.s32 %s130, 1
    %p134 = scmp.eq.s32.totalorder %s12, 1
    %p135 = scmp.ne.s32.totalorder %s130, %s132
    %p136 = scmp.eq.s32.totalorder %s12, 0
    %p137 = por %p135, %p136
    %p138 = scmp.ne.s32.totalorder %s130, %s132
    %p139 = scmp.eq.s32.totalorder %s17, 1
    %p140 = por %p138, %p139
    %p141 = scmp.ne.s32.totalorder %s132, %s133
    %p142 = scmp.eq.s32.totalorder %s17, 0
    %p143 = por %p141, %p142
    %p144 = scmp.ne.s32.totalorder %s132, %s133
    %p145 = scmp.eq.s32.totalorder %s18, 1
    %p146 = por %p144, %p145
    %p148 = scmp.ne.s32.totalorder %s133, %s147
    %p149 = scmp.eq.s32.totalorder %s18, 0
    %p150 = por %p148, %p149
    %s151 = ssub.s32 %s12, %s19
    %p152 = scmp.eq.s32.totalorder %s151, 0
    %s154 = sadd.s32 %s153, 1
    %s155 = scalar_select %p152, %s153, %s154
    %p158 = pneg %p152
    %p159 = scmp.eq.s32.totalorder %s12, 1
    %p160 = por %p158, %p159
    %p161 = scmp.ne.s32.totalorder %s153, %s156
    %p162 = scmp.eq.s32.totalorder %s12, 0
    %p163 = por %p161, %p162
    %p164 = scmp.ne.s32.totalorder %s153, %s156
    %p165 = scmp.eq.s32.totalorder %s17, 1
    %p166 = por %p164, %p165
    %p167 = scmp.ne.s32.totalorder %s156, %s157
    %p168 = scmp.eq.s32.totalorder %s17, 0
    %p169 = por %p167, %p168
    %p170 = scmp.ne.s32.totalorder %s156, %s157
    %p171 = scmp.eq.s32.totalorder %s18, 1
    %p172 = por %p170, %p171
    %p174 = scmp.ne.s32.totalorder %s157, %s173
    %p175 = scmp.eq.s32.totalorder %s18, 0
    %p176 = por %p174, %p175
    %p177 = scmp.le.s32.totalorder 1, %s12
    %p178 = scmp.lt.s32.totalorder %s12, 3
    %p179 = pnand %p177, %p178
    %p180 = pneg %p179
    // Predicated region
    $region9: #{tpu_custom_call.1} parent=5 // pred_check
      _
    $region10: #{tpu_custom_call.1} parent=5 // pred_check_branch
      %182 = sbr.rel (%p179) target = $region12
    $region11: #{tpu_custom_call.1} parent=5 // pred_region
      %s183 = ssub.s32 %s12, 1
      // Predicated region
      $region13: #{tpu_custom_call.1} parent=11 // pred_check
        %p184 = pneg %p59
      $region14: #{tpu_custom_call.1} parent=11 // pred_check_branch
        %186 = sbr.rel (%p184) target = $region16
      $region15: #{tpu_custom_call.1} parent=11 // pred_region
        _
      $region16: #{tpu_custom_call.1} parent=11 // pred_fallthru
        _
      // Predicated region
      $region17: #{tpu_custom_call.1} parent=11 // pred_check
        %p187 = pneg %p80
      $region18: #{tpu_custom_call.1} parent=11 // pred_check_branch
        %189 = sbr.rel (%p187) target = $region20
      $region19: #{tpu_custom_call.1} parent=11 // pred_region
        _
      $region20: #{tpu_custom_call.1} parent=11 // pred_fallthru
        _
      // Predicated region
      $region21: #{tpu_custom_call.1} parent=11 // pred_check
        %p190 = pneg %p101
      $region22: #{tpu_custom_call.1} parent=11 // pred_check_branch
        %192 = sbr.rel (%p190) target = $region24
      $region23: #{tpu_custom_call.1} parent=11 // pred_region
        _
      $region24: #{tpu_custom_call.1} parent=11 // pred_fallthru
        _
      // Predicated region
      $region25: #{tpu_custom_call.1} parent=11 // pred_check
        %p193 = pneg %p122
      $region26: #{tpu_custom_call.1} parent=11 // pred_check_branch
        %195 = sbr.rel (%p193) target = $region28
      $region27: #{tpu_custom_call.1} parent=11 // pred_region
        _
      $region28: #{tpu_custom_call.1} parent=11 // pred_fallthru
        _
      // Predicated region
      $region29: #{tpu_custom_call.1} parent=11 // pred_check
        %p196 = pneg %p143
      $region30: #{tpu_custom_call.1} parent=11 // pred_check_branch
        %198 = sbr.rel (%p196) target = $region32
      $region31: #{tpu_custom_call.1} parent=11 // pred_region
        _
      $region32: #{tpu_custom_call.1} parent=11 // pred_fallthru
        _
    $region12: #{tpu_custom_call.1} parent=5 // pred_fallthru
      _
    %p199 = scmp.lt.s32.totalorder %s12, 2
    // Predicated region
    $region33: #{tpu_custom_call.1} parent=5 // pred_check
      %p200 = pneg %p199
    $region34: #{tpu_custom_call.1} parent=5 // pred_check_branch
      %202 = sbr.rel (%p200) target = $region36
    $region35: #{tpu_custom_call.1} parent=5 // pred_region
      // Predicated region
      $region37: #{tpu_custom_call.1} parent=35 // pred_check
        %p203 = pneg %p32
      $region38: #{tpu_custom_call.1} parent=35 // pred_check_branch
        %205 = sbr.rel (%p203) target = $region40
      $region39: #{tpu_custom_call.1} parent=35 // pred_region
        %p206 = scmp.lt.s32.totalorder %s12, 1
        %s207 = scalar_select %p206, %s12, 1
        %s208 = smul.addr %s207, 14
        %s209 = smul.addr %s208, 4
        %s210 = scalar_lea.vmem %s0, %s209
      $region40: #{tpu_custom_call.1} parent=35 // pred_fallthru
        _
    $region36: #{tpu_custom_call.1} parent=5 // pred_fallthru
      _
    %p211 = scmp.le.s32.totalorder 1, %s12
    %p212 = scmp.lt.s32.totalorder %s12, 3
    %p213 = pnand %p211, %p212
    %p214 = pneg %p213
    // Predicated region
    $region41: #{tpu_custom_call.1} parent=5 // pred_check
      _
    $region42: #{tpu_custom_call.1} parent=5 // pred_check_branch
      %216 = sbr.rel (%p213) target = $region44
    $region43: #{tpu_custom_call.1} parent=5 // pred_region
      %s217 = ssub.s32 %s12, 1
      %p218 = scmp.lt.s32.totalorder %s17, 1
      %s219 = scalar_select %p218, %s17, 1
      %s220 = smul.addr %s219, 14
      %s221 = smul.addr %s220, 4
      %s222 = scalar_lea.vmem %s0, %s221
      %p223 = pneg %p38
      %p224 = pneg %p35
      %p225 = pneg %p59
      %p226 = pneg %p56
      %p227 = pneg %p80
      %p228 = pneg %p77
      %p229 = pneg %p101
      %p230 = pneg %p98
      %p231 = pneg %p122
      %p232 = pneg %p119
      %p233 = pneg %p143
      %p234 = pneg %p140
      %p235 = pneg %p169
      %p236 = pneg %p166
      %p237 = scmp.lt.s32.totalorder %s17, 1
      %s238 = scalar_select %p237, %s17, 1
      %s239 = smul.addr %s238, 8
      %s240 = smul.addr %s239, 4
      %s241 = scalar_lea.vmem %s6, %s240
      %p242 = scmp.lt.s32.totalorder %s17, 1
      %s243 = scalar_select %p242, %s17, 1
      %s244 = smul.addr %s243, 14
      %s245 = smul.addr %s244, 4
      %s246 = scalar_lea.vmem %s0, %s245
      %p247 = scmp.lt.s32.totalorder %s17, 1
      %s248 = scalar_select %p247, %s17, 1
      %s249 = smul.addr %s248, 8
      %s250 = smul.addr %s249, 4
      %s251 = scalar_lea.vmem %s6, %s250
      %v253 = vld [vmem:[%s246] sm:$0xf]
      %v254 = vld [vmem:[%s246 + $0x4] sm:$0xf]
      %v255 = vld [vmem:[%s246 + $0x8] sm:$0xf]
      %v256 = vld [vmem:[%s246 + $0xc] sm:$0xf]
      %v257 = vld [vmem:[%s246 + $0x10] sm:$0xf]
      %v258 = vld [vmem:[%s246 + $0x14] sm:$0xf]
      %v259 = vld [vmem:[%s246 + $0x18] sm:$0xf]
      %v260 = vld [vmem:[%s246 + $0x1c] sm:$0xf]
      %v269 = vunpack.c.l.b16 %v253
      %v270 = vunpack.c.l.b16 %v254
      %v271 = vunpack.c.l.b16 %v255
      %v272 = vunpack.c.l.b16 %v256
      %v273 = vunpack.c.l.b16 %v257
      %v274 = vunpack.c.l.b16 %v258
      %v275 = vunpack.c.l.b16 %v259
      %v276 = vunpack.c.l.b16 %v260
      %v277 = vpack.c.b16 %v270, %v269
      %v278 = vpack.c.b16 %v272, %v271
      %v279 = vpack.c.b16 %v274, %v273
      %v280 = vpack.c.b16 %v276, %v275
      %vm285 = vcmask 64512
      %286 = vst.msk [vmem:[#allocation2] sm:$0xff] %vm285, %v277
      %287 = vst.msk [vmem:[#allocation2 + $0x10] sm:$0xff] %vm285, %v278
      %288 = vst.msk [vmem:[#allocation2 + $0x20] sm:$0xff] %vm285, %v279
      %289 = vst.msk [vmem:[#allocation2 + $0x30] sm:$0xff] %vm285, %v280
      %v290 = vld [vmem:[%s246] sm:$0xf]
      %v291 = vld [vmem:[%s246 + $0x4] sm:$0xf]
      %v292 = vld [vmem:[%s246 + $0x8] sm:$0xf]
      %v293 = vld [vmem:[%s246 + $0xc] sm:$0xf]
      %v294 = vld [vmem:[%s246 + $0x10] sm:$0xf]
      %v295 = vld [vmem:[%s246 + $0x14] sm:$0xf]
      %v296 = vld [vmem:[%s246 + $0x18] sm:$0xf]
      %v297 = vld [vmem:[%s246 + $0x1c] sm:$0xf]
      %v298 = vld [vmem:[%s246 + $0x20] sm:$0x1]
      %v308 = vunpack.c.l.b16 %v290
      %v309 = vunpack.c.l.b16 %v291
      %v310 = vunpack.c.l.b16 %v292
      %v311 = vunpack.c.l.b16 %v293
      %v312 = vunpack.c.l.b16 %v294
      %v313 = vunpack.c.l.b16 %v295
      %v314 = vunpack.c.l.b16 %v296
      %v315 = vunpack.c.l.b16 %v297
      %v316 = vunpack.c.l.b16 %v298
      %v317 = vpack.c.b16 %v309, %v308
      %v318 = vpack.c.b16 %v311, %v310
      %v319 = vpack.c.b16 %v313, %v312
      %v320 = vpack.c.b16 %v315, %v314
      %v321 = vpack.c.b16 %v316, %v316
      %vm322 = vsmask.f32 7424
      %v324 = vshrl.u32 %v317, 16
      %v326 = vshll.u32 %v317, 16
      %v328 = vrot.slane %v326, 1
      %v329 = vor.u32 %v324, %v328
      %v331 = vshll.u32 %v318, 16
      %v333 = vrot.slane %v331, 1
      %v334 = vsel %vm322, %v329, %v333
      %v335 = vshrl.u32 %v318, 16
      %v337 = vor.u32 %v335, %v333
      %v339 = vshll.u32 %v319, 16
      %v341 = vrot.slane %v339, 1
      %v342 = vsel %vm322, %v337, %v341
      %v343 = vshrl.u32 %v319, 16
      %v345 = vor.u32 %v343, %v341
      %v347 = vshll.u32 %v320, 16
      %v349 = vrot.slane %v347, 1
      %v350 = vsel %vm322, %v345, %v349
      %v351 = vshrl.u32 %v320, 16
      %v353 = vor.u32 %v351, %v349
      %v355 = vshll.u32 %v321, 16
      %v357 = vrot.slane %v355, 1
      %v358 = vsel %vm322, %v353, %v357
      %359 = vrot.lane.b32.xlu0 %v334, 8
      %v360 = vpop.permute.xlu0 %359
      %361 = vrot.lane.b32.xlu0 %v342, 8
      %v362 = vpop.permute.xlu0 %361
      %363 = vrot.lane.b32.xlu0 %v350, 8
      %v364 = vpop.permute.xlu0 %363
      %365 = vrot.lane.b32.xlu0 %v358, 8
      %v366 = vpop.permute.xlu0 %365
      %vm371 = vcmask 130112
      %372 = vst.msk [vmem:[#allocation2] sm:$0xff] %vm371, %v360
      %373 = vst.msk [vmem:[#allocation2 + $0x10] sm:$0xff] %vm371, %v362
      %374 = vst.msk [vmem:[#allocation2 + $0x20] sm:$0xff] %vm371, %v364
      %375 = vst.msk [vmem:[#allocation2 + $0x30] sm:$0xff] %vm371, %v366
      %v376 = vld [vmem:[%s246] sm:$0xe]
      %v377 = vld [vmem:[%s246 + $0x4] sm:$0xf]
      %v378 = vld [vmem:[%s246 + $0x8] sm:$0xf]
      %v379 = vld [vmem:[%s246 + $0xc] sm:$0xf]
      %v380 = vld [vmem:[%s246 + $0x10] sm:$0xf]
      %v381 = vld [vmem:[%s246 + $0x14] sm:$0xf]
      %v382 = vld [vmem:[%s246 + $0x18] sm:$0xf]
      %v383 = vld [vmem:[%s246 + $0x1c] sm:$0xf]
      %v384 = vld [vmem:[%s246 + $0x20] sm:$0x1]
      %v394 = vunpack.c.l.b16 %v376
      %v395 = vunpack.c.l.b16 %v377
      %v396 = vunpack.c.l.b16 %v378
      %v397 = vunpack.c.l.b16 %v379
      %v398 = vunpack.c.l.b16 %v380
      %v399 = vunpack.c.l.b16 %v381
      %v400 = vunpack.c.l.b16 %v382
      %v401 = vunpack.c.l.b16 %v383
      %v402 = vunpack.c.l.b16 %v384
      %v403 = vpack.c.b16 %v395, %v394
      %v404 = vpack.c.b16 %v397, %v396
      %v405 = vpack.c.b16 %v399, %v398
      %v406 = vpack.c.b16 %v401, %v400
      %v407 = vpack.c.b16 %v402, %v402
      %vm408 = vcmask 1046528
      %v409 = vrot.slane %v403, 1
      %v410 = vrot.slane %v404, 1
      %v411 = vsel %vm408, %v409, %v410
      %v412 = vrot.slane %v405, 1
      %v413 = vsel %vm408, %v410, %v412
      %v414 = vrot.slane %v406, 1
      %v415 = vsel %vm408, %v412, %v414
      %v416 = vrot.slane %v407, 1
      %v417 = vsel %vm408, %v414, %v416
      %418 = vrot.lane.b32.xlu0 %v411, 16
      %v419 = vpop.permute.xlu0 %418
      %420 = vrot.lane.b32.xlu0 %v413, 16
      %v421 = vpop.permute.xlu0 %420
      %422 = vrot.lane.b32.xlu0 %v415, 16
      %v423 = vpop.permute.xlu0 %422
      %424 = vrot.lane.b32.xlu0 %v417, 16
      %v425 = vpop.permute.xlu0 %424
      %vm430 = vcmask 195712
      %431 = vst.msk [vmem:[#allocation2] sm:$0xff] %vm430, %v419
      %432 = vst.msk [vmem:[#allocation2 + $0x10] sm:$0xff] %vm430, %v421
      %433 = vst.msk [vmem:[#allocation2 + $0x20] sm:$0xff] %vm430, %v423
      %434 = vst.msk [vmem:[#allocation2 + $0x30] sm:$0xff] %vm430, %v425
      %v435 = vld [vmem:[%s246] sm:$0xe]
      %v436 = vld [vmem:[%s246 + $0x4] sm:$0xf]
      %v437 = vld [vmem:[%s246 + $0x8] sm:$0xf]
      %v438 = vld [vmem:[%s246 + $0xc] sm:$0xf]
      %v439 = vld [vmem:[%s246 + $0x10] sm:$0xf]
      %v440 = vld [vmem:[%s246 + $0x14] sm:$0xf]
      %v441 = vld [vmem:[%s246 + $0x18] sm:$0xf]
      %v442 = vld [vmem:[%s246 + $0x1c] sm:$0xf]
      %v443 = vld [vmem:[%s246 + $0x20] sm:$0x3]
      %v453 = vunpack.c.l.b16 %v435
      %v454 = vunpack.c.l.b16 %v436
      %v455 = vunpack.c.l.b16 %v437
      %v456 = vunpack.c.l.b16 %v438
      %v457 = vunpack.c.l.b16 %v439
      %v458 = vunpack.c.l.b16 %v440
      %v459 = vunpack.c.l.b16 %v441
      %v460 = vunpack.c.l.b16 %v442
      %v461 = vunpack.c.l.b16 %v443
      %v462 = vpack.c.b16 %v454, %v453
      %v463 = vpack.c.b16 %v456, %v455
      %v464 = vpack.c.b16 %v458, %v457
      %v465 = vpack.c.b16 %v460, %v459
      %v466 = vpack.c.b16 %v461, %v461
      %vm467 = vsmask.f32 6400
      %v469 = vshrl.u32 %v462, 16
      %v471 = vrot.slane %v469, 1
      %v472 = vshll.u32 %v462, 16
      %v474 = vrot.slane %v472, 2
      %v475 = vor.u32 %v471, %v474
      %v477 = vshrl.u32 %v463, 16
      %v479 = vrot.slane %v477, 1
      %v480 = vshll.u32 %v463, 16
      %v482 = vrot.slane %v480, 2
      %v483 = vor.u32 %v479, %v482
      %v484 = vsel %vm467, %v475, %v483
      %v486 = vshrl.u32 %v464, 16
      %v488 = vrot.slane %v486, 1
      %v489 = vshll.u32 %v464, 16
      %v491 = vrot.slane %v489, 2
      %v492 = vor.u32 %v488, %v491
      %v493 = vsel %vm467, %v483, %v492
      %v495 = vshrl.u32 %v465, 16
      %v497 = vrot.slane %v495, 1
      %v498 = vshll.u32 %v465, 16
      %v500 = vrot.slane %v498, 2
      %v501 = vor.u32 %v497, %v500
      %v502 = vsel %vm467, %v492, %v501
      %v504 = vshrl.u32 %v466, 16
      %v506 = vrot.slane %v504, 1
      %v507 = vshll.u32 %v466, 16
      %v509 = vrot.slane %v507, 2
      %v510 = vor.u32 %v506, %v509
      %v511 = vsel %vm467, %v501, %v510
      %512 = vrot.lane.b32.xlu0 %v484, 24
      %v513 = vpop.permute.xlu0 %512
      %514 = vrot.lane.b32.xlu0 %v493, 24
      %v515 = vpop.permute.xlu0 %514
      %516 = vrot.lane.b32.xlu0 %v502, 24
      %v517 = vpop.permute.xlu0 %516
      %518 = vrot.lane.b32.xlu0 %v511, 24
      %v519 = vpop.permute.xlu0 %518
      %vm524 = vcmask 261312
      %525 = vst.msk [vmem:[#allocation2] sm:$0xff] %vm524, %v513
      %526 = vst.msk [vmem:[#allocation2 + $0x10] sm:$0xff] %vm524, %v515
      %527 = vst.msk [vmem:[#allocation2 + $0x20] sm:$0xff] %vm524, %v517
      %528 = vst.msk [vmem:[#allocation2 + $0x30] sm:$0xff] %vm524, %v519
      %v529 = vld [vmem:[%s246] sm:$0xc]
      %v530 = vld [vmem:[%s246 + $0x4] sm:$0xf]
      %v531 = vld [vmem:[%s246 + $0x8] sm:$0xf]
      %v532 = vld [vmem:[%s246 + $0xc] sm:$0xf]
      %v533 = vld [vmem:[%s246 + $0x10] sm:$0xf]
      %v534 = vld [vmem:[%s246 + $0x14] sm:$0xf]
      %v535 = vld [vmem:[%s246 + $0x18] sm:$0xf]
      %v536 = vld [vmem:[%s246 + $0x1c] sm:$0xf]
      %v537 = vld [vmem:[%s246 + $0x20] sm:$0x3]
      %v547 = vunpack.c.l.b16 %v529
      %v548 = vunpack.c.l.b16 %v530
      %v549 = vunpack.c.l.b16 %v531
      %v550 = vunpack.c.l.b16 %v532
      %v551 = vunpack.c.l.b16 %v533
      %v552 = vunpack.c.l.b16 %v534
      %v553 = vunpack.c.l.b16 %v535
      %v554 = vunpack.c.l.b16 %v536
      %v555 = vunpack.c.l.b16 %v537
      %v556 = vpack.c.b16 %v548, %v547
      %v557 = vpack.c.b16 %v550, %v549
      %v558 = vpack.c.b16 %v552, %v551
      %v559 = vpack.c.b16 %v554, %v553
      %v560 = vpack.c.b16 %v555, %v555
      %vm561 = vcmask 1045504
      %v562 = vrot.slane %v556, 2
      %v563 = vrot.slane %v557, 2
      %v564 = vsel %vm561, %v562, %v563
      %v565 = vrot.slane %v558, 2
      %v566 = vsel %vm561, %v563, %v565
      %v567 = vrot.slane %v559, 2
      %v568 = vsel %vm561, %v565, %v567
      %v569 = vrot.slane %v560, 2
      %v570 = vsel %vm561, %v567, %v569
      %571 = vrot.lane.b32.xlu0 %v564, 32
      %v572 = vpop.permute.xlu0 %571
      %573 = vrot.lane.b32.xlu0 %v566, 32
      %v574 = vpop.permute.xlu0 %573
      %575 = vrot.lane.b32.xlu0 %v568, 32
      %v576 = vpop.permute.xlu0 %575
      %577 = vrot.lane.b32.xlu0 %v570, 32
      %v578 = vpop.permute.xlu0 %577
      %vm583 = vcmask 326912
      %584 = vst.msk [vmem:[#allocation2] sm:$0xff] %vm583, %v572
      %585 = vst.msk [vmem:[#allocation2 + $0x10] sm:$0xff] %vm583, %v574
      %586 = vst.msk [vmem:[#allocation2 + $0x20] sm:$0xff] %vm583, %v576
      %587 = vst.msk [vmem:[#allocation2 + $0x30] sm:$0xff] %vm583, %v578
      %v588 = vld [vmem:[%s246 + $0x4] sm:$0xf]
      %v589 = vld [vmem:[%s246 + $0x8] sm:$0xf]
      %v590 = vld [vmem:[%s246 + $0xc] sm:$0xf]
      %v591 = vld [vmem:[%s246 + $0x10] sm:$0xf]
      %v592 = vld [vmem:[%s246 + $0x14] sm:$0xf]
      %v593 = vld [vmem:[%s246 + $0x18] sm:$0xf]
      %v594 = vld [vmem:[%s246 + $0x1c] sm:$0xf]
      %v595 = vld [vmem:[%s246 + $0x20] sm:$0xf]
      %v604 = vunpack.c.l.b16 %v588
      %v605 = vunpack.c.l.b16 %v589
      %v606 = vunpack.c.l.b16 %v590
      %v607 = vunpack.c.l.b16 %v591
      %v608 = vunpack.c.l.b16 %v592
      %v609 = vunpack.c.l.b16 %v593
      %v610 = vunpack.c.l.b16 %v594
      %v611 = vunpack.c.l.b16 %v595
      %v612 = vpack.c.b16 %v605, %v604
      %v613 = vpack.c.b16 %v607, %v606
      %v614 = vpack.c.b16 %v609, %v608
      %v615 = vpack.c.b16 %v611, %v610
      %616 = vrot.lane.b32.xlu0 %v612, 40
      %v617 = vpop.permute.xlu0 %616
      %618 = vrot.lane.b32.xlu0 %v613, 40
      %v619 = vpop.permute.xlu0 %618
      %620 = vrot.lane.b32.xlu0 %v614, 40
      %v621 = vpop.permute.xlu0 %620
      %622 = vrot.lane.b32.xlu0 %v615, 40
      %v623 = vpop.permute.xlu0 %622
      %vm628 = vcmask 392512
      %629 = vst.msk [vmem:[#allocation2] sm:$0xff] %vm628, %v617
      %630 = vst.msk [vmem:[#allocation2 + $0x10] sm:$0xff] %vm628, %v619
      %631 = vst.msk [vmem:[#allocation2 + $0x20] sm:$0xff] %vm628, %v621
      %632 = vst.msk [vmem:[#allocation2 + $0x30] sm:$0xff] %vm628, %v623
      %v633 = vld [vmem:[%s246 + $0x4] sm:$0xf]
      %v634 = vld [vmem:[%s246 + $0x8] sm:$0xf]
      %v635 = vld [vmem:[%s246 + $0xc] sm:$0xf]
      %v636 = vld [vmem:[%s246 + $0x10] sm:$0xf]
      %v637 = vld [vmem:[%s246 + $0x14] sm:$0xf]
      %v638 = vld [vmem:[%s246 + $0x18] sm:$0xf]
      %v639 = vld [vmem:[%s246 + $0x1c] sm:$0xf]
      %v640 = vld [vmem:[%s246 + $0x20] sm:$0xf]
      %v641 = vld [vmem:[%s246 + $0x24] sm:$0x1]
      %v651 = vunpack.c.l.b16 %v633
      %v652 = vunpack.c.l.b16 %v634
      %v653 = vunpack.c.l.b16 %v635
      %v654 = vunpack.c.l.b16 %v636
      %v655 = vunpack.c.l.b16 %v637
      %v656 = vunpack.c.l.b16 %v638
      %v657 = vunpack.c.l.b16 %v639
      %v658 = vunpack.c.l.b16 %v640
      %v659 = vunpack.c.l.b16 %v641
      %v660 = vpack.c.b16 %v652, %v651
      %v661 = vpack.c.b16 %v654, %v653
      %v662 = vpack.c.b16 %v656, %v655
      %v663 = vpack.c.b16 %v658, %v657
      %v664 = vpack.c.b16 %v659, %v659
      %v666 = vshrl.u32 %v660, 16
      %v668 = vshll.u32 %v660, 16
      %v670 = vrot.slane %v668, 1
      %v671 = vor.u32 %v666, %v670
      %v673 = vshll.u32 %v661, 16
      %v675 = vrot.slane %v673, 1
      %v676 = vsel %vm322, %v671, %v675
      %v677 = vshrl.u32 %v661, 16
      %v679 = vor.u32 %v677, %v675
      %v681 = vshll.u32 %v662, 16
      %v683 = vrot.slane %v681, 1
      %v684 = vsel %vm322, %v679, %v683
      %v685 = vshrl.u32 %v662, 16
      %v687 = vor.u32 %v685, %v683
      %v689 = vshll.u32 %v663, 16
      %v691 = vrot.slane %v689, 1
      %v692 = vsel %vm322, %v687, %v691
      %v693 = vshrl.u32 %v663, 16
      %v695 = vor.u32 %v693, %v691
      %v697 = vshll.u32 %v664, 16
      %v699 = vrot.slane %v697, 1
      %v700 = vsel %vm322, %v695, %v699
      %701 = vrot.lane.b32.xlu0 %v676, 48
      %v702 = vpop.permute.xlu0 %701
      %703 = vrot.lane.b32.xlu0 %v684, 48
      %v704 = vpop.permute.xlu0 %703
      %705 = vrot.lane.b32.xlu0 %v692, 48
      %v706 = vpop.permute.xlu0 %705
      %707 = vrot.lane.b32.xlu0 %v700, 48
      %v708 = vpop.permute.xlu0 %707
      %vm713 = vcmask 458112
      %714 = vst.msk [vmem:[#allocation2] sm:$0xff] %vm713, %v702
      %715 = vst.msk [vmem:[#allocation2 + $0x10] sm:$0xff] %vm713, %v704
      %716 = vst.msk [vmem:[#allocation2 + $0x20] sm:$0xff] %vm713, %v706
      %717 = vst.msk [vmem:[#allocation2 + $0x30] sm:$0xff] %vm713, %v708
      %v718 = vld [vmem:[%s246 + $0x4] sm:$0xe]
      %v719 = vld [vmem:[%s246 + $0x8] sm:$0xf]
      %v720 = vld [vmem:[%s246 + $0xc] sm:$0xf]
      %v721 = vld [vmem:[%s246 + $0x10] sm:$0xf]
      %v722 = vld [vmem:[%s246 + $0x14] sm:$0xf]
      %v723 = vld [vmem:[%s246 + $0x18] sm:$0xf]
      %v724 = vld [vmem:[%s246 + $0x1c] sm:$0xf]
      %v725 = vld [vmem:[%s246 + $0x20] sm:$0xf]
      %v726 = vld [vmem:[%s246 + $0x24] sm:$0x1]
      %v736 = vunpack.c.l.b16 %v718
      %v737 = vunpack.c.l.b16 %v719
      %v738 = vunpack.c.l.b16 %v720
      %v739 = vunpack.c.l.b16 %v721
      %v740 = vunpack.c.l.b16 %v722
      %v741 = vunpack.c.l.b16 %v723
      %v742 = vunpack.c.l.b16 %v724
      %v743 = vunpack.c.l.b16 %v725
      %v744 = vunpack.c.l.b16 %v726
      %v745 = vpack.c.b16 %v737, %v736
      %v746 = vpack.c.b16 %v739, %v738
      %v747 = vpack.c.b16 %v741, %v740
      %v748 = vpack.c.b16 %v743, %v742
      %v749 = vpack.c.b16 %v744, %v744
      %v750 = vrot.slane %v745, 1
      %v751 = vrot.slane %v746, 1
      %v752 = vsel %vm408, %v750, %v751
      %v753 = vrot.slane %v747, 1
      %v754 = vsel %vm408, %v751, %v753
      %v755 = vrot.slane %v748, 1
      %v756 = vsel %vm408, %v753, %v755
      %v757 = vrot.slane %v749, 1
      %v758 = vsel %vm408, %v755, %v757
      %759 = vrot.lane.b32.xlu0 %v752, 56
      %v760 = vpop.permute.xlu0 %759
      %761 = vrot.lane.b32.xlu0 %v754, 56
      %v762 = vpop.permute.xlu0 %761
      %763 = vrot.lane.b32.xlu0 %v756, 56
      %v764 = vpop.permute.xlu0 %763
      %765 = vrot.lane.b32.xlu0 %v758, 56
      %v766 = vpop.permute.xlu0 %765
      %vm771 = vcmask 523712
      %772 = vst.msk [vmem:[#allocation2] sm:$0xff] %vm771, %v760
      %773 = vst.msk [vmem:[#allocation2 + $0x10] sm:$0xff] %vm771, %v762
      %774 = vst.msk [vmem:[#allocation2 + $0x20] sm:$0xff] %vm771, %v764
      %775 = vst.msk [vmem:[#allocation2 + $0x30] sm:$0xff] %vm771, %v766
      %v776 = vld [vmem:[%s246 + $0x4] sm:$0xe]
      %v777 = vld [vmem:[%s246 + $0x8] sm:$0xf]
      %v778 = vld [vmem:[%s246 + $0xc] sm:$0xf]
      %v779 = vld [vmem:[%s246 + $0x10] sm:$0xf]
      %v780 = vld [vmem:[%s246 + $0x14] sm:$0xf]
      %v781 = vld [vmem:[%s246 + $0x18] sm:$0xf]
      %v782 = vld [vmem:[%s246 + $0x1c] sm:$0xf]
      %v783 = vld [vmem:[%s246 + $0x20] sm:$0xf]
      %v784 = vld [vmem:[%s246 + $0x24] sm:$0x3]
      %v794 = vunpack.c.l.b16 %v776
      %v795 = vunpack.c.l.b16 %v777
      %v796 = vunpack.c.l.b16 %v778
      %v797 = vunpack.c.l.b16 %v779
      %v798 = vunpack.c.l.b16 %v780
      %v799 = vunpack.c.l.b16 %v781
      %v800 = vunpack.c.l.b16 %v782
      %v801 = vunpack.c.l.b16 %v783
      %v802 = vunpack.c.l.b16 %v784
      %v803 = vpack.c.b16 %v795, %v794
      %v804 = vpack.c.b16 %v797, %v796
      %v805 = vpack.c.b16 %v799, %v798
      %v806 = vpack.c.b16 %v801, %v800
      %v807 = vpack.c.b16 %v802, %v802
      %v809 = vshrl.u32 %v803, 16
      %v811 = vrot.slane %v809, 1
      %v812 = vshll.u32 %v803, 16
      %v814 = vrot.slane %v812, 2
      %v815 = vor.u32 %v811, %v814
      %v817 = vshrl.u32 %v804, 16
      %v819 = vrot.slane %v817, 1
      %v820 = vshll.u32 %v804, 16
      %v822 = vrot.slane %v820, 2
      %v823 = vor.u32 %v819, %v822
      %v824 = vsel %vm467, %v815, %v823
      %v826 = vshrl.u32 %v805, 16
      %v828 = vrot.slane %v826, 1
      %v829 = vshll.u32 %v805, 16
      %v831 = vrot.slane %v829, 2
      %v832 = vor.u32 %v828, %v831
      %v833 = vsel %vm467, %v823, %v832
      %v835 = vshrl.u32 %v806, 16
      %v837 = vrot.slane %v835, 1
      %v838 = vshll.u32 %v806, 16
      %v840 = vrot.slane %v838, 2
      %v841 = vor.u32 %v837, %v840
      %v842 = vsel %vm467, %v832, %v841
      %v844 = vshrl.u32 %v807, 16
      %v846 = vrot.slane %v844, 1
      %v847 = vshll.u32 %v807, 16
      %v849 = vrot.slane %v847, 2
      %v850 = vor.u32 %v846, %v849
      %v851 = vsel %vm467, %v841, %v850
      %852 = vrot.lane.b32.xlu0 %v824, 64
      %v853 = vpop.permute.xlu0 %852
      %854 = vrot.lane.b32.xlu0 %v833, 64
      %v855 = vpop.permute.xlu0 %854
      %856 = vrot.lane.b32.xlu0 %v842, 64
      %v857 = vpop.permute.xlu0 %856
      %858 = vrot.lane.b32.xlu0 %v851, 64
      %v859 = vpop.permute.xlu0 %858
      %vm864 = vcmask 589312
      %865 = vst.msk [vmem:[#allocation2] sm:$0xff] %vm864, %v853
      %866 = vst.msk [vmem:[#allocation2 + $0x10] sm:$0xff] %vm864, %v855
      %867 = vst.msk [vmem:[#allocation2 + $0x20] sm:$0xff] %vm864, %v857
      %868 = vst.msk [vmem:[#allocation2 + $0x30] sm:$0xff] %vm864, %v859
      %v869 = vld [vmem:[%s246 + $0x4] sm:$0xc]
      %v870 = vld [vmem:[%s246 + $0x8] sm:$0xf]
      %v871 = vld [vmem:[%s246 + $0xc] sm:$0xf]
      %v872 = vld [vmem:[%s246 + $0x10] sm:$0xf]
      %v873 = vld [vmem:[%s246 + $0x14] sm:$0xf]
      %v874 = vld [vmem:[%s246 + $0x18] sm:$0xf]
      %v875 = vld [vmem:[%s246 + $0x1c] sm:$0xf]
      %v876 = vld [vmem:[%s246 + $0x20] sm:$0xf]
      %v877 = vld [vmem:[%s246 + $0x24] sm:$0x3]
      %v887 = vunpack.c.l.b16 %v869
      %v888 = vunpack.c.l.b16 %v870
      %v889 = vunpack.c.l.b16 %v871
      %v890 = vunpack.c.l.b16 %v872
      %v891 = vunpack.c.l.b16 %v873
      %v892 = vunpack.c.l.b16 %v874
      %v893 = vunpack.c.l.b16 %v875
      %v894 = vunpack.c.l.b16 %v876
      %v895 = vunpack.c.l.b16 %v877
      %v896 = vpack.c.b16 %v888, %v887
      %v897 = vpack.c.b16 %v890, %v889
      %v898 = vpack.c.b16 %v892, %v891
      %v899 = vpack.c.b16 %v894, %v893
      %v900 = vpack.c.b16 %v895, %v895
      %v901 = vrot.slane %v896, 2
      %v902 = vrot.slane %v897, 2
      %v903 = vsel %vm561, %v901, %v902
      %v904 = vrot.slane %v898, 2
      %v905 = vsel %vm561, %v902, %v904
      %v906 = vrot.slane %v899, 2
      %v907 = vsel %vm561, %v904, %v906
      %v908 = vrot.slane %v900, 2
      %v909 = vsel %vm561, %v906, %v908
      %910 = vrot.lane.b32.xlu0 %v903, 72
      %v911 = vpop.permute.xlu0 %910
      %912 = vrot.lane.b32.xlu0 %v905, 72
      %v913 = vpop.permute.xlu0 %912
      %914 = vrot.lane.b32.xlu0 %v907, 72
      %v915 = vpop.permute.xlu0 %914
      %916 = vrot.lane.b32.xlu0 %v909, 72
      %v917 = vpop.permute.xlu0 %916
      %vm922 = vcmask 654912
      %923 = vst.msk [vmem:[#allocation2] sm:$0xff] %vm922, %v911
      %924 = vst.msk [vmem:[#allocation2 + $0x10] sm:$0xff] %vm922, %v913
      %925 = vst.msk [vmem:[#allocation2 + $0x20] sm:$0xff] %vm922, %v915
      %926 = vst.msk [vmem:[#allocation2 + $0x30] sm:$0xff] %vm922, %v917
      %v927 = vld [vmem:[%s246 + $0x8] sm:$0xf]
      %v928 = vld [vmem:[%s246 + $0xc] sm:$0xf]
      %v929 = vld [vmem:[%s246 + $0x10] sm:$0xf]
      %v930 = vld [vmem:[%s246 + $0x14] sm:$0xf]
      %v931 = vld [vmem:[%s246 + $0x18] sm:$0xf]
      %v932 = vld [vmem:[%s246 + $0x1c] sm:$0xf]
      %v933 = vld [vmem:[%s246 + $0x20] sm:$0xf]
      %v934 = vld [vmem:[%s246 + $0x24] sm:$0xf]
      %v943 = vunpack.c.l.b16 %v927
      %v944 = vunpack.c.l.b16 %v928
      %v945 = vunpack.c.l.b16 %v929
      %v946 = vunpack.c.l.b16 %v930
      %v947 = vunpack.c.l.b16 %v931
      %v948 = vunpack.c.l.b16 %v932
      %v949 = vunpack.c.l.b16 %v933
      %v950 = vunpack.c.l.b16 %v934
      %v951 = vpack.c.b16 %v944, %v943
      %v952 = vpack.c.b16 %v946, %v945
      %v953 = vpack.c.b16 %v948, %v947
      %v954 = vpack.c.b16 %v950, %v949
      %955 = vrot.lane.b32.xlu0 %v951, 80
      %v956 = vpop.permute.xlu0 %955
      %957 = vrot.lane.b32.xlu0 %v952, 80
      %v958 = vpop.permute.xlu0 %957
      %959 = vrot.lane.b32.xlu0 %v953, 80
      %v960 = vpop.permute.xlu0 %959
      %961 = vrot.lane.b32.xlu0 %v954, 80
      %v962 = vpop.permute.xlu0 %961
      %vm967 = vcmask 720512
      %968 = vst.msk [vmem:[#allocation2] sm:$0xff] %vm967, %v956
      %969 = vst.msk [vmem:[#allocation2 + $0x10] sm:$0xff] %vm967, %v958
      %970 = vst.msk [vmem:[#allocation2 + $0x20] sm:$0xff] %vm967, %v960
      %971 = vst.msk [vmem:[#allocation2 + $0x30] sm:$0xff] %vm967, %v962
      %v972 = vld [vmem:[%s246 + $0x8] sm:$0xf]
      %v973 = vld [vmem:[%s246 + $0xc] sm:$0xf]
      %v974 = vld [vmem:[%s246 + $0x10] sm:$0xf]
      %v975 = vld [vmem:[%s246 + $0x14] sm:$0xf]
      %v976 = vld [vmem:[%s246 + $0x18] sm:$0xf]
      %v977 = vld [vmem:[%s246 + $0x1c] sm:$0xf]
      %v978 = vld [vmem:[%s246 + $0x20] sm:$0xf]
      %v979 = vld [vmem:[%s246 + $0x24] sm:$0xf]
      %v980 = vld [vmem:[%s246 + $0x28] sm:$0x1]
      %v990 = vunpack.c.l.b16 %v972
      %v991 = vunpack.c.l.b16 %v973
      %v992 = vunpack.c.l.b16 %v974
      %v993 = vunpack.c.l.b16 %v975
      %v994 = vunpack.c.l.b16 %v976
      %v995 = vunpack.c.l.b16 %v977
      %v996 = vunpack.c.l.b16 %v978
      %v997 = vunpack.c.l.b16 %v979
      %v998 = vunpack.c.l.b16 %v980
      %v999 = vpack.c.b16 %v991, %v990
      %v1000 = vpack.c.b16 %v993, %v992
      %v1001 = vpack.c.b16 %v995, %v994
      %v1002 = vpack.c.b16 %v997, %v996
      %v1003 = vpack.c.b16 %v998, %v998
      %v1005 = vshrl.u32 %v999, 16
      %v1007 = vshll.u32 %v999, 16
      %v1009 = vrot.slane %v1007, 1
      %v1010 = vor.u32 %v1005, %v1009
      %v1012 = vshll.u32 %v1000, 16
      %v1014 = vrot.slane %v1012, 1
      %v1015 = vsel %vm322, %v1010, %v1014
      %v1016 = vshrl.u32 %v1000, 16
      %v1018 = vor.u32 %v1016, %v1014
      %v1020 = vshll.u32 %v1001, 16
      %v1022 = vrot.slane %v1020, 1
      %v1023 = vsel %vm322, %v1018, %v1022
      %v1024 = vshrl.u32 %v1001, 16
      %v1026 = vor.u32 %v1024, %v1022
      %v1028 = vshll.u32 %v1002, 16
      %v1030 = vrot.slane %v1028, 1
      %v1031 = vsel %vm322, %v1026, %v1030
      %v1032 = vshrl.u32 %v1002, 16
      %v1034 = vor.u32 %v1032, %v1030
      %v1036 = vshll.u32 %v1003, 16
      %v1038 = vrot.slane %v1036, 1
      %v1039 = vsel %vm322, %v1034, %v1038
      %1040 = vrot.lane.b32.xlu0 %v1015, 88
      %v1041 = vpop.permute.xlu0 %1040
      %1042 = vrot.lane.b32.xlu0 %v1023, 88
      %v1043 = vpop.permute.xlu0 %1042
      %1044 = vrot.lane.b32.xlu0 %v1031, 88
      %v1045 = vpop.permute.xlu0 %1044
      %1046 = vrot.lane.b32.xlu0 %v1039, 88
      %v1047 = vpop.permute.xlu0 %1046
      %vm1052 = vcmask 786112
      %1053 = vst.msk [vmem:[#allocation2] sm:$0xff] %vm1052, %v1041
      %1054 = vst.msk [vmem:[#allocation2 + $0x10] sm:$0xff] %vm1052, %v1043
      %1055 = vst.msk [vmem:[#allocation2 + $0x20] sm:$0xff] %vm1052, %v1045
      %1056 = vst.msk [vmem:[#allocation2 + $0x30] sm:$0xff] %vm1052, %v1047
      %v1057 = vld [vmem:[%s246 + $0x8] sm:$0xe]
      %v1058 = vld [vmem:[%s246 + $0xc] sm:$0xf]
      %v1059 = vld [vmem:[%s246 + $0x10] sm:$0xf]
      %v1060 = vld [vmem:[%s246 + $0x14] sm:$0xf]
      %v1061 = vld [vmem:[%s246 + $0x18] sm:$0xf]
      %v1062 = vld [vmem:[%s246 + $0x1c] sm:$0xf]
      %v1063 = vld [vmem:[%s246 + $0x20] sm:$0xf]
      %v1064 = vld [vmem:[%s246 + $0x24] sm:$0xf]
      %v1065 = vld [vmem:[%s246 + $0x28] sm:$0x1]
      %v1075 = vunpack.c.l.b16 %v1057
      %v1076 = vunpack.c.l.b16 %v1058
      %v1077 = vunpack.c.l.b16 %v1059
      %v1078 = vunpack.c.l.b16 %v1060
      %v1079 = vunpack.c.l.b16 %v1061
      %v1080 = vunpack.c.l.b16 %v1062
      %v1081 = vunpack.c.l.b16 %v1063
      %v1082 = vunpack.c.l.b16 %v1064
      %v1083 = vunpack.c.l.b16 %v1065
      %v1084 = vpack.c.b16 %v1076, %v1075
      %v1085 = vpack.c.b16 %v1078, %v1077
      %v1086 = vpack.c.b16 %v1080, %v1079
      %v1087 = vpack.c.b16 %v1082, %v1081
      %v1088 = vpack.c.b16 %v1083, %v1083
      %v1089 = vrot.slane %v1084, 1
      %v1090 = vrot.slane %v1085, 1
      %v1091 = vsel %vm408, %v1089, %v1090
      %v1092 = vrot.slane %v1086, 1
      %v1093 = vsel %vm408, %v1090, %v1092
      %v1094 = vrot.slane %v1087, 1
      %v1095 = vsel %vm408, %v1092, %v1094
      %v1096 = vrot.slane %v1088, 1
      %v1097 = vsel %vm408, %v1094, %v1096
      %1098 = vrot.lane.b32.xlu0 %v1091, 96
      %v1099 = vpop.permute.xlu0 %1098
      %1100 = vrot.lane.b32.xlu0 %v1093, 96
      %v1101 = vpop.permute.xlu0 %1100
      %1102 = vrot.lane.b32.xlu0 %v1095, 96
      %v1103 = vpop.permute.xlu0 %1102
      %1104 = vrot.lane.b32.xlu0 %v1097, 96
      %v1105 = vpop.permute.xlu0 %1104
      %vm1110 = vcmask 851712
      %1111 = vst.msk [vmem:[#allocation2] sm:$0xff] %vm1110, %v1099
      %1112 = vst.msk [vmem:[#allocation2 + $0x10] sm:$0xff] %vm1110, %v1101
      %1113 = vst.msk [vmem:[#allocation2 + $0x20] sm:$0xff] %vm1110, %v1103
      %1114 = vst.msk [vmem:[#allocation2 + $0x30] sm:$0xff] %vm1110, %v1105
      %v1115 = vld [vmem:[%s246 + $0x8] sm:$0xe]
      %v1116 = vld [vmem:[%s246 + $0xc] sm:$0xf]
      %v1117 = vld [vmem:[%s246 + $0x10] sm:$0xf]
      %v1118 = vld [vmem:[%s246 + $0x14] sm:$0xf]
      %v1119 = vld [vmem:[%s246 + $0x18] sm:$0xf]
      %v1120 = vld [vmem:[%s246 + $0x1c] sm:$0xf]
      %v1121 = vld [vmem:[%s246 + $0x20] sm:$0xf]
      %v1122 = vld [vmem:[%s246 + $0x24] sm:$0xf]
      %v1123 = vld [vmem:[%s246 + $0x28] sm:$0x3]
      %v1133 = vunpack.c.l.b16 %v1115
      %v1134 = vunpack.c.l.b16 %v1116
      %v1135 = vunpack.c.l.b16 %v1117
      %v1136 = vunpack.c.l.b16 %v1118
      %v1137 = vunpack.c.l.b16 %v1119
      %v1138 = vunpack.c.l.b16 %v1120
      %v1139 = vunpack.c.l.b16 %v1121
      %v1140 = vunpack.c.l.b16 %v1122
      %v1141 = vunpack.c.l.b16 %v1123
      %v1142 = vpack.c.b16 %v1134, %v1133
      %v1143 = vpack.c.b16 %v1136, %v1135
      %v1144 = vpack.c.b16 %v1138, %v1137
      %v1145 = vpack.c.b16 %v1140, %v1139
      %v1146 = vpack.c.b16 %v1141, %v1141
      %v1148 = vshrl.u32 %v1142, 16
      %v1150 = vrot.slane %v1148, 1
      %v1151 = vshll.u32 %v1142, 16
      %v1153 = vrot.slane %v1151, 2
      %v1154 = vor.u32 %v1150, %v1153
      %v1156 = vshrl.u32 %v1143, 16
      %v1158 = vrot.slane %v1156, 1
      %v1159 = vshll.u32 %v1143, 16
      %v1161 = vrot.slane %v1159, 2
      %v1162 = vor.u32 %v1158, %v1161
      %v1163 = vsel %vm467, %v1154, %v1162
      %v1165 = vshrl.u32 %v1144, 16
      %v1167 = vrot.slane %v1165, 1
      %v1168 = vshll.u32 %v1144, 16
      %v1170 = vrot.slane %v1168, 2
      %v1171 = vor.u32 %v1167, %v1170
      %v1172 = vsel %vm467, %v1162, %v1171
      %v1174 = vshrl.u32 %v1145, 16
      %v1176 = vrot.slane %v1174, 1
      %v1177 = vshll.u32 %v1145, 16
      %v1179 = vrot.slane %v1177, 2
      %v1180 = vor.u32 %v1176, %v1179
      %v1181 = vsel %vm467, %v1171, %v1180
      %v1183 = vshrl.u32 %v1146, 16
      %v1185 = vrot.slane %v1183, 1
      %v1186 = vshll.u32 %v1146, 16
      %v1188 = vrot.slane %v1186, 2
      %v1189 = vor.u32 %v1185, %v1188
      %v1190 = vsel %vm467, %v1180, %v1189
      %1191 = vrot.lane.b32.xlu0 %v1163, 104
      %v1192 = vpop.permute.xlu0 %1191
      %1193 = vrot.lane.b32.xlu0 %v1172, 104
      %v1194 = vpop.permute.xlu0 %1193
      %1195 = vrot.lane.b32.xlu0 %v1181, 104
      %v1196 = vpop.permute.xlu0 %1195
      %1197 = vrot.lane.b32.xlu0 %v1190, 104
      %v1198 = vpop.permute.xlu0 %1197
      %vm1203 = vcmask 917312
      %1204 = vst.msk [vmem:[#allocation2] sm:$0xff] %vm1203, %v1192
      %1205 = vst.msk [vmem:[#allocation2 + $0x10] sm:$0xff] %vm1203, %v1194
      %1206 = vst.msk [vmem:[#allocation2 + $0x20] sm:$0xff] %vm1203, %v1196
      %1207 = vst.msk [vmem:[#allocation2 + $0x30] sm:$0xff] %vm1203, %v1198
      %v1208 = vld [vmem:[%s246 + $0x8] sm:$0xc]
      %v1209 = vld [vmem:[%s246 + $0xc] sm:$0xf]
      %v1210 = vld [vmem:[%s246 + $0x10] sm:$0xf]
      %v1211 = vld [vmem:[%s246 + $0x14] sm:$0xf]
      %v1212 = vld [vmem:[%s246 + $0x18] sm:$0xf]
      %v1213 = vld [vmem:[%s246 + $0x1c] sm:$0xf]
      %v1214 = vld [vmem:[%s246 + $0x20] sm:$0xf]
      %v1215 = vld [vmem:[%s246 + $0x24] sm:$0xf]
      %v1216 = vld [vmem:[%s246 + $0x28] sm:$0x3]
      %v1226 = vunpack.c.l.b16 %v1208
      %v1227 = vunpack.c.l.b16 %v1209
      %v1228 = vunpack.c.l.b16 %v1210
      %v1229 = vunpack.c.l.b16 %v1211
      %v1230 = vunpack.c.l.b16 %v1212
      %v1231 = vunpack.c.l.b16 %v1213
      %v1232 = vunpack.c.l.b16 %v1214
      %v1233 = vunpack.c.l.b16 %v1215
      %v1234 = vunpack.c.l.b16 %v1216
      %v1235 = vpack.c.b16 %v1227, %v1226
      %v1236 = vpack.c.b16 %v1229, %v1228
      %v1237 = vpack.c.b16 %v1231, %v1230
      %v1238 = vpack.c.b16 %v1233, %v1232
      %v1239 = vpack.c.b16 %v1234, %v1234
      %v1240 = vrot.slane %v1235, 2
      %v1241 = vrot.slane %v1236, 2
      %v1242 = vsel %vm561, %v1240, %v1241
      %v1243 = vrot.slane %v1237, 2
      %v1244 = vsel %vm561, %v1241, %v1243
      %v1245 = vrot.slane %v1238, 2
      %v1246 = vsel %vm561, %v1243, %v1245
      %v1247 = vrot.slane %v1239, 2
      %v1248 = vsel %vm561, %v1245, %v1247
      %1249 = vrot.lane.b32.xlu0 %v1242, 112
      %v1250 = vpop.permute.xlu0 %1249
      %1251 = vrot.lane.b32.xlu0 %v1244, 112
      %v1252 = vpop.permute.xlu0 %1251
      %1253 = vrot.lane.b32.xlu0 %v1246, 112
      %v1254 = vpop.permute.xlu0 %1253
      %1255 = vrot.lane.b32.xlu0 %v1248, 112
      %v1256 = vpop.permute.xlu0 %1255
      %vm1261 = vcmask 982912
      %1262 = vst.msk [vmem:[#allocation2] sm:$0xff] %vm1261, %v1250
      %1263 = vst.msk [vmem:[#allocation2 + $0x10] sm:$0xff] %vm1261, %v1252
      %1264 = vst.msk [vmem:[#allocation2 + $0x20] sm:$0xff] %vm1261, %v1254
      %1265 = vst.msk [vmem:[#allocation2 + $0x30] sm:$0xff] %vm1261, %v1256
      %v1266 = vld [vmem:[%s246 + $0xc] sm:$0xf]
      %v1267 = vld [vmem:[%s246 + $0x10] sm:$0xf]
      %v1268 = vld [vmem:[%s246 + $0x14] sm:$0xf]
      %v1269 = vld [vmem:[%s246 + $0x18] sm:$0xf]
      %v1270 = vld [vmem:[%s246 + $0x1c] sm:$0xf]
      %v1271 = vld [vmem:[%s246 + $0x20] sm:$0xf]
      %v1272 = vld [vmem:[%s246 + $0x24] sm:$0xf]
      %v1273 = vld [vmem:[%s246 + $0x28] sm:$0xf]
      %v1282 = vunpack.c.l.b16 %v1266
      %v1283 = vunpack.c.l.b16 %v1267
      %v1284 = vunpack.c.l.b16 %v1268
      %v1285 = vunpack.c.l.b16 %v1269
      %v1286 = vunpack.c.l.b16 %v1270
      %v1287 = vunpack.c.l.b16 %v1271
      %v1288 = vunpack.c.l.b16 %v1272
      %v1289 = vunpack.c.l.b16 %v1273
      %v1290 = vpack.c.b16 %v1283, %v1282
      %v1291 = vpack.c.b16 %v1285, %v1284
      %v1292 = vpack.c.b16 %v1287, %v1286
      %v1293 = vpack.c.b16 %v1289, %v1288
      %1294 = vrot.lane.b32.xlu0 %v1290, 120
      %v1295 = vpop.permute.xlu0 %1294
      %1296 = vrot.lane.b32.xlu0 %v1291, 120
      %v1297 = vpop.permute.xlu0 %1296
      %1298 = vrot.lane.b32.xlu0 %v1292, 120
      %v1299 = vpop.permute.xlu0 %1298
      %1300 = vrot.lane.b32.xlu0 %v1293, 120
      %v1301 = vpop.permute.xlu0 %1300
      %vm1306 = vcmask 1048512
      %1307 = vst.msk [vmem:[#allocation2] sm:$0xff] %vm1306, %v1295
      %1308 = vst.msk [vmem:[#allocation2 + $0x10] sm:$0xff] %vm1306, %v1297
      %1309 = vst.msk [vmem:[#allocation2 + $0x20] sm:$0xff] %vm1306, %v1299
      %1310 = vst.msk [vmem:[#allocation2 + $0x30] sm:$0xff] %vm1306, %v1301
      %v1311 = vld [vmem:[%s246 + $0xc] sm:$0xf]
      %v1312 = vld [vmem:[%s246 + $0x10] sm:$0xf]
      %v1313 = vld [vmem:[%s246 + $0x14] sm:$0xf]
      %v1314 = vld [vmem:[%s246 + $0x18] sm:$0xf]
      %v1315 = vld [vmem:[%s246 + $0x1c] sm:$0xf]
      %v1316 = vld [vmem:[%s246 + $0x20] sm:$0xf]
      %v1317 = vld [vmem:[%s246 + $0x24] sm:$0xf]
      %v1318 = vld [vmem:[%s246 + $0x28] sm:$0xf]
      %v1319 = vld [vmem:[%s246 + $0x2c] sm:$0x1]
      %v1329 = vunpack.c.l.b16 %v1311
      %v1330 = vunpack.c.l.b16 %v1312
      %v1331 = vunpack.c.l.b16 %v1313
      %v1332 = vunpack.c.l.b16 %v1314
      %v1333 = vunpack.c.l.b16 %v1315
      %v1334 = vunpack.c.l.b16 %v1316
      %v1335 = vunpack.c.l.b16 %v1317
      %v1336 = vunpack.c.l.b16 %v1318
      %v1337 = vunpack.c.l.b16 %v1319
      %v1338 = vpack.c.b16 %v1330, %v1329
      %v1339 = vpack.c.b16 %v1332, %v1331
      %v1340 = vpack.c.b16 %v1334, %v1333
      %v1341 = vpack.c.b16 %v1336, %v1335
      %v1342 = vpack.c.b16 %v1337, %v1337
      %v1344 = vshrl.u32 %v1338, 16
      %v1346 = vshll.u32 %v1338, 16
      %v1348 = vrot.slane %v1346, 1
      %v1349 = vor.u32 %v1344, %v1348
      %v1351 = vshll.u32 %v1339, 16
      %v1353 = vrot.slane %v1351, 1
      %v1354 = vsel %vm322, %v1349, %v1353
      %v1355 = vshrl.u32 %v1339, 16
      %v1357 = vor.u32 %v1355, %v1353
      %v1359 = vshll.u32 %v1340, 16
      %v1361 = vrot.slane %v1359, 1
      %v1362 = vsel %vm322, %v1357, %v1361
      %v1363 = vshrl.u32 %v1340, 16
      %v1365 = vor.u32 %v1363, %v1361
      %v1367 = vshll.u32 %v1341, 16
      %v1369 = vrot.slane %v1367, 1
      %v1370 = vsel %vm322, %v1365, %v1369
      %v1371 = vshrl.u32 %v1341, 16
      %v1373 = vor.u32 %v1371, %v1369
      %v1375 = vshll.u32 %v1342, 16
      %v1377 = vrot.slane %v1375, 1
      %v1378 = vsel %vm322, %v1373, %v1377
      %1383 = vst.msk [vmem:[#allocation2 + $0x8] sm:$0xff] %vm285, %v1354
      %1384 = vst.msk [vmem:[#allocation2 + $0x18] sm:$0xff] %vm285, %v1362
      %1385 = vst.msk [vmem:[#allocation2 + $0x28] sm:$0xff] %vm285, %v1370
      %1386 = vst.msk [vmem:[#allocation2 + $0x38] sm:$0xff] %vm285, %v1378
      %v1387 = vld [vmem:[%s246 + $0xc] sm:$0xe]
      %v1388 = vld [vmem:[%s246 + $0x10] sm:$0xf]
      %v1389 = vld [vmem:[%s246 + $0x14] sm:$0xf]
      %v1390 = vld [vmem:[%s246 + $0x18] sm:$0xf]
      %v1391 = vld [vmem:[%s246 + $0x1c] sm:$0xf]
      %v1392 = vld [vmem:[%s246 + $0x20] sm:$0xf]
      %v1393 = vld [vmem:[%s246 + $0x24] sm:$0xf]
      %v1394 = vld [vmem:[%s246 + $0x28] sm:$0xf]
      %v1395 = vld [vmem:[%s246 + $0x2c] sm:$0x1]
      %v1405 = vunpack.c.l.b16 %v1387
      %v1406 = vunpack.c.l.b16 %v1388
      %v1407 = vunpack.c.l.b16 %v1389
      %v1408 = vunpack.c.l.b16 %v1390
      %v1409 = vunpack.c.l.b16 %v1391
      %v1410 = vunpack.c.l.b16 %v1392
      %v1411 = vunpack.c.l.b16 %v1393
      %v1412 = vunpack.c.l.b16 %v1394
      %v1413 = vunpack.c.l.b16 %v1395
      %v1414 = vpack.c.b16 %v1406, %v1405
      %v1415 = vpack.c.b16 %v1408, %v1407
      %v1416 = vpack.c.b16 %v1410, %v1409
      %v1417 = vpack.c.b16 %v1412, %v1411
      %v1418 = vpack.c.b16 %v1413, %v1413
      %v1419 = vrot.slane %v1414, 1
      %v1420 = vrot.slane %v1415, 1
      %v1421 = vsel %vm408, %v1419, %v1420
      %v1422 = vrot.slane %v1416, 1
      %v1423 = vsel %vm408, %v1420, %v1422
      %v1424 = vrot.slane %v1417, 1
      %v1425 = vsel %vm408, %v1422, %v1424
      %v1426 = vrot.slane %v1418, 1
      %v1427 = vsel %vm408, %v1424, %v1426
      %1428 = vrot.lane.b32.xlu0 %v1421, 8
      %v1429 = vpop.permute.xlu0 %1428
      %1430 = vrot.lane.b32.xlu0 %v1423, 8
      %v1431 = vpop.permute.xlu0 %1430
      %1432 = vrot.lane.b32.xlu0 %v1425, 8
      %v1433 = vpop.permute.xlu0 %1432
      %1434 = vrot.lane.b32.xlu0 %v1427, 8
      %v1435 = vpop.permute.xlu0 %1434
      %1440 = vst.msk [vmem:[#allocation2 + $0x8] sm:$0xff] %vm371, %v1429
      %1441 = vst.msk [vmem:[#allocation2 + $0x18] sm:$0xff] %vm371, %v1431
      %1442 = vst.msk [vmem:[#allocation2 + $0x28] sm:$0xff] %vm371, %v1433
      %1443 = vst.msk [vmem:[#allocation2 + $0x38] sm:$0xff] %vm371, %v1435
      %v1444 = vld [vmem:[%s246 + $0xc] sm:$0xe]
      %v1445 = vld [vmem:[%s246 + $0x10] sm:$0xf]
      %v1446 = vld [vmem:[%s246 + $0x14] sm:$0xf]
      %v1447 = vld [vmem:[%s246 + $0x18] sm:$0xf]
      %v1448 = vld [vmem:[%s246 + $0x1c] sm:$0xf]
      %v1449 = vld [vmem:[%s246 + $0x20] sm:$0xf]
      %v1450 = vld [vmem:[%s246 + $0x24] sm:$0xf]
      %v1451 = vld [vmem:[%s246 + $0x28] sm:$0xf]
      %v1452 = vld [vmem:[%s246 + $0x2c] sm:$0x3]
      %v1462 = vunpack.c.l.b16 %v1444
      %v1463 = vunpack.c.l.b16 %v1445
      %v1464 = vunpack.c.l.b16 %v1446
      %v1465 = vunpack.c.l.b16 %v1447
      %v1466 = vunpack.c.l.b16 %v1448
      %v1467 = vunpack.c.l.b16 %v1449
      %v1468 = vunpack.c.l.b16 %v1450
      %v1469 = vunpack.c.l.b16 %v1451
      %v1470 = vunpack.c.l.b16 %v1452
      %v1471 = vpack.c.b16 %v1463, %v1462
      %v1472 = vpack.c.b16 %v1465, %v1464
      %v1473 = vpack.c.b16 %v1467, %v1466
      %v1474 = vpack.c.b16 %v1469, %v1468
      %v1475 = vpack.c.b16 %v1470, %v1470
      %v1477 = vshrl.u32 %v1471, 16
      %v1479 = vrot.slane %v1477, 1
      %v1480 = vshll.u32 %v1471, 16
      %v1482 = vrot.slane %v1480, 2
      %v1483 = vor.u32 %v1479, %v1482
      %v1485 = vshrl.u32 %v1472, 16
      %v1487 = vrot.slane %v1485, 1
      %v1488 = vshll.u32 %v1472, 16
      %v1490 = vrot.slane %v1488, 2
      %v1491 = vor.u32 %v1487, %v1490
      %v1492 = vsel %vm467, %v1483, %v1491
      %v1494 = vshrl.u32 %v1473, 16
      %v1496 = vrot.slane %v1494, 1
      %v1497 = vshll.u32 %v1473, 16
      %v1499 = vrot.slane %v1497, 2
      %v1500 = vor.u32 %v1496, %v1499
      %v1501 = vsel %vm467, %v1491, %v1500
      %v1503 = vshrl.u32 %v1474, 16
      %v1505 = vrot.slane %v1503, 1
      %v1506 = vshll.u32 %v1474, 16
      %v1508 = vrot.slane %v1506, 2
      %v1509 = vor.u32 %v1505, %v1508
      %v1510 = vsel %vm467, %v1500, %v1509
      %v1512 = vshrl.u32 %v1475, 16
      %v1514 = vrot.slane %v1512, 1
      %v1515 = vshll.u32 %v1475, 16
      %v1517 = vrot.slane %v1515, 2
      %v1518 = vor.u32 %v1514, %v1517
      %v1519 = vsel %vm467, %v1509, %v1518
      %1520 = vrot.lane.b32.xlu0 %v1492, 16
      %v1521 = vpop.permute.xlu0 %1520
      %1522 = vrot.lane.b32.xlu0 %v1501, 16
      %v1523 = vpop.permute.xlu0 %1522
      %1524 = vrot.lane.b32.xlu0 %v1510, 16
      %v1525 = vpop.permute.xlu0 %1524
      %1526 = vrot.lane.b32.xlu0 %v1519, 16
      %v1527 = vpop.permute.xlu0 %1526
      %1532 = vst.msk [vmem:[#allocation2 + $0x8] sm:$0xff] %vm430, %v1521
      %1533 = vst.msk [vmem:[#allocation2 + $0x18] sm:$0xff] %vm430, %v1523
      %1534 = vst.msk [vmem:[#allocation2 + $0x28] sm:$0xff] %vm430, %v1525
      %1535 = vst.msk [vmem:[#allocation2 + $0x38] sm:$0xff] %vm430, %v1527
      %v1536 = vld [vmem:[%s246 + $0xc] sm:$0xc]
      %v1537 = vld [vmem:[%s246 + $0x10] sm:$0xf]
      %v1538 = vld [vmem:[%s246 + $0x14] sm:$0xf]
      %v1539 = vld [vmem:[%s246 + $0x18] sm:$0xf]
      %v1540 = vld [vmem:[%s246 + $0x1c] sm:$0xf]
      %v1541 = vld [vmem:[%s246 + $0x20] sm:$0xf]
      %v1542 = vld [vmem:[%s246 + $0x24] sm:$0xf]
      %v1543 = vld [vmem:[%s246 + $0x28] sm:$0xf]
      %v1544 = vld [vmem:[%s246 + $0x2c] sm:$0x3]
      %v1554 = vunpack.c.l.b16 %v1536
      %v1555 = vunpack.c.l.b16 %v1537
      %v1556 = vunpack.c.l.b16 %v1538
      %v1557 = vunpack.c.l.b16 %v1539
      %v1558 = vunpack.c.l.b16 %v1540
      %v1559 = vunpack.c.l.b16 %v1541
      %v1560 = vunpack.c.l.b16 %v1542
      %v1561 = vunpack.c.l.b16 %v1543
      %v1562 = vunpack.c.l.b16 %v1544
      %v1563 = vpack.c.b16 %v1555, %v1554
      %v1564 = vpack.c.b16 %v1557, %v1556
      %v1565 = vpack.c.b16 %v1559, %v1558
      %v1566 = vpack.c.b16 %v1561, %v1560
      %v1567 = vpack.c.b16 %v1562, %v1562
      %v1568 = vrot.slane %v1563, 2
      %v1569 = vrot.slane %v1564, 2
      %v1570 = vsel %vm561, %v1568, %v1569
      %v1571 = vrot.slane %v1565, 2
      %v1572 = vsel %vm561, %v1569, %v1571
      %v1573 = vrot.slane %v1566, 2
      %v1574 = vsel %vm561, %v1571, %v1573
      %v1575 = vrot.slane %v1567, 2
      %v1576 = vsel %vm561, %v1573, %v1575
      %1577 = vrot.lane.b32.xlu0 %v1570, 24
      %v1578 = vpop.permute.xlu0 %1577
      %1579 = vrot.lane.b32.xlu0 %v1572, 24
      %v1580 = vpop.permute.xlu0 %1579
      %1581 = vrot.lane.b32.xlu0 %v1574, 24
      %v1582 = vpop.permute.xlu0 %1581
      %1583 = vrot.lane.b32.xlu0 %v1576, 24
      %v1584 = vpop.permute.xlu0 %1583
      %1589 = vst.msk [vmem:[#allocation2 + $0x8] sm:$0xff] %vm524, %v1578
      %1590 = vst.msk [vmem:[#allocation2 + $0x18] sm:$0xff] %vm524, %v1580
      %1591 = vst.msk [vmem:[#allocation2 + $0x28] sm:$0xff] %vm524, %v1582
      %1592 = vst.msk [vmem:[#allocation2 + $0x38] sm:$0xff] %vm524, %v1584
      %v1593 = vld [vmem:[%s246 + $0x10] sm:$0xf]
      %v1594 = vld [vmem:[%s246 + $0x14] sm:$0xf]
      %v1595 = vld [vmem:[%s246 + $0x18] sm:$0xf]
      %v1596 = vld [vmem:[%s246 + $0x1c] sm:$0xf]
      %v1597 = vld [vmem:[%s246 + $0x20] sm:$0xf]
      %v1598 = vld [vmem:[%s246 + $0x24] sm:$0xf]
      %v1599 = vld [vmem:[%s246 + $0x28] sm:$0xf]
      %v1600 = vld [vmem:[%s246 + $0x2c] sm:$0xf]
      %v1609 = vunpack.c.l.b16 %v1593
      %v1610 = vunpack.c.l.b16 %v1594
      %v1611 = vunpack.c.l.b16 %v1595
      %v1612 = vunpack.c.l.b16 %v1596
      %v1613 = vunpack.c.l.b16 %v1597
      %v1614 = vunpack.c.l.b16 %v1598
      %v1615 = vunpack.c.l.b16 %v1599
      %v1616 = vunpack.c.l.b16 %v1600
      %v1617 = vpack.c.b16 %v1610, %v1609
      %v1618 = vpack.c.b16 %v1612, %v1611
      %v1619 = vpack.c.b16 %v1614, %v1613
      %v1620 = vpack.c.b16 %v1616, %v1615
      %1621 = vrot.lane.b32.xlu0 %v1617, 32
      %v1622 = vpop.permute.xlu0 %1621
      %1623 = vrot.lane.b32.xlu0 %v1618, 32
      %v1624 = vpop.permute.xlu0 %1623
      %1625 = vrot.lane.b32.xlu0 %v1619, 32
      %v1626 = vpop.permute.xlu0 %1625
      %1627 = vrot.lane.b32.xlu0 %v1620, 32
      %v1628 = vpop.permute.xlu0 %1627
      %1633 = vst.msk [vmem:[#allocation2 + $0x8] sm:$0xff] %vm583, %v1622
      %1634 = vst.msk [vmem:[#allocation2 + $0x18] sm:$0xff] %vm583, %v1624
      %1635 = vst.msk [vmem:[#allocation2 + $0x28] sm:$0xff] %vm583, %v1626
      %1636 = vst.msk [vmem:[#allocation2 + $0x38] sm:$0xff] %vm583, %v1628
      %v1637 = vld [vmem:[%s246 + $0x10] sm:$0xf]
      %v1638 = vld [vmem:[%s246 + $0x14] sm:$0xf]
      %v1639 = vld [vmem:[%s246 + $0x18] sm:$0xf]
      %v1640 = vld [vmem:[%s246 + $0x1c] sm:$0xf]
      %v1641 = vld [vmem:[%s246 + $0x20] sm:$0xf]
      %v1642 = vld [vmem:[%s246 + $0x24] sm:$0xf]
      %v1643 = vld [vmem:[%s246 + $0x28] sm:$0xf]
      %v1644 = vld [vmem:[%s246 + $0x2c] sm:$0xf]
      %v1645 = vld [vmem:[%s246 + $0x30] sm:$0x1]
      %v1655 = vunpack.c.l.b16 %v1637
      %v1656 = vunpack.c.l.b16 %v1638
      %v1657 = vunpack.c.l.b16 %v1639
      %v1658 = vunpack.c.l.b16 %v1640
      %v1659 = vunpack.c.l.b16 %v1641
      %v1660 = vunpack.c.l.b16 %v1642
      %v1661 = vunpack.c.l.b16 %v1643
      %v1662 = vunpack.c.l.b16 %v1644
      %v1663 = vunpack.c.l.b16 %v1645
      %v1664 = vpack.c.b16 %v1656, %v1655
      %v1665 = vpack.c.b16 %v1658, %v1657
      %v1666 = vpack.c.b16 %v1660, %v1659
      %v1667 = vpack.c.b16 %v1662, %v1661
      %v1668 = vpack.c.b16 %v1663, %v1663
      %v1670 = vshrl.u32 %v1664, 16
      %v1672 = vshll.u32 %v1664, 16
      %v1674 = vrot.slane %v1672, 1
      %v1675 = vor.u32 %v1670, %v1674
      %v1677 = vshll.u32 %v1665, 16
      %v1679 = vrot.slane %v1677, 1
      %v1680 = vsel %vm322, %v1675, %v1679
      %v1681 = vshrl.u32 %v1665, 16
      %v1683 = vor.u32 %v1681, %v1679
      %v1685 = vshll.u32 %v1666, 16
      %v1687 = vrot.slane %v1685, 1
      %v1688 = vsel %vm322, %v1683, %v1687
      %v1689 = vshrl.u32 %v1666, 16
      %v1691 = vor.u32 %v1689, %v1687
      %v1693 = vshll.u32 %v1667, 16
      %v1695 = vrot.slane %v1693, 1
      %v1696 = vsel %vm322, %v1691, %v1695
      %v1697 = vshrl.u32 %v1667, 16
      %v1699 = vor.u32 %v1697, %v1695
      %v1701 = vshll.u32 %v1668, 16
      %v1703 = vrot.slane %v1701, 1
      %v1704 = vsel %vm322, %v1699, %v1703
      %1705 = vrot.lane.b32.xlu0 %v1680, 40
      %v1706 = vpop.permute.xlu0 %1705
      %1707 = vrot.lane.b32.xlu0 %v1688, 40
      %v1708 = vpop.permute.xlu0 %1707
      %1709 = vrot.lane.b32.xlu0 %v1696, 40
      %v1710 = vpop.permute.xlu0 %1709
      %1711 = vrot.lane.b32.xlu0 %v1704, 40
      %v1712 = vpop.permute.xlu0 %1711
      %1717 = vst.msk [vmem:[#allocation2 + $0x8] sm:$0xff] %vm628, %v1706
      %1718 = vst.msk [vmem:[#allocation2 + $0x18] sm:$0xff] %vm628, %v1708
      %1719 = vst.msk [vmem:[#allocation2 + $0x28] sm:$0xff] %vm628, %v1710
      %1720 = vst.msk [vmem:[#allocation2 + $0x38] sm:$0xff] %vm628, %v1712
      %v1721 = vld [vmem:[%s246 + $0x10] sm:$0xe]
      %v1722 = vld [vmem:[%s246 + $0x14] sm:$0xf]
      %v1723 = vld [vmem:[%s246 + $0x18] sm:$0xf]
      %v1724 = vld [vmem:[%s246 + $0x1c] sm:$0xf]
      %v1725 = vld [vmem:[%s246 + $0x20] sm:$0xf]
      %v1726 = vld [vmem:[%s246 + $0x24] sm:$0xf]
      %v1727 = vld [vmem:[%s246 + $0x28] sm:$0xf]
      %v1728 = vld [vmem:[%s246 + $0x2c] sm:$0xf]
      %v1729 = vld [vmem:[%s246 + $0x30] sm:$0x1]
      %v1739 = vunpack.c.l.b16 %v1721
      %v1740 = vunpack.c.l.b16 %v1722
      %v1741 = vunpack.c.l.b16 %v1723
      %v1742 = vunpack.c.l.b16 %v1724
      %v1743 = vunpack.c.l.b16 %v1725
      %v1744 = vunpack.c.l.b16 %v1726
      %v1745 = vunpack.c.l.b16 %v1727
      %v1746 = vunpack.c.l.b16 %v1728
      %v1747 = vunpack.c.l.b16 %v1729
      %v1748 = vpack.c.b16 %v1740, %v1739
      %v1749 = vpack.c.b16 %v1742, %v1741
      %v1750 = vpack.c.b16 %v1744, %v1743
      %v1751 = vpack.c.b16 %v1746, %v1745
      %v1752 = vpack.c.b16 %v1747, %v1747
      %v1753 = vrot.slane %v1748, 1
      %v1754 = vrot.slane %v1749, 1
      %v1755 = vsel %vm408, %v1753, %v1754
      %v1756 = vrot.slane %v1750, 1
      %v1757 = vsel %vm408, %v1754, %v1756
      %v1758 = vrot.slane %v1751, 1
      %v1759 = vsel %vm408, %v1756, %v1758
      %v1760 = vrot.slane %v1752, 1
      %v1761 = vsel %vm408, %v1758, %v1760
      %1762 = vrot.lane.b32.xlu0 %v1755, 48
      %v1763 = vpop.permute.xlu0 %1762
      %1764 = vrot.lane.b32.xlu0 %v1757, 48
      %v1765 = vpop.permute.xlu0 %1764
      %1766 = vrot.lane.b32.xlu0 %v1759, 48
      %v1767 = vpop.permute.xlu0 %1766
      %1768 = vrot.lane.b32.xlu0 %v1761, 48
      %v1769 = vpop.permute.xlu0 %1768
      %1774 = vst.msk [vmem:[#allocation2 + $0x8] sm:$0xff] %vm713, %v1763
      %1775 = vst.msk [vmem:[#allocation2 + $0x18] sm:$0xff] %vm713, %v1765
      %1776 = vst.msk [vmem:[#allocation2 + $0x28] sm:$0xff] %vm713, %v1767
      %1777 = vst.msk [vmem:[#allocation2 + $0x38] sm:$0xff] %vm713, %v1769
      %v1778 = vld [vmem:[%s246 + $0x10] sm:$0xe]
      %v1779 = vld [vmem:[%s246 + $0x14] sm:$0xf]
      %v1780 = vld [vmem:[%s246 + $0x18] sm:$0xf]
      %v1781 = vld [vmem:[%s246 + $0x1c] sm:$0xf]
      %v1782 = vld [vmem:[%s246 + $0x20] sm:$0xf]
      %v1783 = vld [vmem:[%s246 + $0x24] sm:$0xf]
      %v1784 = vld [vmem:[%s246 + $0x28] sm:$0xf]
      %v1785 = vld [vmem:[%s246 + $0x2c] sm:$0xf]
      %v1786 = vld [vmem:[%s246 + $0x30] sm:$0x3]
      %v1796 = vunpack.c.l.b16 %v1778
      %v1797 = vunpack.c.l.b16 %v1779
      %v1798 = vunpack.c.l.b16 %v1780
      %v1799 = vunpack.c.l.b16 %v1781
      %v1800 = vunpack.c.l.b16 %v1782
      %v1801 = vunpack.c.l.b16 %v1783
      %v1802 = vunpack.c.l.b16 %v1784
      %v1803 = vunpack.c.l.b16 %v1785
      %v1804 = vunpack.c.l.b16 %v1786
      %v1805 = vpack.c.b16 %v1797, %v1796
      %v1806 = vpack.c.b16 %v1799, %v1798
      %v1807 = vpack.c.b16 %v1801, %v1800
      %v1808 = vpack.c.b16 %v1803, %v1802
      %v1809 = vpack.c.b16 %v1804, %v1804
      %v1811 = vshrl.u32 %v1805, 16
      %v1813 = vrot.slane %v1811, 1
      %v1814 = vshll.u32 %v1805, 16
      %v1816 = vrot.slane %v1814, 2
      %v1817 = vor.u32 %v1813, %v1816
      %v1819 = vshrl.u32 %v1806, 16
      %v1821 = vrot.slane %v1819, 1
      %v1822 = vshll.u32 %v1806, 16
      %v1824 = vrot.slane %v1822, 2
      %v1825 = vor.u32 %v1821, %v1824
      %v1826 = vsel %vm467, %v1817, %v1825
      %v1828 = vshrl.u32 %v1807, 16
      %v1830 = vrot.slane %v1828, 1
      %v1831 = vshll.u32 %v1807, 16
      %v1833 = vrot.slane %v1831, 2
      %v1834 = vor.u32 %v1830, %v1833
      %v1835 = vsel %vm467, %v1825, %v1834
      %v1837 = vshrl.u32 %v1808, 16
      %v1839 = vrot.slane %v1837, 1
      %v1840 = vshll.u32 %v1808, 16
      %v1842 = vrot.slane %v1840, 2
      %v1843 = vor.u32 %v1839, %v1842
      %v1844 = vsel %vm467, %v1834, %v1843
      %v1846 = vshrl.u32 %v1809, 16
      %v1848 = vrot.slane %v1846, 1
      %v1849 = vshll.u32 %v1809, 16
      %v1851 = vrot.slane %v1849, 2
      %v1852 = vor.u32 %v1848, %v1851
      %v1853 = vsel %vm467, %v1843, %v1852
      %1854 = vrot.lane.b32.xlu0 %v1826, 56
      %v1855 = vpop.permute.xlu0 %1854
      %1856 = vrot.lane.b32.xlu0 %v1835, 56
      %v1857 = vpop.permute.xlu0 %1856
      %1858 = vrot.lane.b32.xlu0 %v1844, 56
      %v1859 = vpop.permute.xlu0 %1858
      %1860 = vrot.lane.b32.xlu0 %v1853, 56
      %v1861 = vpop.permute.xlu0 %1860
      %1866 = vst.msk [vmem:[#allocation2 + $0x8] sm:$0xff] %vm771, %v1855
      %1867 = vst.msk [vmem:[#allocation2 + $0x18] sm:$0xff] %vm771, %v1857
      %1868 = vst.msk [vmem:[#allocation2 + $0x28] sm:$0xff] %vm771, %v1859
      %1869 = vst.msk [vmem:[#allocation2 + $0x38] sm:$0xff] %vm771, %v1861
      %v1870 = vld [vmem:[%s246 + $0x10] sm:$0xc]
      %v1871 = vld [vmem:[%s246 + $0x14] sm:$0xf]
      %v1872 = vld [vmem:[%s246 + $0x18] sm:$0xf]
      %v1873 = vld [vmem:[%s246 + $0x1c] sm:$0xf]
      %v1874 = vld [vmem:[%s246 + $0x20] sm:$0xf]
      %v1875 = vld [vmem:[%s246 + $0x24] sm:$0xf]
      %v1876 = vld [vmem:[%s246 + $0x28] sm:$0xf]
      %v1877 = vld [vmem:[%s246 + $0x2c] sm:$0xf]
      %v1878 = vld [vmem:[%s246 + $0x30] sm:$0x3]
      %v1888 = vunpack.c.l.b16 %v1870
      %v1889 = vunpack.c.l.b16 %v1871
      %v1890 = vunpack.c.l.b16 %v1872
      %v1891 = vunpack.c.l.b16 %v1873
      %v1892 = vunpack.c.l.b16 %v1874
      %v1893 = vunpack.c.l.b16 %v1875
      %v1894 = vunpack.c.l.b16 %v1876
      %v1895 = vunpack.c.l.b16 %v1877
      %v1896 = vunpack.c.l.b16 %v1878
      %v1897 = vpack.c.b16 %v1889, %v1888
      %v1898 = vpack.c.b16 %v1891, %v1890
      %v1899 = vpack.c.b16 %v1893, %v1892
      %v1900 = vpack.c.b16 %v1895, %v1894
      %v1901 = vpack.c.b16 %v1896, %v1896
      %v1902 = vrot.slane %v1897, 2
      %v1903 = vrot.slane %v1898, 2
      %v1904 = vsel %vm561, %v1902, %v1903
      %v1905 = vrot.slane %v1899, 2
      %v1906 = vsel %vm561, %v1903, %v1905
      %v1907 = vrot.slane %v1900, 2
      %v1908 = vsel %vm561, %v1905, %v1907
      %v1909 = vrot.slane %v1901, 2
      %v1910 = vsel %vm561, %v1907, %v1909
      %1911 = vrot.lane.b32.xlu0 %v1904, 64
      %v1912 = vpop.permute.xlu0 %1911
      %1913 = vrot.lane.b32.xlu0 %v1906, 64
      %v1914 = vpop.permute.xlu0 %1913
      %1915 = vrot.lane.b32.xlu0 %v1908, 64
      %v1916 = vpop.permute.xlu0 %1915
      %1917 = vrot.lane.b32.xlu0 %v1910, 64
      %v1918 = vpop.permute.xlu0 %1917
      %1923 = vst.msk [vmem:[#allocation2 + $0x8] sm:$0xff] %vm864, %v1912
      %1924 = vst.msk [vmem:[#allocation2 + $0x18] sm:$0xff] %vm864, %v1914
      %1925 = vst.msk [vmem:[#allocation2 + $0x28] sm:$0xff] %vm864, %v1916
      %1926 = vst.msk [vmem:[#allocation2 + $0x38] sm:$0xff] %vm864, %v1918
      %v1927 = vld [vmem:[#allocation2] sm:$0xff]
      %v1928 = vld [vmem:[#allocation2 + $0x8] sm:$0xff]
      %v1929 = vld [vmem:[#allocation2 + $0x10] sm:$0xff]
      %v1930 = vld [vmem:[#allocation2 + $0x18] sm:$0xff]
      %v1931 = vld [vmem:[#allocation2 + $0x20] sm:$0xff]
      %v1932 = vld [vmem:[#allocation2 + $0x28] sm:$0xff]
      %v1933 = vld [vmem:[#allocation2 + $0x30] sm:$0xff]
      %v1934 = vld [vmem:[#allocation2 + $0x38] sm:$0xff]
      %v1935 = vld [vmem:[%s1] sm:$0xf]
      %v1936 = vld [vmem:[%s1 + $0x4] sm:$0xf]
      %v1937 = vld [vmem:[%s1 + $0x8] sm:$0xf]
      %v1938 = vld [vmem:[%s1 + $0xc] sm:$0xf]
      %v1939 = vld [vmem:[%s1 + $0x10] sm:$0xf]
      %v1940 = vld [vmem:[%s1 + $0x14] sm:$0xf]
      %v1941 = vld [vmem:[%s1 + $0x18] sm:$0xf]
      %v1942 = vld [vmem:[%s1 + $0x1c] sm:$0xf]
      %v1943 = vld [vmem:[%s1 + $0x20] sm:$0xf]
      %v1944 = vld [vmem:[%s1 + $0x24] sm:$0xf]
      %v1945 = vld [vmem:[%s1 + $0x28] sm:$0xf]
      %v1946 = vld [vmem:[%s1 + $0x2c] sm:$0xf]
      %v1947 = vld [vmem:[%s1 + $0x30] sm:$0xf]
      %v1948 = vld [vmem:[%s1 + $0x34] sm:$0xf]
      %v1949 = vld [vmem:[%s1 + $0x38] sm:$0xf]
      %v1950 = vld [vmem:[%s1 + $0x3c] sm:$0xf]
      %v1951 = vld [vmem:[%s1 + $0x40] sm:$0xf]
      %v1952 = vld [vmem:[%s1 + $0x44] sm:$0xf]
      %v1953 = vld [vmem:[%s1 + $0x48] sm:$0xf]
      %v1954 = vld [vmem:[%s1 + $0x4c] sm:$0xf]
      %v1955 = vld [vmem:[%s1 + $0x50] sm:$0xf]
      %v1956 = vld [vmem:[%s1 + $0x54] sm:$0xf]
      %v1957 = vld [vmem:[%s1 + $0x58] sm:$0xf]
      %v1958 = vld [vmem:[%s1 + $0x5c] sm:$0xf]
      %v1959 = vld [vmem:[%s1 + $0x60] sm:$0xf]
      %v1960 = vld [vmem:[%s2] sm:$0x1]
      %v1962 = vlaneseq
      %v1963 = vshrl.u32 %v1962, 7
      %v1964 = vsub.s32 0, %v1963
      %v1965 = vrot.slane %v1960, %v1964
      %v1992 = vunpack.c.l.b16 %v1935
      %v1993 = vunpack.c.l.b16 %v1936
      %v1994 = vunpack.c.l.b16 %v1937
      %v1995 = vunpack.c.l.b16 %v1938
      %v1996 = vunpack.c.l.b16 %v1939
      %v1997 = vunpack.c.l.b16 %v1940
      %v1998 = vunpack.c.l.b16 %v1941
      %v1999 = vunpack.c.l.b16 %v1942
      %v2000 = vunpack.c.l.b16 %v1943
      %v2001 = vunpack.c.l.b16 %v1944
      %v2002 = vunpack.c.l.b16 %v1945
      %v2003 = vunpack.c.l.b16 %v1946
      %v2004 = vunpack.c.l.b16 %v1947
      %v2005 = vunpack.c.l.b16 %v1948
      %v2006 = vunpack.c.l.b16 %v1949
      %v2007 = vunpack.c.l.b16 %v1950
      %v2008 = vunpack.c.l.b16 %v1951
      %v2009 = vunpack.c.l.b16 %v1952
      %v2010 = vunpack.c.l.b16 %v1953
      %v2011 = vunpack.c.l.b16 %v1954
      %v2012 = vunpack.c.l.b16 %v1955
      %v2013 = vunpack.c.l.b16 %v1956
      %v2014 = vunpack.c.l.b16 %v1957
      %v2015 = vunpack.c.l.b16 %v1958
      %v2016 = vunpack.c.l.b16 %v1959
      %v2017 = vpack.c.b16 %v1993, %v1992
      %v2018 = vpack.c.b16 %v1995, %v1994
      %v2019 = vpack.c.b16 %v1997, %v1996
      %v2020 = vpack.c.b16 %v1999, %v1998
      %v2021 = vpack.c.b16 %v2001, %v2000
      %v2022 = vpack.c.b16 %v2003, %v2002
      %v2023 = vpack.c.b16 %v2005, %v2004
      %v2024 = vpack.c.b16 %v2007, %v2006
      %v2025 = vpack.c.b16 %v2009, %v2008
      %v2026 = vpack.c.b16 %v2011, %v2010
      %v2027 = vpack.c.b16 %v2013, %v2012
      %v2028 = vpack.c.b16 %v2015, %v2014
      %v2029 = vpack.c.b16 %v2016, %v2016
      %vm2042 = vcmask 588800
      %v2044 = vsel %vm2042, %v1928, 0
      %v2047 = vsel %vm2042, %v1930, 0
      %v2050 = vsel %vm2042, %v1932, 0
      %v2053 = vsel %vm2042, %v1934, 0
      %vm2055 = vcmask 1043456
      %v2057 = vsel %vm2055, %v2029, 0
      %2059 = vmatprep.subr.bf16.mxu0 0
      %2060 = vmatpush1.bf16.msra.mxu0 %v2017
      %2061 = vmatprep.subr.bf16.mxu0 0
      %2062 = vmatpush1.bf16.msra.mxu0 %v2018
      %2063 = vmatprep.subr.bf16.mxu0 0
      %2064 = vmatpush1.bf16.msra.mxu0 %v2019
      %2065 = vmatprep.subr.bf16.mxu0 0
      %2066 = vmatpush1.bf16.msra.mxu0 %v2020
      %2067 = vmatprep.subr.bf16.mxu0 0
      %2068 = vmatpush1.bf16.msra.mxu0 %v2021
      %2069 = vmatprep.subr.bf16.mxu0 0
      %2070 = vmatpush1.bf16.msra.mxu0 %v2022
      %2071 = vmatprep.subr.bf16.mxu0 0
      %2072 = vmatpush1.bf16.msra.mxu0 %v2023
      %2073 = vmatprep.subr.bf16.mxu0 0
      %2074 = vmatpush1.bf16.msra.mxu0 %v2024
      %2075 = vmatprep.subr.bf16.mxu0 0
      %2076 = vmatpush1.bf16.msra.mxu0 %v2025
      %2077 = vmatprep.subr.bf16.mxu0 0
      %2078 = vmatpush1.bf16.msra.mxu0 %v2026
      %2079 = vmatprep.subr.bf16.mxu0 0
      %2080 = vmatpush1.bf16.msra.mxu0 %v2027
      %2081 = vmatprep.subr.bf16.mxu0 0
      %2082 = vmatpush1.bf16.msra.mxu0 %v2028
      %2083 = vmatprep.subr.bf16.mxu0 0
      %2084 = vmatpush1.bf16.msra.mxu0 %v2057
      %2085 = vmatprep.subr.bf16.mxu0 0
      %2086 = vmatpush1.bf16.msra.mxu0 0
      %2087 = vmatprep.subr.bf16.mxu0 0
      %2088 = vmatpush1.bf16.msra.mxu0 0
      %2089 = vmatprep.subr.bf16.mxu0 0
      %2090 = vmatpush1.bf16.msra.mxu0 0
      %2091 = vmatprep.mubr.bf16.mxu0 %v2044
      %2092 = vmatmul.mubr.bf16.gmra.mrb[0].mxu0 %v1927
      %v2093 = vpop.f32.mrb[0].mxu0
      %v2094 = vadd.f32 %v1965, %v2093
      %v2095 = vpop.f32.mrb[0].mxu0
      %v2096 = vpop.f32.mrb[0].mxu0
      %v2097 = vadd.f32 %v1965, %v2096
      %v2098 = vpop.f32.mrb[0].mxu0
      %2099 = vmatprep.mubr.bf16.mxu0 %v2047
      %2100 = vmatmul.mubr.bf16.gmra.mrb[0].mxu0 %v1929
      %v2101 = vpop.f32.mrb[0].mxu0
      %v2102 = vadd.f32 %v1965, %v2101
      %v2103 = vpop.f32.mrb[0].mxu0
      %v2104 = vpop.f32.mrb[0].mxu0
      %v2105 = vadd.f32 %v1965, %v2104
      %v2106 = vpop.f32.mrb[0].mxu0
      %2107 = vmatprep.mubr.bf16.mxu0 %v2050
      %2108 = vmatmul.mubr.bf16.gmra.mrb[0].mxu0 %v1931
      %v2109 = vpop.f32.mrb[0].mxu0
      %v2110 = vadd.f32 %v1965, %v2109
      %v2111 = vpop.f32.mrb[0].mxu0
      %v2112 = vpop.f32.mrb[0].mxu0
      %v2113 = vadd.f32 %v1965, %v2112
      %v2114 = vpop.f32.mrb[0].mxu0
      %2115 = vmatprep.mubr.bf16.mxu0 %v2053
      %2116 = vmatmul.mubr.bf16.gmra.mrb[0].mxu0 %v1933
      %v2117 = vpop.f32.mrb[0].mxu0
      %v2118 = vadd.f32 %v1965, %v2117
      %v2119 = vpop.f32.mrb[0].mxu0
      %v2120 = vpop.f32.mrb[0].mxu0
      %v2121 = vadd.f32 %v1965, %v2120
      %v2122 = vpop.f32.mrb[0].mxu0
      %2123 = vdwg.mxu0
      %v2124 = vmul.f32 %v2094, 0.5
      %v2125 = vmul.f32 %v2097, 0.5
      %v2126 = vmul.f32 %v2102, 0.5
      %v2127 = vmul.f32 %v2105, 0.5
      %v2128 = vmul.f32 %v2110, 0.5
      %v2129 = vmul.f32 %v2113, 0.5
      %v2130 = vmul.f32 %v2118, 0.5
      %v2131 = vmul.f32 %v2121, 0.5
      %v2132 = vmul.f32 %v2094, 0.044715
      %v2133 = vmul.f32 %v2097, 0.044715
      %v2134 = vmul.f32 %v2102, 0.044715
      %v2135 = vmul.f32 %v2105, 0.044715
      %v2136 = vmul.f32 %v2110, 0.044715
      %v2137 = vmul.f32 %v2113, 0.044715
      %v2138 = vmul.f32 %v2118, 0.044715
      %v2139 = vmul.f32 %v2121, 0.044715
      %v2140 = vmul.f32 %v2132, %v2094
      %v2141 = vmul.f32 %v2133, %v2097
      %v2142 = vmul.f32 %v2134, %v2102
      %v2143 = vmul.f32 %v2135, %v2105
      %v2144 = vmul.f32 %v2136, %v2110
      %v2145 = vmul.f32 %v2137, %v2113
      %v2146 = vmul.f32 %v2138, %v2118
      %v2147 = vmul.f32 %v2139, %v2121
      %v2148 = vmul.f32 %v2140, %v2094
      %v2149 = vmul.f32 %v2141, %v2097
      %v2150 = vmul.f32 %v2142, %v2102
      %v2151 = vmul.f32 %v2143, %v2105
      %v2152 = vmul.f32 %v2144, %v2110
      %v2153 = vmul.f32 %v2145, %v2113
      %v2154 = vmul.f32 %v2146, %v2118
      %v2155 = vmul.f32 %v2147, %v2121
      %v2156 = vadd.f32 %v2094, %v2148
      %v2157 = vadd.f32 %v2097, %v2149
      %v2158 = vadd.f32 %v2102, %v2150
      %v2159 = vadd.f32 %v2105, %v2151
      %v2160 = vadd.f32 %v2110, %v2152
      %v2161 = vadd.f32 %v2113, %v2153
      %v2162 = vadd.f32 %v2118, %v2154
      %v2163 = vadd.f32 %v2121, %v2155
      %v2164 = vmul.f32 %v2156, 0.7978846
      %v2165 = vmul.f32 %v2157, 0.7978846
      %v2166 = vmul.f32 %v2158, 0.7978846
      %v2167 = vmul.f32 %v2159, 0.7978846
      %v2168 = vmul.f32 %v2160, 0.7978846
      %v2169 = vmul.f32 %v2161, 0.7978846
      %v2170 = vmul.f32 %v2162, 0.7978846
      %v2171 = vmul.f32 %v2163, 0.7978846
      %v2172 = vtanh.pop %v2164
      %v2173 = vtanh.pop %v2165
      %v2174 = vtanh.pop %v2166
      %v2175 = vtanh.pop %v2167
      %v2176 = vtanh.pop %v2168
      %v2177 = vtanh.pop %v2169
      %v2178 = vtanh.pop %v2170
      %v2179 = vtanh.pop %v2171
      %v2180 = vadd.f32 %v2172, 1.0
      %v2181 = vadd.f32 %v2173, 1.0
      %v2182 = vadd.f32 %v2174, 1.0
      %v2183 = vadd.f32 %v2175, 1.0
      %v2184 = vadd.f32 %v2176, 1.0
      %v2185 = vadd.f32 %v2177, 1.0
      %v2186 = vadd.f32 %v2178, 1.0
      %v2187 = vadd.f32 %v2179, 1.0
      %v2188 = vmul.f32 %v2124, %v2180
      %v2189 = vmul.f32 %v2125, %v2181
      %v2190 = vmul.f32 %v2126, %v2182
      %v2191 = vmul.f32 %v2127, %v2183
      %v2192 = vmul.f32 %v2128, %v2184
      %v2193 = vmul.f32 %v2129, %v2185
      %v2194 = vmul.f32 %v2130, %v2186
      %v2195 = vmul.f32 %v2131, %v2187
      %v2196 = vld [vmem:[%s5] sm:$0xff]
      %v2197 = vld [vmem:[%s5 + $0x8] sm:$0xff]
      %v2198 = vld [vmem:[%s5 + $0x10] sm:$0xff]
      %v2199 = vld [vmem:[%s5 + $0x18] sm:$0xff]
      %v2200 = vld [vmem:[%s5 + $0x20] sm:$0xff]
      %v2201 = vld [vmem:[%s5 + $0x28] sm:$0xff]
      %v2202 = vld [vmem:[%s5 + $0x30] sm:$0xff]
      %v2203 = vld [vmem:[%s5 + $0x38] sm:$0xff]
      %2205 = vset.pattern.permute.xlu0 0
      %2206 = vperm.xlu0 %2205, %v2196
      %v2207 = vpop.permute.xlu0 %2206
      %2210 = vset.pattern.permute.xlu0 0
      %2211 = vperm.xlu0 %2210, %v2197
      %v2212 = vpop.permute.xlu0 %2211
      %2215 = vset.pattern.permute.xlu0 0
      %2216 = vperm.xlu0 %2215, %v2198
      %v2217 = vpop.permute.xlu0 %2216
      %2220 = vset.pattern.permute.xlu0 0
      %2221 = vperm.xlu0 %2220, %v2199
      %v2222 = vpop.permute.xlu0 %2221
      %2225 = vset.pattern.permute.xlu0 0
      %2226 = vperm.xlu0 %2225, %v2200
      %v2227 = vpop.permute.xlu0 %2226
      %2230 = vset.pattern.permute.xlu0 0
      %2231 = vperm.xlu0 %2230, %v2201
      %v2232 = vpop.permute.xlu0 %2231
      %2235 = vset.pattern.permute.xlu0 0
      %2236 = vperm.xlu0 %2235, %v2202
      %v2237 = vpop.permute.xlu0 %2236
      %2240 = vset.pattern.permute.xlu0 0
      %2241 = vperm.xlu0 %2240, %v2203
      %v2242 = vpop.permute.xlu0 %2241
      %v2244 = vmul.f32 %v2188, %v2207
      %v2245 = vmul.f32 %v2189, %v2212
      %v2246 = vmul.f32 %v2190, %v2217
      %v2247 = vmul.f32 %v2191, %v2222
      %v2248 = vmul.f32 %v2192, %v2227
      %v2249 = vmul.f32 %v2193, %v2232
      %v2250 = vmul.f32 %v2194, %v2237
      %v2251 = vmul.f32 %v2195, %v2242
      %v2252 = vpack.c.bf16 %v2245, %v2244
      %v2253 = vpack.c.bf16 %v2247, %v2246
      %v2254 = vpack.c.bf16 %v2249, %v2248
      %v2255 = vpack.c.bf16 %v2251, %v2250
      %vm2260 = vcmask 1043456
      %v2261 = vrot.slane %v2252, 4
      %v2262 = vrot.slane %v2253, 4
      %v2263 = vsel %vm2260, %v2261, %v2262
      %v2264 = vrot.slane %v2254, 4
      %v2265 = vsel %vm2260, %v2262, %v2264
      %v2266 = vrot.slane %v2255, 4
      %v2267 = vsel %vm2260, %v2264, %v2266
      %vm2273 = vcmask 130052
      %2274 = vst.msk [vmem:[#allocation3 + $0x8] sm:$0xf0] %vm2273, %v2261
      %vm2275 = vcmask 130048
      %2276 = vst.msk [vmem:[#allocation3 + $0x10] sm:$0xff] %vm2275, %v2263
      %2277 = vst.msk [vmem:[#allocation3 + $0x18] sm:$0xff] %vm2275, %v2265
      %2278 = vst.msk [vmem:[#allocation3 + $0x20] sm:$0xff] %vm2275, %v2267
      %vm2279 = vcmask 125952
      %2280 = vst.msk [vmem:[#allocation3 + $0x28] sm:$0xf] %vm2279, %v2266
      %2281 = vst.msk [vmem:[#allocation3] sm:$0xff] %vm2275, 0
      %2282 = vst.msk [vmem:[#allocation3 + $0x8] sm:$0xf] %vm2279, 0
      %2283 = vst.msk [vmem:[#allocation3 + $0x28] sm:$0xf0] %vm2273, 0
      %2284 = vst.msk [vmem:[#allocation3 + $0x30] sm:$0xff] %vm2275, 0
      %v2285 = vld [vmem:[#allocation3] sm:$0xf8]
      %v2286 = vld [vmem:[#allocation3 + $0x8] sm:$0xff]
      %v2287 = vld [vmem:[#allocation3 + $0x10] sm:$0xff]
      %v2288 = vld [vmem:[#allocation3 + $0x18] sm:$0xff]
      %v2289 = vld [vmem:[#allocation3 + $0x20] sm:$0x7]
      %vm2295 = vcmask 1044480
      %v2296 = vrot.slane %v2285, 3
      %v2297 = vrot.slane %v2286, 3
      %v2298 = vsel %vm2295, %v2296, %v2297
      %v2299 = vrot.slane %v2287, 3
      %v2300 = vsel %vm2295, %v2297, %v2299
      %v2301 = vrot.slane %v2288, 3
      %v2302 = vsel %vm2295, %v2299, %v2301
      %v2303 = vrot.slane %v2289, 3
      %v2304 = vsel %vm2295, %v2301, %v2303
      %2309 = vst.msk [vmem:[#allocation4] sm:$0xff] %vm2275, %v2298
      %2310 = vst.msk [vmem:[#allocation4 + $0x20] sm:$0xff] %vm2275, %v2300
      %2311 = vst.msk [vmem:[#allocation4 + $0x40] sm:$0xff] %vm2275, %v2302
      %2312 = vst.msk [vmem:[#allocation4 + $0x60] sm:$0xff] %vm2275, %v2304
      %v2313 = vld [vmem:[#allocation3] sm:$0xf8]
      %v2314 = vld [vmem:[#allocation3 + $0x8] sm:$0xff]
      %v2315 = vld [vmem:[#allocation3 + $0x10] sm:$0xff]
      %v2316 = vld [vmem:[#allocation3 + $0x18] sm:$0xff]
      %v2317 = vld [vmem:[#allocation3 + $0x20] sm:$0xf]
      %vm2318 = vsmask.f32 4352
      %v2320 = vshrl.u32 %v2313, 16
      %v2322 = vrot.slane %v2320, 3
      %v2323 = vshll.u32 %v2313, 16
      %v2325 = vrot.slane %v2323, 4
      %v2326 = vor.u32 %v2322, %v2325
      %v2328 = vshrl.u32 %v2314, 16
      %v2330 = vrot.slane %v2328, 3
      %v2331 = vshll.u32 %v2314, 16
      %v2333 = vrot.slane %v2331, 4
      %v2334 = vor.u32 %v2330, %v2333
      %v2335 = vsel %vm2318, %v2326, %v2334
      %v2337 = vshrl.u32 %v2315, 16
      %v2339 = vrot.slane %v2337, 3
      %v2340 = vshll.u32 %v2315, 16
      %v2342 = vrot.slane %v2340, 4
      %v2343 = vor.u32 %v2339, %v2342
      %v2344 = vsel %vm2318, %v2334, %v2343
      %v2346 = vshrl.u32 %v2316, 16
      %v2348 = vrot.slane %v2346, 3
      %v2349 = vshll.u32 %v2316, 16
      %v2351 = vrot.slane %v2349, 4
      %v2352 = vor.u32 %v2348, %v2351
      %v2353 = vsel %vm2318, %v2343, %v2352
      %v2355 = vshrl.u32 %v2317, 16
      %v2357 = vrot.slane %v2355, 3
      %v2358 = vshll.u32 %v2317, 16
      %v2360 = vrot.slane %v2358, 4
      %v2361 = vor.u32 %v2357, %v2360
      %v2362 = vsel %vm2318, %v2352, %v2361
      %2363 = vrot.lane.b32.xlu0 %v2335, 16
      %v2364 = vpop.permute.xlu0 %2363
      %2365 = vrot.lane.b32.xlu0 %v2344, 16
      %v2366 = vpop.permute.xlu0 %2365
      %2367 = vrot.lane.b32.xlu0 %v2353, 16
      %v2368 = vpop.permute.xlu0 %2367
      %2369 = vrot.lane.b32.xlu0 %v2362, 16
      %v2370 = vpop.permute.xlu0 %2369
      %vm2375 = vcmask 261248
      %2376 = vst.msk [vmem:[#allocation4] sm:$0xff] %vm2375, %v2364
      %2377 = vst.msk [vmem:[#allocation4 + $0x20] sm:$0xff] %vm2375, %v2366
      %2378 = vst.msk [vmem:[#allocation4 + $0x40] sm:$0xff] %vm2375, %v2368
      %2379 = vst.msk [vmem:[#allocation4 + $0x60] sm:$0xff] %vm2375, %v2370
      %v2380 = vld [vmem:[#allocation3] sm:$0xf0]
      %v2381 = vld [vmem:[#allocation3 + $0x8] sm:$0xff]
      %v2382 = vld [vmem:[#allocation3 + $0x10] sm:$0xff]
      %v2383 = vld [vmem:[#allocation3 + $0x18] sm:$0xff]
      %v2384 = vld [vmem:[#allocation3 + $0x20] sm:$0xf]
      %v2390 = vrot.slane %v2380, 4
      %v2391 = vrot.slane %v2381, 4
      %v2392 = vsel %vm2260, %v2390, %v2391
      %v2393 = vrot.slane %v2382, 4
      %v2394 = vsel %vm2260, %v2391, %v2393
      %v2395 = vrot.slane %v2383, 4
      %v2396 = vsel %vm2260, %v2393, %v2395
      %v2397 = vrot.slane %v2384, 4
      %v2398 = vsel %vm2260, %v2395, %v2397
      %2399 = vrot.lane.b32.xlu0 %v2392, 32
      %v2400 = vpop.permute.xlu0 %2399
      %2401 = vrot.lane.b32.xlu0 %v2394, 32
      %v2402 = vpop.permute.xlu0 %2401
      %2403 = vrot.lane.b32.xlu0 %v2396, 32
      %v2404 = vpop.permute.xlu0 %2403
      %2405 = vrot.lane.b32.xlu0 %v2398, 32
      %v2406 = vpop.permute.xlu0 %2405
      %vm2411 = vcmask 392448
      %2412 = vst.msk [vmem:[#allocation4] sm:$0xff] %vm2411, %v2400
      %2413 = vst.msk [vmem:[#allocation4 + $0x20] sm:$0xff] %vm2411, %v2402
      %2414 = vst.msk [vmem:[#allocation4 + $0x40] sm:$0xff] %vm2411, %v2404
      %2415 = vst.msk [vmem:[#allocation4 + $0x60] sm:$0xff] %vm2411, %v2406
      %v2416 = vld [vmem:[#allocation3] sm:$0xf0]
      %v2417 = vld [vmem:[#allocation3 + $0x8] sm:$0xff]
      %v2418 = vld [vmem:[#allocation3 + $0x10] sm:$0xff]
      %v2419 = vld [vmem:[#allocation3 + $0x18] sm:$0xff]
      %v2420 = vld [vmem:[#allocation3 + $0x20] sm:$0x1f]
      %vm2421 = vsmask.f32 3328
      %v2423 = vshrl.u32 %v2416, 16
      %v2425 = vrot.slane %v2423, 4
      %v2426 = vshll.u32 %v2416, 16
      %v2428 = vrot.slane %v2426, 5
      %v2429 = vor.u32 %v2425, %v2428
      %v2431 = vshrl.u32 %v2417, 16
      %v2433 = vrot.slane %v2431, 4
      %v2434 = vshll.u32 %v2417, 16
      %v2436 = vrot.slane %v2434, 5
      %v2437 = vor.u32 %v2433, %v2436
      %v2438 = vsel %vm2421, %v2429, %v2437
      %v2440 = vshrl.u32 %v2418, 16
      %v2442 = vrot.slane %v2440, 4
      %v2443 = vshll.u32 %v2418, 16
      %v2445 = vrot.slane %v2443, 5
      %v2446 = vor.u32 %v2442, %v2445
      %v2447 = vsel %vm2421, %v2437, %v2446
      %v2449 = vshrl.u32 %v2419, 16
      %v2451 = vrot.slane %v2449, 4
      %v2452 = vshll.u32 %v2419, 16
      %v2454 = vrot.slane %v2452, 5
      %v2455 = vor.u32 %v2451, %v2454
      %v2456 = vsel %vm2421, %v2446, %v2455
      %v2458 = vshrl.u32 %v2420, 16
      %v2460 = vrot.slane %v2458, 4
      %v2461 = vshll.u32 %v2420, 16
      %v2463 = vrot.slane %v2461, 5
      %v2464 = vor.u32 %v2460, %v2463
      %v2465 = vsel %vm2421, %v2455, %v2464
      %2466 = vrot.lane.b32.xlu0 %v2438, 48
      %v2467 = vpop.permute.xlu0 %2466
      %2468 = vrot.lane.b32.xlu0 %v2447, 48
      %v2469 = vpop.permute.xlu0 %2468
      %2470 = vrot.lane.b32.xlu0 %v2456, 48
      %v2471 = vpop.permute.xlu0 %2470
      %2472 = vrot.lane.b32.xlu0 %v2465, 48
      %v2473 = vpop.permute.xlu0 %2472
      %vm2478 = vcmask 523648
      %2479 = vst.msk [vmem:[#allocation4] sm:$0xff] %vm2478, %v2467
      %2480 = vst.msk [vmem:[#allocation4 + $0x20] sm:$0xff] %vm2478, %v2469
      %2481 = vst.msk [vmem:[#allocation4 + $0x40] sm:$0xff] %vm2478, %v2471
      %2482 = vst.msk [vmem:[#allocation4 + $0x60] sm:$0xff] %vm2478, %v2473
      %v2483 = vld [vmem:[#allocation3] sm:$0xe0]
      %v2484 = vld [vmem:[#allocation3 + $0x8] sm:$0xff]
      %v2485 = vld [vmem:[#allocation3 + $0x10] sm:$0xff]
      %v2486 = vld [vmem:[#allocation3 + $0x18] sm:$0xff]
      %v2487 = vld [vmem:[#allocation3 + $0x20] sm:$0x1f]
      %vm2493 = vcmask 1042432
      %v2494 = vrot.slane %v2483, 5
      %v2495 = vrot.slane %v2484, 5
      %v2496 = vsel %vm2493, %v2494, %v2495
      %v2497 = vrot.slane %v2485, 5
      %v2498 = vsel %vm2493, %v2495, %v2497
      %v2499 = vrot.slane %v2486, 5
      %v2500 = vsel %vm2493, %v2497, %v2499
      %v2501 = vrot.slane %v2487, 5
      %v2502 = vsel %vm2493, %v2499, %v2501
      %2503 = vrot.lane.b32.xlu0 %v2496, 64
      %v2504 = vpop.permute.xlu0 %2503
      %2505 = vrot.lane.b32.xlu0 %v2498, 64
      %v2506 = vpop.permute.xlu0 %2505
      %2507 = vrot.lane.b32.xlu0 %v2500, 64
      %v2508 = vpop.permute.xlu0 %2507
      %2509 = vrot.lane.b32.xlu0 %v2502, 64
      %v2510 = vpop.permute.xlu0 %2509
      %vm2515 = vcmask 654848
      %2516 = vst.msk [vmem:[#allocation4] sm:$0xff] %vm2515, %v2504
      %2517 = vst.msk [vmem:[#allocation4 + $0x20] sm:$0xff] %vm2515, %v2506
      %2518 = vst.msk [vmem:[#allocation4 + $0x40] sm:$0xff] %vm2515, %v2508
      %2519 = vst.msk [vmem:[#allocation4 + $0x60] sm:$0xff] %vm2515, %v2510
      %v2520 = vld [vmem:[#allocation3] sm:$0x80]
      %v2521 = vld [vmem:[#allocation3 + $0x8] sm:$0xff]
      %v2522 = vld [vmem:[#allocation3 + $0x10] sm:$0xff]
      %v2523 = vld [vmem:[#allocation3 + $0x18] sm:$0xff]
      %v2524 = vld [vmem:[#allocation3 + $0x20] sm:$0x7f]
      %vm2530 = vcmask 1040384
      %v2531 = vrot.slane %v2520, 7
      %v2532 = vrot.slane %v2521, 7
      %v2533 = vsel %vm2530, %v2531, %v2532
      %v2534 = vrot.slane %v2522, 7
      %v2535 = vsel %vm2530, %v2532, %v2534
      %v2536 = vrot.slane %v2523, 7
      %v2537 = vsel %vm2530, %v2534, %v2536
      %v2538 = vrot.slane %v2524, 7
      %v2539 = vsel %vm2530, %v2536, %v2538
      %2540 = vrot.lane.b32.xlu0 %v2533, 80
      %v2541 = vpop.permute.xlu0 %2540
      %2542 = vrot.lane.b32.xlu0 %v2535, 80
      %v2543 = vpop.permute.xlu0 %2542
      %2544 = vrot.lane.b32.xlu0 %v2537, 80
      %v2545 = vpop.permute.xlu0 %2544
      %2546 = vrot.lane.b32.xlu0 %v2539, 80
      %v2547 = vpop.permute.xlu0 %2546
      %vm2552 = vcmask 786048
      %2553 = vst.msk [vmem:[#allocation4] sm:$0xff] %vm2552, %v2541
      %2554 = vst.msk [vmem:[#allocation4 + $0x20] sm:$0xff] %vm2552, %v2543
      %2555 = vst.msk [vmem:[#allocation4 + $0x40] sm:$0xff] %vm2552, %v2545
      %2556 = vst.msk [vmem:[#allocation4 + $0x60] sm:$0xff] %vm2552, %v2547
      %v2557 = vld [vmem:[#allocation3] sm:$0x80]
      %v2558 = vld [vmem:[#allocation3 + $0x8] sm:$0xff]
      %v2559 = vld [vmem:[#allocation3 + $0x10] sm:$0xff]
      %v2560 = vld [vmem:[#allocation3 + $0x18] sm:$0xff]
      %v2561 = vld [vmem:[#allocation3 + $0x20] sm:$0xff]
      %vm2562 = vsmask.f32 256
      %v2564 = vshrl.u32 %v2557, 16
      %v2566 = vrot.slane %v2564, 7
      %v2568 = vshrl.u32 %v2558, 16
      %v2570 = vrot.slane %v2568, 7
      %v2571 = vshll.u32 %v2558, 16
      %v2573 = vor.u32 %v2570, %v2571
      %v2574 = vsel %vm2562, %v2566, %v2573
      %v2576 = vshrl.u32 %v2559, 16
      %v2578 = vrot.slane %v2576, 7
      %v2579 = vshll.u32 %v2559, 16
      %v2581 = vor.u32 %v2578, %v2579
      %v2582 = vsel %vm2562, %v2570, %v2581
      %v2584 = vshrl.u32 %v2560, 16
      %v2586 = vrot.slane %v2584, 7
      %v2587 = vshll.u32 %v2560, 16
      %v2589 = vor.u32 %v2586, %v2587
      %v2590 = vsel %vm2562, %v2578, %v2589
      %v2592 = vshrl.u32 %v2561, 16
      %v2594 = vrot.slane %v2592, 7
      %v2595 = vshll.u32 %v2561, 16
      %v2597 = vor.u32 %v2594, %v2595
      %v2598 = vsel %vm2562, %v2586, %v2597
      %2599 = vrot.lane.b32.xlu0 %v2574, 96
      %v2600 = vpop.permute.xlu0 %2599
      %2601 = vrot.lane.b32.xlu0 %v2582, 96
      %v2602 = vpop.permute.xlu0 %2601
      %2603 = vrot.lane.b32.xlu0 %v2590, 96
      %v2604 = vpop.permute.xlu0 %2603
      %2605 = vrot.lane.b32.xlu0 %v2598, 96
      %v2606 = vpop.permute.xlu0 %2605
      %vm2611 = vcmask 917248
      %2612 = vst.msk [vmem:[#allocation4] sm:$0xff] %vm2611, %v2600
      %2613 = vst.msk [vmem:[#allocation4 + $0x20] sm:$0xff] %vm2611, %v2602
      %2614 = vst.msk [vmem:[#allocation4 + $0x40] sm:$0xff] %vm2611, %v2604
      %2615 = vst.msk [vmem:[#allocation4 + $0x60] sm:$0xff] %vm2611, %v2606
      %v2616 = vld [vmem:[#allocation3 + $0x8] sm:$0xff]
      %v2617 = vld [vmem:[#allocation3 + $0x10] sm:$0xff]
      %v2618 = vld [vmem:[#allocation3 + $0x18] sm:$0xff]
      %v2619 = vld [vmem:[#allocation3 + $0x20] sm:$0xff]
      %2624 = vrot.lane.b32.xlu0 %v2616, 112
      %v2625 = vpop.permute.xlu0 %2624
      %2626 = vrot.lane.b32.xlu0 %v2617, 112
      %v2627 = vpop.permute.xlu0 %2626
      %2628 = vrot.lane.b32.xlu0 %v2618, 112
      %v2629 = vpop.permute.xlu0 %2628
      %2630 = vrot.lane.b32.xlu0 %v2619, 112
      %v2631 = vpop.permute.xlu0 %2630
      %vm2636 = vcmask 1048448
      %2637 = vst.msk [vmem:[#allocation4] sm:$0xff] %vm2636, %v2625
      %2638 = vst.msk [vmem:[#allocation4 + $0x20] sm:$0xff] %vm2636, %v2627
      %2639 = vst.msk [vmem:[#allocation4 + $0x40] sm:$0xff] %vm2636, %v2629
      %2640 = vst.msk [vmem:[#allocation4 + $0x60] sm:$0xff] %vm2636, %v2631
      %v2641 = vld [vmem:[#allocation3 + $0x8] sm:$0xff]
      %v2642 = vld [vmem:[#allocation3 + $0x10] sm:$0xff]
      %v2643 = vld [vmem:[#allocation3 + $0x18] sm:$0xff]
      %v2644 = vld [vmem:[#allocation3 + $0x20] sm:$0xff]
      %v2645 = vld [vmem:[#allocation3 + $0x28] sm:$0x1]
      %v2647 = vshrl.u32 %v2641, 16
      %v2649 = vshll.u32 %v2641, 16
      %v2651 = vrot.slane %v2649, 1
      %v2652 = vor.u32 %v2647, %v2651
      %v2654 = vshll.u32 %v2642, 16
      %v2656 = vrot.slane %v2654, 1
      %v2657 = vsel %vm322, %v2652, %v2656
      %v2658 = vshrl.u32 %v2642, 16
      %v2660 = vor.u32 %v2658, %v2656
      %v2662 = vshll.u32 %v2643, 16
      %v2664 = vrot.slane %v2662, 1
      %v2665 = vsel %vm322, %v2660, %v2664
      %v2666 = vshrl.u32 %v2643, 16
      %v2668 = vor.u32 %v2666, %v2664
      %v2670 = vshll.u32 %v2644, 16
      %v2672 = vrot.slane %v2670, 1
      %v2673 = vsel %vm322, %v2668, %v2672
      %v2674 = vshrl.u32 %v2644, 16
      %v2676 = vor.u32 %v2674, %v2672
      %v2678 = vshll.u32 %v2645, 16
      %v2680 = vrot.slane %v2678, 1
      %v2681 = vsel %vm322, %v2676, %v2680
      %2686 = vst.msk [vmem:[#allocation4 + $0x8] sm:$0xff] %vm2275, %v2657
      %2687 = vst.msk [vmem:[#allocation4 + $0x28] sm:$0xff] %vm2275, %v2665
      %2688 = vst.msk [vmem:[#allocation4 + $0x48] sm:$0xff] %vm2275, %v2673
      %2689 = vst.msk [vmem:[#allocation4 + $0x68] sm:$0xff] %vm2275, %v2681
      %v2690 = vld [vmem:[#allocation3 + $0x8] sm:$0xfe]
      %v2691 = vld [vmem:[#allocation3 + $0x10] sm:$0xff]
      %v2692 = vld [vmem:[#allocation3 + $0x18] sm:$0xff]
      %v2693 = vld [vmem:[#allocation3 + $0x20] sm:$0xff]
      %v2694 = vld [vmem:[#allocation3 + $0x28] sm:$0x1]
      %v2700 = vrot.slane %v2690, 1
      %v2701 = vrot.slane %v2691, 1
      %v2702 = vsel %vm408, %v2700, %v2701
      %v2703 = vrot.slane %v2692, 1
      %v2704 = vsel %vm408, %v2701, %v2703
      %v2705 = vrot.slane %v2693, 1
      %v2706 = vsel %vm408, %v2703, %v2705
      %v2707 = vrot.slane %v2694, 1
      %v2708 = vsel %vm408, %v2705, %v2707
      %2709 = vrot.lane.b32.xlu0 %v2702, 16
      %v2710 = vpop.permute.xlu0 %2709
      %2711 = vrot.lane.b32.xlu0 %v2704, 16
      %v2712 = vpop.permute.xlu0 %2711
      %2713 = vrot.lane.b32.xlu0 %v2706, 16
      %v2714 = vpop.permute.xlu0 %2713
      %2715 = vrot.lane.b32.xlu0 %v2708, 16
      %v2716 = vpop.permute.xlu0 %2715
      %2721 = vst.msk [vmem:[#allocation4 + $0x8] sm:$0xff] %vm2375, %v2710
      %2722 = vst.msk [vmem:[#allocation4 + $0x28] sm:$0xff] %vm2375, %v2712
      %2723 = vst.msk [vmem:[#allocation4 + $0x48] sm:$0xff] %vm2375, %v2714
      %2724 = vst.msk [vmem:[#allocation4 + $0x68] sm:$0xff] %vm2375, %v2716
      %v2725 = vld [vmem:[#allocation3 + $0x8] sm:$0xf8]
      %v2726 = vld [vmem:[#allocation3 + $0x10] sm:$0xff]
      %v2727 = vld [vmem:[#allocation3 + $0x18] sm:$0xff]
      %v2728 = vld [vmem:[#allocation3 + $0x20] sm:$0xff]
      %v2729 = vld [vmem:[#allocation3 + $0x28] sm:$0x7]
      %v2735 = vrot.slane %v2725, 3
      %v2736 = vrot.slane %v2726, 3
      %v2737 = vsel %vm2295, %v2735, %v2736
      %v2738 = vrot.slane %v2727, 3
      %v2739 = vsel %vm2295, %v2736, %v2738
      %v2740 = vrot.slane %v2728, 3
      %v2741 = vsel %vm2295, %v2738, %v2740
      %v2742 = vrot.slane %v2729, 3
      %v2743 = vsel %vm2295, %v2740, %v2742
      %2744 = vrot.lane.b32.xlu0 %v2737, 32
      %v2745 = vpop.permute.xlu0 %2744
      %2746 = vrot.lane.b32.xlu0 %v2739, 32
      %v2747 = vpop.permute.xlu0 %2746
      %2748 = vrot.lane.b32.xlu0 %v2741, 32
      %v2749 = vpop.permute.xlu0 %2748
      %2750 = vrot.lane.b32.xlu0 %v2743, 32
      %v2751 = vpop.permute.xlu0 %2750
      %2756 = vst.msk [vmem:[#allocation4 + $0x8] sm:$0xff] %vm2411, %v2745
      %2757 = vst.msk [vmem:[#allocation4 + $0x28] sm:$0xff] %vm2411, %v2747
      %2758 = vst.msk [vmem:[#allocation4 + $0x48] sm:$0xff] %vm2411, %v2749
      %2759 = vst.msk [vmem:[#allocation4 + $0x68] sm:$0xff] %vm2411, %v2751
      %v2760 = vld [vmem:[#allocation3 + $0x8] sm:$0xf8]
      %v2761 = vld [vmem:[#allocation3 + $0x10] sm:$0xff]
      %v2762 = vld [vmem:[#allocation3 + $0x18] sm:$0xff]
      %v2763 = vld [vmem:[#allocation3 + $0x20] sm:$0xff]
      %v2764 = vld [vmem:[#allocation3 + $0x28] sm:$0xf]
      %v2766 = vshrl.u32 %v2760, 16
      %v2768 = vrot.slane %v2766, 3
      %v2769 = vshll.u32 %v2760, 16
      %v2771 = vrot.slane %v2769, 4
      %v2772 = vor.u32 %v2768, %v2771
      %v2774 = vshrl.u32 %v2761, 16
      %v2776 = vrot.slane %v2774, 3
      %v2777 = vshll.u32 %v2761, 16
      %v2779 = vrot.slane %v2777, 4
      %v2780 = vor.u32 %v2776, %v2779
      %v2781 = vsel %vm2318, %v2772, %v2780
      %v2783 = vshrl.u32 %v2762, 16
      %v2785 = vrot.slane %v2783, 3
      %v2786 = vshll.u32 %v2762, 16
      %v2788 = vrot.slane %v2786, 4
      %v2789 = vor.u32 %v2785, %v2788
      %v2790 = vsel %vm2318, %v2780, %v2789
      %v2792 = vshrl.u32 %v2763, 16
      %v2794 = vrot.slane %v2792, 3
      %v2795 = vshll.u32 %v2763, 16
      %v2797 = vrot.slane %v2795, 4
      %v2798 = vor.u32 %v2794, %v2797
      %v2799 = vsel %vm2318, %v2789, %v2798
      %v2801 = vshrl.u32 %v2764, 16
      %v2803 = vrot.slane %v2801, 3
      %v2804 = vshll.u32 %v2764, 16
      %v2806 = vrot.slane %v2804, 4
      %v2807 = vor.u32 %v2803, %v2806
      %v2808 = vsel %vm2318, %v2798, %v2807
      %2809 = vrot.lane.b32.xlu0 %v2781, 48
      %v2810 = vpop.permute.xlu0 %2809
      %2811 = vrot.lane.b32.xlu0 %v2790, 48
      %v2812 = vpop.permute.xlu0 %2811
      %2813 = vrot.lane.b32.xlu0 %v2799, 48
      %v2814 = vpop.permute.xlu0 %2813
      %2815 = vrot.lane.b32.xlu0 %v2808, 48
      %v2816 = vpop.permute.xlu0 %2815
      %2821 = vst.msk [vmem:[#allocation4 + $0x8] sm:$0xff] %vm2478, %v2810
      %2822 = vst.msk [vmem:[#allocation4 + $0x28] sm:$0xff] %vm2478, %v2812
      %2823 = vst.msk [vmem:[#allocation4 + $0x48] sm:$0xff] %vm2478, %v2814
      %2824 = vst.msk [vmem:[#allocation4 + $0x68] sm:$0xff] %vm2478, %v2816
      %v2825 = vld [vmem:[#allocation3 + $0x8] sm:$0xf0]
      %v2826 = vld [vmem:[#allocation3 + $0x10] sm:$0xff]
      %v2827 = vld [vmem:[#allocation3 + $0x18] sm:$0xff]
      %v2828 = vld [vmem:[#allocation3 + $0x20] sm:$0xff]
      %v2829 = vld [vmem:[#allocation3 + $0x28] sm:$0xf]
      %v2835 = vrot.slane %v2825, 4
      %v2836 = vrot.slane %v2826, 4
      %v2837 = vsel %vm2260, %v2835, %v2836
      %v2838 = vrot.slane %v2827, 4
      %v2839 = vsel %vm2260, %v2836, %v2838
      %v2840 = vrot.slane %v2828, 4
      %v2841 = vsel %vm2260, %v2838, %v2840
      %v2842 = vrot.slane %v2829, 4
      %v2843 = vsel %vm2260, %v2840, %v2842
      %2844 = vrot.lane.b32.xlu0 %v2837, 64
      %v2845 = vpop.permute.xlu0 %2844
      %2846 = vrot.lane.b32.xlu0 %v2839, 64
      %v2847 = vpop.permute.xlu0 %2846
      %2848 = vrot.lane.b32.xlu0 %v2841, 64
      %v2849 = vpop.permute.xlu0 %2848
      %2850 = vrot.lane.b32.xlu0 %v2843, 64
      %v2851 = vpop.permute.xlu0 %2850
      %2856 = vst.msk [vmem:[#allocation4 + $0x8] sm:$0xff] %vm2515, %v2845
      %2857 = vst.msk [vmem:[#allocation4 + $0x28] sm:$0xff] %vm2515, %v2847
      %2858 = vst.msk [vmem:[#allocation4 + $0x48] sm:$0xff] %vm2515, %v2849
      %2859 = vst.msk [vmem:[#allocation4 + $0x68] sm:$0xff] %vm2515, %v2851
      %v2860 = vld [vmem:[#allocation3 + $0x8] sm:$0xf0]
      %v2861 = vld [vmem:[#allocation3 + $0x10] sm:$0xff]
      %v2862 = vld [vmem:[#allocation3 + $0x18] sm:$0xff]
      %v2863 = vld [vmem:[#allocation3 + $0x20] sm:$0xff]
      %v2864 = vld [vmem:[#allocation3 + $0x28] sm:$0x1f]
      %v2866 = vshrl.u32 %v2860, 16
      %v2868 = vrot.slane %v2866, 4
      %v2869 = vshll.u32 %v2860, 16
      %v2871 = vrot.slane %v2869, 5
      %v2872 = vor.u32 %v2868, %v2871
      %v2874 = vshrl.u32 %v2861, 16
      %v2876 = vrot.slane %v2874, 4
      %v2877 = vshll.u32 %v2861, 16
      %v2879 = vrot.slane %v2877, 5
      %v2880 = vor.u32 %v2876, %v2879
      %v2881 = vsel %vm2421, %v2872, %v2880
      %v2883 = vshrl.u32 %v2862, 16
      %v2885 = vrot.slane %v2883, 4
      %v2886 = vshll.u32 %v2862, 16
      %v2888 = vrot.slane %v2886, 5
      %v2889 = vor.u32 %v2885, %v2888
      %v2890 = vsel %vm2421, %v2880, %v2889
      %v2892 = vshrl.u32 %v2863, 16
      %v2894 = vrot.slane %v2892, 4
      %v2895 = vshll.u32 %v2863, 16
      %v2897 = vrot.slane %v2895, 5
      %v2898 = vor.u32 %v2894, %v2897
      %v2899 = vsel %vm2421, %v2889, %v2898
      %v2901 = vshrl.u32 %v2864, 16
      %v2903 = vrot.slane %v2901, 4
      %v2904 = vshll.u32 %v2864, 16
      %v2906 = vrot.slane %v2904, 5
      %v2907 = vor.u32 %v2903, %v2906
      %v2908 = vsel %vm2421, %v2898, %v2907
      %2909 = vrot.lane.b32.xlu0 %v2881, 80
      %v2910 = vpop.permute.xlu0 %2909
      %2911 = vrot.lane.b32.xlu0 %v2890, 80
      %v2912 = vpop.permute.xlu0 %2911
      %2913 = vrot.lane.b32.xlu0 %v2899, 80
      %v2914 = vpop.permute.xlu0 %2913
      %2915 = vrot.lane.b32.xlu0 %v2908, 80
      %v2916 = vpop.permute.xlu0 %2915
      %2921 = vst.msk [vmem:[#allocation4 + $0x8] sm:$0xff] %vm2552, %v2910
      %2922 = vst.msk [vmem:[#allocation4 + $0x28] sm:$0xff] %vm2552, %v2912
      %2923 = vst.msk [vmem:[#allocation4 + $0x48] sm:$0xff] %vm2552, %v2914
      %2924 = vst.msk [vmem:[#allocation4 + $0x68] sm:$0xff] %vm2552, %v2916
      %v2925 = vld [vmem:[#allocation3 + $0x8] sm:$0xe0]
      %v2926 = vld [vmem:[#allocation3 + $0x10] sm:$0xff]
      %v2927 = vld [vmem:[#allocation3 + $0x18] sm:$0xff]
      %v2928 = vld [vmem:[#allocation3 + $0x20] sm:$0xff]
      %v2929 = vld [vmem:[#allocation3 + $0x28] sm:$0x1f]
      %v2935 = vrot.slane %v2925, 5
      %v2936 = vrot.slane %v2926, 5
      %v2937 = vsel %vm2493, %v2935, %v2936
      %v2938 = vrot.slane %v2927, 5
      %v2939 = vsel %vm2493, %v2936, %v2938
      %v2940 = vrot.slane %v2928, 5
      %v2941 = vsel %vm2493, %v2938, %v2940
      %v2942 = vrot.slane %v2929, 5
      %v2943 = vsel %vm2493, %v2940, %v2942
      %2944 = vrot.lane.b32.xlu0 %v2937, 96
      %v2945 = vpop.permute.xlu0 %2944
      %2946 = vrot.lane.b32.xlu0 %v2939, 96
      %v2947 = vpop.permute.xlu0 %2946
      %2948 = vrot.lane.b32.xlu0 %v2941, 96
      %v2949 = vpop.permute.xlu0 %2948
      %2950 = vrot.lane.b32.xlu0 %v2943, 96
      %v2951 = vpop.permute.xlu0 %2950
      %2956 = vst.msk [vmem:[#allocation4 + $0x8] sm:$0xff] %vm2611, %v2945
      %2957 = vst.msk [vmem:[#allocation4 + $0x28] sm:$0xff] %vm2611, %v2947
      %2958 = vst.msk [vmem:[#allocation4 + $0x48] sm:$0xff] %vm2611, %v2949
      %2959 = vst.msk [vmem:[#allocation4 + $0x68] sm:$0xff] %vm2611, %v2951
      %v2960 = vld [vmem:[#allocation3 + $0x8] sm:$0x80]
      %v2961 = vld [vmem:[#allocation3 + $0x10] sm:$0xff]
      %v2962 = vld [vmem:[#allocation3 + $0x18] sm:$0xff]
      %v2963 = vld [vmem:[#allocation3 + $0x20] sm:$0xff]
      %v2964 = vld [vmem:[#allocation3 + $0x28] sm:$0x7f]
      %v2970 = vrot.slane %v2960, 7
      %v2971 = vrot.slane %v2961, 7
      %v2972 = vsel %vm2530, %v2970, %v2971
      %v2973 = vrot.slane %v2962, 7
      %v2974 = vsel %vm2530, %v2971, %v2973
      %v2975 = vrot.slane %v2963, 7
      %v2976 = vsel %vm2530, %v2973, %v2975
      %v2977 = vrot.slane %v2964, 7
      %v2978 = vsel %vm2530, %v2975, %v2977
      %2979 = vrot.lane.b32.xlu0 %v2972, 112
      %v2980 = vpop.permute.xlu0 %2979
      %2981 = vrot.lane.b32.xlu0 %v2974, 112
      %v2982 = vpop.permute.xlu0 %2981
      %2983 = vrot.lane.b32.xlu0 %v2976, 112
      %v2984 = vpop.permute.xlu0 %2983
      %2985 = vrot.lane.b32.xlu0 %v2978, 112
      %v2986 = vpop.permute.xlu0 %2985
      %2991 = vst.msk [vmem:[#allocation4 + $0x8] sm:$0xff] %vm2636, %v2980
      %2992 = vst.msk [vmem:[#allocation4 + $0x28] sm:$0xff] %vm2636, %v2982
      %2993 = vst.msk [vmem:[#allocation4 + $0x48] sm:$0xff] %vm2636, %v2984
      %2994 = vst.msk [vmem:[#allocation4 + $0x68] sm:$0xff] %vm2636, %v2986
      %v2995 = vld [vmem:[#allocation3 + $0x8] sm:$0x80]
      %v2996 = vld [vmem:[#allocation3 + $0x10] sm:$0xff]
      %v2997 = vld [vmem:[#allocation3 + $0x18] sm:$0xff]
      %v2998 = vld [vmem:[#allocation3 + $0x20] sm:$0xff]
      %v2999 = vld [vmem:[#allocation3 + $0x28] sm:$0xff]
      %v3001 = vshrl.u32 %v2995, 16
      %v3003 = vrot.slane %v3001, 7
      %v3005 = vshrl.u32 %v2996, 16
      %v3007 = vrot.slane %v3005, 7
      %v3008 = vshll.u32 %v2996, 16
      %v3010 = vor.u32 %v3007, %v3008
      %v3011 = vsel %vm2562, %v3003, %v3010
      %v3013 = vshrl.u32 %v2997, 16
      %v3015 = vrot.slane %v3013, 7
      %v3016 = vshll.u32 %v2997, 16
      %v3018 = vor.u32 %v3015, %v3016
      %v3019 = vsel %vm2562, %v3007, %v3018
      %v3021 = vshrl.u32 %v2998, 16
      %v3023 = vrot.slane %v3021, 7
      %v3024 = vshll.u32 %v2998, 16
      %v3026 = vor.u32 %v3023, %v3024
      %v3027 = vsel %vm2562, %v3015, %v3026
      %v3029 = vshrl.u32 %v2999, 16
      %v3031 = vrot.slane %v3029, 7
      %v3032 = vshll.u32 %v2999, 16
      %v3034 = vor.u32 %v3031, %v3032
      %v3035 = vsel %vm2562, %v3023, %v3034
      %3040 = vst.msk [vmem:[#allocation4 + $0x10] sm:$0xff] %vm2275, %v3011
      %3041 = vst.msk [vmem:[#allocation4 + $0x30] sm:$0xff] %vm2275, %v3019
      %3042 = vst.msk [vmem:[#allocation4 + $0x50] sm:$0xff] %vm2275, %v3027
      %3043 = vst.msk [vmem:[#allocation4 + $0x70] sm:$0xff] %vm2275, %v3035
      %v3044 = vld [vmem:[#allocation3 + $0x10] sm:$0xff]
      %v3045 = vld [vmem:[#allocation3 + $0x18] sm:$0xff]
      %v3046 = vld [vmem:[#allocation3 + $0x20] sm:$0xff]
      %v3047 = vld [vmem:[#allocation3 + $0x28] sm:$0xff]
      %3052 = vrot.lane.b32.xlu0 %v3044, 16
      %v3053 = vpop.permute.xlu0 %3052
      %3054 = vrot.lane.b32.xlu0 %v3045, 16
      %v3055 = vpop.permute.xlu0 %3054
      %3056 = vrot.lane.b32.xlu0 %v3046, 16
      %v3057 = vpop.permute.xlu0 %3056
      %3058 = vrot.lane.b32.xlu0 %v3047, 16
      %v3059 = vpop.permute.xlu0 %3058
      %3064 = vst.msk [vmem:[#allocation4 + $0x10] sm:$0xff] %vm2375, %v3053
      %3065 = vst.msk [vmem:[#allocation4 + $0x30] sm:$0xff] %vm2375, %v3055
      %3066 = vst.msk [vmem:[#allocation4 + $0x50] sm:$0xff] %vm2375, %v3057
      %3067 = vst.msk [vmem:[#allocation4 + $0x70] sm:$0xff] %vm2375, %v3059
      %v3068 = vld [vmem:[#allocation3 + $0x10] sm:$0xff]
      %v3069 = vld [vmem:[#allocation3 + $0x18] sm:$0xff]
      %v3070 = vld [vmem:[#allocation3 + $0x20] sm:$0xff]
      %v3071 = vld [vmem:[#allocation3 + $0x28] sm:$0xff]
      %v3072 = vld [vmem:[#allocation3 + $0x30] sm:$0x1]
      %v3074 = vshrl.u32 %v3068, 16
      %v3076 = vshll.u32 %v3068, 16
      %v3078 = vrot.slane %v3076, 1
      %v3079 = vor.u32 %v3074, %v3078
      %v3081 = vshll.u32 %v3069, 16
      %v3083 = vrot.slane %v3081, 1
      %v3084 = vsel %vm322, %v3079, %v3083
      %v3085 = vshrl.u32 %v3069, 16
      %v3087 = vor.u32 %v3085, %v3083
      %v3089 = vshll.u32 %v3070, 16
      %v3091 = vrot.slane %v3089, 1
      %v3092 = vsel %vm322, %v3087, %v3091
      %v3093 = vshrl.u32 %v3070, 16
      %v3095 = vor.u32 %v3093, %v3091
      %v3097 = vshll.u32 %v3071, 16
      %v3099 = vrot.slane %v3097, 1
      %v3100 = vsel %vm322, %v3095, %v3099
      %v3101 = vshrl.u32 %v3071, 16
      %v3103 = vor.u32 %v3101, %v3099
      %v3105 = vshll.u32 %v3072, 16
      %v3107 = vrot.slane %v3105, 1
      %v3108 = vsel %vm322, %v3103, %v3107
      %3109 = vrot.lane.b32.xlu0 %v3084, 32
      %v3110 = vpop.permute.xlu0 %3109
      %3111 = vrot.lane.b32.xlu0 %v3092, 32
      %v3112 = vpop.permute.xlu0 %3111
      %3113 = vrot.lane.b32.xlu0 %v3100, 32
      %v3114 = vpop.permute.xlu0 %3113
      %3115 = vrot.lane.b32.xlu0 %v3108, 32
      %v3116 = vpop.permute.xlu0 %3115
      %3121 = vst.msk [vmem:[#allocation4 + $0x10] sm:$0xff] %vm2411, %v3110
      %3122 = vst.msk [vmem:[#allocation4 + $0x30] sm:$0xff] %vm2411, %v3112
      %3123 = vst.msk [vmem:[#allocation4 + $0x50] sm:$0xff] %vm2411, %v3114
      %3124 = vst.msk [vmem:[#allocation4 + $0x70] sm:$0xff] %vm2411, %v3116
      %v3125 = vld [vmem:[#allocation3 + $0x10] sm:$0xfe]
      %v3126 = vld [vmem:[#allocation3 + $0x18] sm:$0xff]
      %v3127 = vld [vmem:[#allocation3 + $0x20] sm:$0xff]
      %v3128 = vld [vmem:[#allocation3 + $0x28] sm:$0xff]
      %v3129 = vld [vmem:[#allocation3 + $0x30] sm:$0x1]
      %v3135 = vrot.slane %v3125, 1
      %v3136 = vrot.slane %v3126, 1
      %v3137 = vsel %vm408, %v3135, %v3136
      %v3138 = vrot.slane %v3127, 1
      %v3139 = vsel %vm408, %v3136, %v3138
      %v3140 = vrot.slane %v3128, 1
      %v3141 = vsel %vm408, %v3138, %v3140
      %v3142 = vrot.slane %v3129, 1
      %v3143 = vsel %vm408, %v3140, %v3142
      %3144 = vrot.lane.b32.xlu0 %v3137, 48
      %v3145 = vpop.permute.xlu0 %3144
      %3146 = vrot.lane.b32.xlu0 %v3139, 48
      %v3147 = vpop.permute.xlu0 %3146
      %3148 = vrot.lane.b32.xlu0 %v3141, 48
      %v3149 = vpop.permute.xlu0 %3148
      %3150 = vrot.lane.b32.xlu0 %v3143, 48
      %v3151 = vpop.permute.xlu0 %3150
      %3156 = vst.msk [vmem:[#allocation4 + $0x10] sm:$0xff] %vm2478, %v3145
      %3157 = vst.msk [vmem:[#allocation4 + $0x30] sm:$0xff] %vm2478, %v3147
      %3158 = vst.msk [vmem:[#allocation4 + $0x50] sm:$0xff] %vm2478, %v3149
      %3159 = vst.msk [vmem:[#allocation4 + $0x70] sm:$0xff] %vm2478, %v3151
      %v3160 = vld [vmem:[#allocation3 + $0x10] sm:$0xf8]
      %v3161 = vld [vmem:[#allocation3 + $0x18] sm:$0xff]
      %v3162 = vld [vmem:[#allocation3 + $0x20] sm:$0xff]
      %v3163 = vld [vmem:[#allocation3 + $0x28] sm:$0xff]
      %v3164 = vld [vmem:[#allocation3 + $0x30] sm:$0x7]
      %v3170 = vrot.slane %v3160, 3
      %v3171 = vrot.slane %v3161, 3
      %v3172 = vsel %vm2295, %v3170, %v3171
      %v3173 = vrot.slane %v3162, 3
      %v3174 = vsel %vm2295, %v3171, %v3173
      %v3175 = vrot.slane %v3163, 3
      %v3176 = vsel %vm2295, %v3173, %v3175
      %v3177 = vrot.slane %v3164, 3
      %v3178 = vsel %vm2295, %v3175, %v3177
      %3179 = vrot.lane.b32.xlu0 %v3172, 64
      %v3180 = vpop.permute.xlu0 %3179
      %3181 = vrot.lane.b32.xlu0 %v3174, 64
      %v3182 = vpop.permute.xlu0 %3181
      %3183 = vrot.lane.b32.xlu0 %v3176, 64
      %v3184 = vpop.permute.xlu0 %3183
      %3185 = vrot.lane.b32.xlu0 %v3178, 64
      %v3186 = vpop.permute.xlu0 %3185
      %3191 = vst.msk [vmem:[#allocation4 + $0x10] sm:$0xff] %vm2515, %v3180
      %3192 = vst.msk [vmem:[#allocation4 + $0x30] sm:$0xff] %vm2515, %v3182
      %3193 = vst.msk [vmem:[#allocation4 + $0x50] sm:$0xff] %vm2515, %v3184
      %3194 = vst.msk [vmem:[#allocation4 + $0x70] sm:$0xff] %vm2515, %v3186
      %v3195 = vld [vmem:[#allocation3 + $0x10] sm:$0xf8]
      %v3196 = vld [vmem:[#allocation3 + $0x18] sm:$0xff]
      %v3197 = vld [vmem:[#allocation3 + $0x20] sm:$0xff]
      %v3198 = vld [vmem:[#allocation3 + $0x28] sm:$0xff]
      %v3199 = vld [vmem:[#allocation3 + $0x30] sm:$0xf]
      %v3201 = vshrl.u32 %v3195, 16
      %v3203 = vrot.slane %v3201, 3
      %v3204 = vshll.u32 %v3195, 16
      %v3206 = vrot.slane %v3204, 4
      %v3207 = vor.u32 %v3203, %v3206
      %v3209 = vshrl.u32 %v3196, 16
      %v3211 = vrot.slane %v3209, 3
      %v3212 = vshll.u32 %v3196, 16
      %v3214 = vrot.slane %v3212, 4
      %v3215 = vor.u32 %v3211, %v3214
      %v3216 = vsel %vm2318, %v3207, %v3215
      %v3218 = vshrl.u32 %v3197, 16
      %v3220 = vrot.slane %v3218, 3
      %v3221 = vshll.u32 %v3197, 16
      %v3223 = vrot.slane %v3221, 4
      %v3224 = vor.u32 %v3220, %v3223
      %v3225 = vsel %vm2318, %v3215, %v3224
      %v3227 = vshrl.u32 %v3198, 16
      %v3229 = vrot.slane %v3227, 3
      %v3230 = vshll.u32 %v3198, 16
      %v3232 = vrot.slane %v3230, 4
      %v3233 = vor.u32 %v3229, %v3232
      %v3234 = vsel %vm2318, %v3224, %v3233
      %v3236 = vshrl.u32 %v3199, 16
      %v3238 = vrot.slane %v3236, 3
      %v3239 = vshll.u32 %v3199, 16
      %v3241 = vrot.slane %v3239, 4
      %v3242 = vor.u32 %v3238, %v3241
      %v3243 = vsel %vm2318, %v3233, %v3242
      %3244 = vrot.lane.b32.xlu0 %v3216, 80
      %v3245 = vpop.permute.xlu0 %3244
      %3246 = vrot.lane.b32.xlu0 %v3225, 80
      %v3247 = vpop.permute.xlu0 %3246
      %3248 = vrot.lane.b32.xlu0 %v3234, 80
      %v3249 = vpop.permute.xlu0 %3248
      %3250 = vrot.lane.b32.xlu0 %v3243, 80
      %v3251 = vpop.permute.xlu0 %3250
      %3256 = vst.msk [vmem:[#allocation4 + $0x10] sm:$0xff] %vm2552, %v3245
      %3257 = vst.msk [vmem:[#allocation4 + $0x30] sm:$0xff] %vm2552, %v3247
      %3258 = vst.msk [vmem:[#allocation4 + $0x50] sm:$0xff] %vm2552, %v3249
      %3259 = vst.msk [vmem:[#allocation4 + $0x70] sm:$0xff] %vm2552, %v3251
      %v3260 = vld [vmem:[#allocation3 + $0x10] sm:$0xf0]
      %v3261 = vld [vmem:[#allocation3 + $0x18] sm:$0xff]
      %v3262 = vld [vmem:[#allocation3 + $0x20] sm:$0xff]
      %v3263 = vld [vmem:[#allocation3 + $0x28] sm:$0xff]
      %v3264 = vld [vmem:[#allocation3 + $0x30] sm:$0xf]
      %v3270 = vrot.slane %v3260, 4
      %v3271 = vrot.slane %v3261, 4
      %v3272 = vsel %vm2260, %v3270, %v3271
      %v3273 = vrot.slane %v3262, 4
      %v3274 = vsel %vm2260, %v3271, %v3273
      %v3275 = vrot.slane %v3263, 4
      %v3276 = vsel %vm2260, %v3273, %v3275
      %v3277 = vrot.slane %v3264, 4
      %v3278 = vsel %vm2260, %v3275, %v3277
      %3279 = vrot.lane.b32.xlu0 %v3272, 96
      %v3280 = vpop.permute.xlu0 %3279
      %3281 = vrot.lane.b32.xlu0 %v3274, 96
      %v3282 = vpop.permute.xlu0 %3281
      %3283 = vrot.lane.b32.xlu0 %v3276, 96
      %v3284 = vpop.permute.xlu0 %3283
      %3285 = vrot.lane.b32.xlu0 %v3278, 96
      %v3286 = vpop.permute.xlu0 %3285
      %3291 = vst.msk [vmem:[#allocation4 + $0x10] sm:$0xff] %vm2611, %v3280
      %3292 = vst.msk [vmem:[#allocation4 + $0x30] sm:$0xff] %vm2611, %v3282
      %3293 = vst.msk [vmem:[#allocation4 + $0x50] sm:$0xff] %vm2611, %v3284
      %3294 = vst.msk [vmem:[#allocation4 + $0x70] sm:$0xff] %vm2611, %v3286
      %v3295 = vld [vmem:[#allocation3 + $0x10] sm:$0xf0]
      %v3296 = vld [vmem:[#allocation3 + $0x18] sm:$0xff]
      %v3297 = vld [vmem:[#allocation3 + $0x20] sm:$0xff]
      %v3298 = vld [vmem:[#allocation3 + $0x28] sm:$0xff]
      %v3299 = vld [vmem:[#allocation3 + $0x30] sm:$0x1f]
      %v3301 = vshrl.u32 %v3295, 16
      %v3303 = vrot.slane %v3301, 4
      %v3304 = vshll.u32 %v3295, 16
      %v3306 = vrot.slane %v3304, 5
      %v3307 = vor.u32 %v3303, %v3306
      %v3309 = vshrl.u32 %v3296, 16
      %v3311 = vrot.slane %v3309, 4
      %v3312 = vshll.u32 %v3296, 16
      %v3314 = vrot.slane %v3312, 5
      %v3315 = vor.u32 %v3311, %v3314
      %v3316 = vsel %vm2421, %v3307, %v3315
      %v3318 = vshrl.u32 %v3297, 16
      %v3320 = vrot.slane %v3318, 4
      %v3321 = vshll.u32 %v3297, 16
      %v3323 = vrot.slane %v3321, 5
      %v3324 = vor.u32 %v3320, %v3323
      %v3325 = vsel %vm2421, %v3315, %v3324
      %v3327 = vshrl.u32 %v3298, 16
      %v3329 = vrot.slane %v3327, 4
      %v3330 = vshll.u32 %v3298, 16
      %v3332 = vrot.slane %v3330, 5
      %v3333 = vor.u32 %v3329, %v3332
      %v3334 = vsel %vm2421, %v3324, %v3333
      %v3336 = vshrl.u32 %v3299, 16
      %v3338 = vrot.slane %v3336, 4
      %v3339 = vshll.u32 %v3299, 16
      %v3341 = vrot.slane %v3339, 5
      %v3342 = vor.u32 %v3338, %v3341
      %v3343 = vsel %vm2421, %v3333, %v3342
      %3344 = vrot.lane.b32.xlu0 %v3316, 112
      %v3345 = vpop.permute.xlu0 %3344
      %3346 = vrot.lane.b32.xlu0 %v3325, 112
      %v3347 = vpop.permute.xlu0 %3346
      %3348 = vrot.lane.b32.xlu0 %v3334, 112
      %v3349 = vpop.permute.xlu0 %3348
      %3350 = vrot.lane.b32.xlu0 %v3343, 112
      %v3351 = vpop.permute.xlu0 %3350
      %3356 = vst.msk [vmem:[#allocation4 + $0x10] sm:$0xff] %vm2636, %v3345
      %3357 = vst.msk [vmem:[#allocation4 + $0x30] sm:$0xff] %vm2636, %v3347
      %3358 = vst.msk [vmem:[#allocation4 + $0x50] sm:$0xff] %vm2636, %v3349
      %3359 = vst.msk [vmem:[#allocation4 + $0x70] sm:$0xff] %vm2636, %v3351
      %v3360 = vld [vmem:[#allocation3 + $0x10] sm:$0xe0]
      %v3361 = vld [vmem:[#allocation3 + $0x18] sm:$0xff]
      %v3362 = vld [vmem:[#allocation3 + $0x20] sm:$0xff]
      %v3363 = vld [vmem:[#allocation3 + $0x28] sm:$0xff]
      %v3364 = vld [vmem:[#allocation3 + $0x30] sm:$0x1f]
      %v3370 = vrot.slane %v3360, 5
      %v3371 = vrot.slane %v3361, 5
      %v3372 = vsel %vm2493, %v3370, %v3371
      %v3373 = vrot.slane %v3362, 5
      %v3374 = vsel %vm2493, %v3371, %v3373
      %v3375 = vrot.slane %v3363, 5
      %v3376 = vsel %vm2493, %v3373, %v3375
      %v3377 = vrot.slane %v3364, 5
      %v3378 = vsel %vm2493, %v3375, %v3377
      %3383 = vst.msk [vmem:[#allocation4 + $0x18] sm:$0xff] %vm2275, %v3372
      %3384 = vst.msk [vmem:[#allocation4 + $0x38] sm:$0xff] %vm2275, %v3374
      %3385 = vst.msk [vmem:[#allocation4 + $0x58] sm:$0xff] %vm2275, %v3376
      %3386 = vst.msk [vmem:[#allocation4 + $0x78] sm:$0xff] %vm2275, %v3378
      %v3387 = vld [vmem:[#allocation4] sm:$0xff]
      %v3388 = vld [vmem:[#allocation4 + $0x8] sm:$0xff]
      %v3389 = vld [vmem:[#allocation4 + $0x10] sm:$0xff]
      %v3390 = vld [vmem:[#allocation4 + $0x18] sm:$0xff]
      %v3391 = vld [vmem:[#allocation4 + $0x20] sm:$0xff]
      %v3392 = vld [vmem:[#allocation4 + $0x28] sm:$0xff]
      %v3393 = vld [vmem:[#allocation4 + $0x30] sm:$0xff]
      %v3394 = vld [vmem:[#allocation4 + $0x38] sm:$0xff]
      %v3395 = vld [vmem:[#allocation4 + $0x40] sm:$0xff]
      %v3396 = vld [vmem:[#allocation4 + $0x48] sm:$0xff]
      %v3397 = vld [vmem:[#allocation4 + $0x50] sm:$0xff]
      %v3398 = vld [vmem:[#allocation4 + $0x58] sm:$0xff]
      %v3399 = vld [vmem:[#allocation4 + $0x60] sm:$0xff]
      %v3400 = vld [vmem:[#allocation4 + $0x68] sm:$0xff]
      %v3401 = vld [vmem:[#allocation4 + $0x70] sm:$0xff]
      %v3402 = vld [vmem:[#allocation4 + $0x78] sm:$0xff]
      %v3403 = vld [vmem:[%s3] sm:$0xf]
      %v3404 = vld [vmem:[%s3 + $0x4] sm:$0xf]
      %v3405 = vld [vmem:[%s3 + $0x8] sm:$0xf]
      %v3406 = vld [vmem:[%s3 + $0xc] sm:$0xf]
      %v3407 = vld [vmem:[%s3 + $0x10] sm:$0xf]
      %v3408 = vld [vmem:[%s3 + $0x14] sm:$0xf]
      %v3409 = vld [vmem:[%s3 + $0x18] sm:$0xf]
      %v3410 = vld [vmem:[%s3 + $0x1c] sm:$0xf]
      %v3411 = vld [vmem:[%s3 + $0x20] sm:$0xf]
      %v3412 = vld [vmem:[%s3 + $0x24] sm:$0xf]
      %v3413 = vld [vmem:[%s3 + $0x28] sm:$0xf]
      %v3414 = vld [vmem:[%s3 + $0x2c] sm:$0xf]
      %v3415 = vld [vmem:[%s3 + $0x30] sm:$0xf]
      %v3416 = vld [vmem:[%s3 + $0x34] sm:$0xf]
      %v3417 = vld [vmem:[%s3 + $0x38] sm:$0xf]
      %v3418 = vld [vmem:[%s3 + $0x3c] sm:$0xf]
      %v3419 = vld [vmem:[%s3 + $0x40] sm:$0xf]
      %v3420 = vld [vmem:[%s3 + $0x44] sm:$0xf]
      %v3421 = vld [vmem:[%s3 + $0x48] sm:$0xf]
      %v3422 = vld [vmem:[%s3 + $0x4c] sm:$0xf]
      %v3423 = vld [vmem:[%s3 + $0x50] sm:$0xf]
      %v3424 = vld [vmem:[%s3 + $0x54] sm:$0xf]
      %v3425 = vld [vmem:[%s3 + $0x58] sm:$0xf]
      %v3426 = vld [vmem:[%s3 + $0x5c] sm:$0xf]
      %v3427 = vld [vmem:[%s3 + $0x60] sm:$0xf]
      %v3428 = vld [vmem:[%s3 + $0x64] sm:$0xf]
      %v3429 = vld [vmem:[%s3 + $0x68] sm:$0xf]
      %v3430 = vld [vmem:[%s3 + $0x6c] sm:$0xf]
      %v3431 = vld [vmem:[%s3 + $0x70] sm:$0xf]
      %v3432 = vld [vmem:[%s3 + $0x74] sm:$0xf]
      %v3433 = vld [vmem:[%s3 + $0x78] sm:$0xf]
      %v3434 = vld [vmem:[%s3 + $0x7c] sm:$0xf]
      %v3435 = vld [vmem:[%s3 + $0x80] sm:$0xf]
      %v3436 = vld [vmem:[%s3 + $0x84] sm:$0xf]
      %v3437 = vld [vmem:[%s3 + $0x88] sm:$0xf]
      %v3438 = vld [vmem:[%s3 + $0x8c] sm:$0xf]
      %v3439 = vld [vmem:[%s3 + $0x90] sm:$0xf]
      %v3440 = vld [vmem:[%s3 + $0x94] sm:$0xf]
      %v3441 = vld [vmem:[%s3 + $0x98] sm:$0xf]
      %v3442 = vld [vmem:[%s3 + $0x9c] sm:$0xf]
      %v3443 = vld [vmem:[%s3 + $0xa0] sm:$0xf]
      %v3444 = vld [vmem:[%s3 + $0xa4] sm:$0xf]
      %v3445 = vld [vmem:[%s3 + $0xa8] sm:$0xf]
      %v3446 = vld [vmem:[%s3 + $0xac] sm:$0xf]
      %v3447 = vld [vmem:[%s3 + $0xb0] sm:$0xf]
      %v3448 = vld [vmem:[%s3 + $0xb4] sm:$0xf]
      %v3449 = vld [vmem:[%s3 + $0xb8] sm:$0xf]
      %v3450 = vld [vmem:[%s3 + $0xbc] sm:$0xf]
      %v3451 = vld [vmem:[%s3 + $0xc0] sm:$0xf]
      %v3452 = vld [vmem:[%s3 + $0xc4] sm:$0xf]
      %v3453 = vld [vmem:[%s4] sm:$0x1]
      %v3455 = vlaneseq
      %v3456 = vshrl.u32 %v3455, 7
      %v3457 = vsub.s32 0, %v3456
      %v3458 = vrot.slane %v3453, %v3457
      %v3510 = vunpack.c.l.b16 %v3403
      %v3511 = vunpack.c.l.b16 %v3404
      %v3512 = vunpack.c.l.b16 %v3405
      %v3513 = vunpack.c.l.b16 %v3406
      %v3514 = vunpack.c.l.b16 %v3407
      %v3515 = vunpack.c.l.b16 %v3408
      %v3516 = vunpack.c.l.b16 %v3409
      %v3517 = vunpack.c.l.b16 %v3410
      %v3518 = vunpack.c.l.b16 %v3411
      %v3519 = vunpack.c.l.b16 %v3412
      %v3520 = vunpack.c.l.b16 %v3413
      %v3521 = vunpack.c.l.b16 %v3414
      %v3522 = vunpack.c.l.b16 %v3415
      %v3523 = vunpack.c.l.b16 %v3416
      %v3524 = vunpack.c.l.b16 %v3417
      %v3525 = vunpack.c.l.b16 %v3418
      %v3526 = vunpack.c.l.b16 %v3419
      %v3527 = vunpack.c.l.b16 %v3420
      %v3528 = vunpack.c.l.b16 %v3421
      %v3529 = vunpack.c.l.b16 %v3422
      %v3530 = vunpack.c.l.b16 %v3423
      %v3531 = vunpack.c.l.b16 %v3424
      %v3532 = vunpack.c.l.b16 %v3425
      %v3533 = vunpack.c.l.b16 %v3426
      %v3534 = vunpack.c.l.b16 %v3427
      %v3535 = vunpack.c.l.b16 %v3428
      %v3536 = vunpack.c.l.b16 %v3429
      %v3537 = vunpack.c.l.b16 %v3430
      %v3538 = vunpack.c.l.b16 %v3431
      %v3539 = vunpack.c.l.b16 %v3432
      %v3540 = vunpack.c.l.b16 %v3433
      %v3541 = vunpack.c.l.b16 %v3434
      %v3542 = vunpack.c.l.b16 %v3435
      %v3543 = vunpack.c.l.b16 %v3436
      %v3544 = vunpack.c.l.b16 %v3437
      %v3545 = vunpack.c.l.b16 %v3438
      %v3546 = vunpack.c.l.b16 %v3439
      %v3547 = vunpack.c.l.b16 %v3440
      %v3548 = vunpack.c.l.b16 %v3441
      %v3549 = vunpack.c.l.b16 %v3442
      %v3550 = vunpack.c.l.b16 %v3443
      %v3551 = vunpack.c.l.b16 %v3444
      %v3552 = vunpack.c.l.b16 %v3445
      %v3553 = vunpack.c.l.b16 %v3446
      %v3554 = vunpack.c.l.b16 %v3447
      %v3555 = vunpack.c.l.b16 %v3448
      %v3556 = vunpack.c.l.b16 %v3449
      %v3557 = vunpack.c.l.b16 %v3450
      %v3558 = vunpack.c.l.b16 %v3451
      %v3559 = vunpack.c.l.b16 %v3452
      %v3560 = vpack.c.b16 %v3511, %v3510
      %v3561 = vpack.c.b16 %v3513, %v3512
      %v3562 = vpack.c.b16 %v3515, %v3514
      %v3563 = vpack.c.b16 %v3517, %v3516
      %v3564 = vpack.c.b16 %v3519, %v3518
      %v3565 = vpack.c.b16 %v3521, %v3520
      %v3566 = vpack.c.b16 %v3523, %v3522
      %v3567 = vpack.c.b16 %v3525, %v3524
      %v3568 = vpack.c.b16 %v3527, %v3526
      %v3569 = vpack.c.b16 %v3529, %v3528
      %v3570 = vpack.c.b16 %v3531, %v3530
      %v3571 = vpack.c.b16 %v3533, %v3532
      %v3572 = vpack.c.b16 %v3535, %v3534
      %v3573 = vpack.c.b16 %v3537, %v3536
      %v3574 = vpack.c.b16 %v3539, %v3538
      %v3575 = vpack.c.b16 %v3541, %v3540
      %v3576 = vpack.c.b16 %v3543, %v3542
      %v3577 = vpack.c.b16 %v3545, %v3544
      %v3578 = vpack.c.b16 %v3547, %v3546
      %v3579 = vpack.c.b16 %v3549, %v3548
      %v3580 = vpack.c.b16 %v3551, %v3550
      %v3581 = vpack.c.b16 %v3553, %v3552
      %v3582 = vpack.c.b16 %v3555, %v3554
      %v3583 = vpack.c.b16 %v3557, %v3556
      %v3584 = vpack.c.b16 %v3559, %v3558
      %v3611 = vsel %vm2275, %v3390, 0
      %v3614 = vsel %vm2275, %v3394, 0
      %v3617 = vsel %vm2275, %v3398, 0
      %v3620 = vsel %vm2275, %v3402, 0
      %3622 = vmatprep.subr.bf16.mxu0 0
      %3623 = vmatpush1.bf16.msra.mxu0 %v3560
      %3624 = vmatprep.subr.bf16.mxu0 0
      %3625 = vmatpush1.bf16.msra.mxu0 %v3561
      %3626 = vmatprep.subr.bf16.mxu0 0
      %3627 = vmatpush1.bf16.msra.mxu0 %v3562
      %3628 = vmatprep.subr.bf16.mxu0 0
      %3629 = vmatpush1.bf16.msra.mxu0 %v3563
      %3630 = vmatprep.subr.bf16.mxu0 0
      %3631 = vmatpush1.bf16.msra.mxu0 %v3564
      %3632 = vmatprep.subr.bf16.mxu0 0
      %3633 = vmatpush1.bf16.msra.mxu0 %v3565
      %3634 = vmatprep.subr.bf16.mxu0 0
      %3635 = vmatpush1.bf16.msra.mxu0 %v3566
      %3636 = vmatprep.subr.bf16.mxu0 0
      %3637 = vmatpush1.bf16.msra.mxu0 %v3567
      %3638 = vmatprep.subr.bf16.mxu0 0
      %3639 = vmatpush1.bf16.msra.mxu0 %v3568
      %3640 = vmatprep.subr.bf16.mxu0 0
      %3641 = vmatpush1.bf16.msra.mxu0 %v3569
      %3642 = vmatprep.subr.bf16.mxu0 0
      %3643 = vmatpush1.bf16.msra.mxu0 %v3570
      %3644 = vmatprep.subr.bf16.mxu0 0
      %3645 = vmatpush1.bf16.msra.mxu0 %v3571
      %3646 = vmatprep.subr.bf16.mxu0 0
      %3647 = vmatpush1.bf16.msra.mxu0 %v3572
      %3648 = vmatprep.subr.bf16.mxu0 0
      %3649 = vmatpush1.bf16.msra.mxu0 %v3573
      %3650 = vmatprep.subr.bf16.mxu0 0
      %3651 = vmatpush1.bf16.msra.mxu0 %v3574
      %3652 = vmatprep.subr.bf16.mxu0 0
      %3653 = vmatpush1.bf16.msra.mxu0 %v3575
      %3654 = vmatprep.mubr.bf16.mxu0 %v3388
      %3655 = vmatmul.mubr.bf16.gmra.mrb[0].mxu0 %v3387
      %v3656 = vpop.f32.mrb[0].mxu0
      %v3657 = vadd.f32 %v3458, %v3656
      %v3658 = vpop.f32.mrb[0].mxu0
      %v3659 = vpop.f32.mrb[0].mxu0
      %v3660 = vadd.f32 %v3458, %v3659
      %v3661 = vpop.f32.mrb[0].mxu0
      %3662 = vmatprep.mubr.bf16.mxu0 %v3392
      %3663 = vmatmul.mubr.bf16.gmra.mrb[0].mxu0 %v3391
      %v3664 = vpop.f32.mrb[0].mxu0
      %v3665 = vadd.f32 %v3458, %v3664
      %v3666 = vpop.f32.mrb[0].mxu0
      %v3667 = vpop.f32.mrb[0].mxu0
      %v3668 = vadd.f32 %v3458, %v3667
      %v3669 = vpop.f32.mrb[0].mxu0
      %3670 = vmatprep.mubr.bf16.mxu0 %v3396
      %3671 = vmatmul.mubr.bf16.gmra.mrb[0].mxu0 %v3395
      %v3672 = vpop.f32.mrb[0].mxu0
      %v3673 = vadd.f32 %v3458, %v3672
      %v3674 = vpop.f32.mrb[0].mxu0
      %v3675 = vpop.f32.mrb[0].mxu0
      %v3676 = vadd.f32 %v3458, %v3675
      %v3677 = vpop.f32.mrb[0].mxu0
      %3678 = vmatprep.mubr.bf16.mxu0 %v3400
      %3679 = vmatmul.mubr.bf16.gmra.mrb[0].mxu0 %v3399
      %v3680 = vpop.f32.mrb[0].mxu0
      %v3681 = vadd.f32 %v3458, %v3680
      %v3682 = vpop.f32.mrb[0].mxu0
      %v3683 = vpop.f32.mrb[0].mxu0
      %v3684 = vadd.f32 %v3458, %v3683
      %v3685 = vpop.f32.mrb[0].mxu0
      %3686 = vdwg.mxu0
      %3687 = vmatprep.subr.bf16.mxu0 0
      %3688 = vmatpush1.bf16.msra.mxu0 %v3576
      %3689 = vmatprep.subr.bf16.mxu0 0
      %3690 = vmatpush1.bf16.msra.mxu0 %v3577
      %3691 = vmatprep.subr.bf16.mxu0 0
      %3692 = vmatpush1.bf16.msra.mxu0 %v3578
      %3693 = vmatprep.subr.bf16.mxu0 0
      %3694 = vmatpush1.bf16.msra.mxu0 %v3579
      %3695 = vmatprep.subr.bf16.mxu0 0
      %3696 = vmatpush1.bf16.msra.mxu0 %v3580
      %3697 = vmatprep.subr.bf16.mxu0 0
      %3698 = vmatpush1.bf16.msra.mxu0 %v3581
      %3699 = vmatprep.subr.bf16.mxu0 0
      %3700 = vmatpush1.bf16.msra.mxu0 %v3582
      %3701 = vmatprep.subr.bf16.mxu0 0
      %3702 = vmatpush1.bf16.msra.mxu0 %v3583
      %3703 = vmatprep.subr.bf16.mxu0 0
      %3704 = vmatpush1.bf16.msra.mxu0 %v3584
      %3705 = vmatprep.subr.bf16.mxu0 0
      %3706 = vmatpush1.bf16.msra.mxu0 0
      %3707 = vmatprep.subr.bf16.mxu0 0
      %3708 = vmatpush1.bf16.msra.mxu0 0
      %3709 = vmatprep.subr.bf16.mxu0 0
      %3710 = vmatpush1.bf16.msra.mxu0 0
      %3711 = vmatprep.subr.bf16.mxu0 0
      %3712 = vmatpush1.bf16.msra.mxu0 0
      %3713 = vmatprep.subr.bf16.mxu0 0
      %3714 = vmatpush1.bf16.msra.mxu0 0
      %3715 = vmatprep.subr.bf16.mxu0 0
      %3716 = vmatpush1.bf16.msra.mxu0 0
      %3717 = vmatprep.subr.bf16.mxu0 0
      %3718 = vmatpush1.bf16.msra.mxu0 0
      %3719 = vmatprep.mubr.bf16.mxu0 %v3611
      %3720 = vmatmul.mubr.bf16.gmra.mrb[0].mxu0 %v3389
      %v3721 = vpop.f32.mrb[0].mxu0
      %v3722 = vadd.f32 %v3657, %v3721
      %v3723 = vpop.f32.mrb[0].mxu0
      %v3724 = vpop.f32.mrb[0].mxu0
      %v3725 = vadd.f32 %v3660, %v3724
      %v3726 = vpop.f32.mrb[0].mxu0
      %3727 = vmatprep.mubr.bf16.mxu0 %v3614
      %3728 = vmatmul.mubr.bf16.gmra.mrb[0].mxu0 %v3393
      %v3729 = vpop.f32.mrb[0].mxu0
      %v3730 = vadd.f32 %v3665, %v3729
      %v3731 = vpop.f32.mrb[0].mxu0
      %v3732 = vpop.f32.mrb[0].mxu0
      %v3733 = vadd.f32 %v3668, %v3732
      %v3734 = vpop.f32.mrb[0].mxu0
      %3735 = vmatprep.mubr.bf16.mxu0 %v3617
      %3736 = vmatmul.mubr.bf16.gmra.mrb[0].mxu0 %v3397
      %v3737 = vpop.f32.mrb[0].mxu0
      %v3738 = vadd.f32 %v3673, %v3737
      %v3739 = vpop.f32.mrb[0].mxu0
      %v3740 = vpop.f32.mrb[0].mxu0
      %v3741 = vadd.f32 %v3676, %v3740
      %v3742 = vpop.f32.mrb[0].mxu0
      %3743 = vmatprep.mubr.bf16.mxu0 %v3620
      %3744 = vmatmul.mubr.bf16.gmra.mrb[0].mxu0 %v3401
      %v3745 = vpop.f32.mrb[0].mxu0
      %v3746 = vadd.f32 %v3681, %v3745
      %v3747 = vpop.f32.mrb[0].mxu0
      %v3748 = vpop.f32.mrb[0].mxu0
      %v3749 = vadd.f32 %v3684, %v3748
      %v3750 = vpop.f32.mrb[0].mxu0
      %3751 = vdwg.mxu0
      %v3752 = vpack.c.bf16 %v3725, %v3722
      %v3753 = vpack.c.bf16 %v3733, %v3730
      %v3754 = vpack.c.bf16 %v3741, %v3738
      %v3755 = vpack.c.bf16 %v3749, %v3746
      %v3760 = vunpack.c.l.b16 %v3752
      %v3761 = vunpack.c.h.b16 %v3752
      %v3762 = vunpack.c.l.b16 %v3753
      %v3763 = vunpack.c.h.b16 %v3753
      %v3764 = vunpack.c.l.b16 %v3754
      %v3765 = vunpack.c.h.b16 %v3754
      %v3766 = vunpack.c.l.b16 %v3755
      %v3767 = vunpack.c.h.b16 %v3755
      %v3768 = vpack.c.b16 %v3760, %v3760
      %v3769 = vpack.c.b16 %v3761, %v3761
      %v3770 = vpack.c.b16 %v3762, %v3762
      %v3771 = vpack.c.b16 %v3763, %v3763
      %v3772 = vpack.c.b16 %v3764, %v3764
      %v3773 = vpack.c.b16 %v3765, %v3765
      %v3774 = vpack.c.b16 %v3766, %v3766
      %v3775 = vpack.c.b16 %v3767, %v3767
      %vm3784 = vcmask 60416
      %3785 = vst.msk [vmem:[%s251] sm:$0xf] %vm3784, %v3768
      %3786 = vst.msk [vmem:[%s251 + $0x4] sm:$0xf] %vm3784, %v3769
      %3787 = vst.msk [vmem:[%s251 + $0x8] sm:$0xf] %vm3784, %v3770
      %3788 = vst.msk [vmem:[%s251 + $0xc] sm:$0xf] %vm3784, %v3771
      %3789 = vst.msk [vmem:[%s251 + $0x10] sm:$0xf] %vm3784, %v3772
      %3790 = vst.msk [vmem:[%s251 + $0x14] sm:$0xf] %vm3784, %v3773
      %3791 = vst.msk [vmem:[%s251 + $0x18] sm:$0xf] %vm3784, %v3774
      %3792 = vst.msk [vmem:[%s251 + $0x1c] sm:$0xf] %vm3784, %v3775
      %p3793 = scmp.lt.s32.totalorder %s17, 1
      %s3794 = scalar_select %p3793, %s17, 1
      %s3795 = smul.addr %s3794, 8
      %s3796 = smul.addr %s3795, 4
      %s3797 = scalar_lea.vmem %s6, %s3796
      // Predicated region
      $region45: #{tpu_custom_call.1} parent=43 // pred_check
        %p3798 = pneg %p166
      $region46: #{tpu_custom_call.1} parent=43 // pred_check_branch
        %3800 = sbr.rel (%p3798) target = $region48
      $region47: #{tpu_custom_call.1} parent=43 // pred_region
        _
      $region48: #{tpu_custom_call.1} parent=43 // pred_fallthru
        _
    $region44: #{tpu_custom_call.1} parent=5 // pred_fallthru
      _
    %p3801 = scmp.le.s32.totalorder 2, %s12
    // Predicated region
    $region49: #{tpu_custom_call.1} parent=5 // pred_check
      %p3802 = pneg %p3801
    $region50: #{tpu_custom_call.1} parent=5 // pred_check_branch
      %3804 = sbr.rel (%p3802) target = $region52
    $region51: #{tpu_custom_call.1} parent=5 // pred_region
      %s3805 = ssub.s32 %s12, 2
      // Predicated region
      $region53: #{tpu_custom_call.1} parent=51 // pred_check
        %p3806 = pneg %p172
      $region54: #{tpu_custom_call.1} parent=51 // pred_check_branch
        %3808 = sbr.rel (%p3806) target = $region56
      $region55: #{tpu_custom_call.1} parent=51 // pred_region
        %p3809 = scmp.lt.s32.totalorder %s18, 1
        %s3810 = scalar_select %p3809, %s18, 1
        %s3811 = smul.addr %s3810, 8
        %s3812 = smul.addr %s3811, 4
        %s3813 = scalar_lea.vmem %s6, %s3812
      $region56: #{tpu_custom_call.1} parent=51 // pred_fallthru
        _
    $region52: #{tpu_custom_call.1} parent=5 // pred_fallthru
      _
  $region6: #{tpu_custom_call.1} parent=0 // loop_footer
    %s16 = sadd.s32 1, %s12
  $region7: #{tpu_custom_call.1} parent=0 // loop_footer_branch
    %11 = sbr.rel target = $region3
  $region8: #{tpu_custom_call.1} parent=0 // loop_exit
    _

</llo_original>
